<compile_context>
chip_gen: v5e
topology: v5e:2x2
jax: 0.10.0
libtpu: 0.0.40
codegen_flags: <defaults>
</compile_context>

<pallas_src>
import math

import jax
import jax.numpy as jnp
from jax.experimental import pallas as pl
from jax.experimental.pallas import tpu as pltpu

# ----------------------------- config (small, consistent with the module) ---
N_LAYER = 2
N_HEAD = 4
N_EMBD = 32
N_DIM = 4            # input feature dim (read_in: n_dim -> n_embd)
BLOCK_SIZE = 16
BATCH = 2
SEQ = 8              # T <= block_size
HEAD_DIM = N_EMBD // N_HEAD
LN_EPS = 1e-5


# ----------------------------- shared math helpers ---------------------------
def _gelu(x):
    # TODO(synk): PyTorch nn.GELU() default is exact (erf); tanh approximation used
    # here (and in the in-script reference) to keep the Mosaic lowering simple.
    c = math.sqrt(2.0 / math.pi)
    return 0.5 * x * (1.0 + jnp.tanh(c * (x + 0.044715 * x * x * x)))


def _layernorm_cols(x, w, b):
    """LayerNorm over the feature (sublane) axis of a feature-major (C, R) tile."""
    mu = jnp.mean(x, axis=0, keepdims=True)
    xc = x - mu
    var = jnp.mean(xc * xc, axis=0, keepdims=True)
    inv = jax.lax.rsqrt(var + LN_EPS)
    return xc * inv * w + b                        # w, b: (C, 1), broadcast over lanes


def _layernorm_rows(x, w, b):
    """Row-major LayerNorm (last axis) — used by the pure-JAX reference."""
    mu = jnp.mean(x, axis=-1, keepdims=True)
    xc = x - mu
    var = jnp.mean(xc * xc, axis=-1, keepdims=True)
    inv = jax.lax.rsqrt(var + LN_EPS)
    return xc * inv * w + b


# ----------------------------- Pallas kernel ---------------------------------
def make_decoder_kernel(T):
    C, H, D = N_EMBD, N_HEAD, HEAD_DIM
    scale = 1.0 / math.sqrt(D)
    bf16 = jnp.bfloat16

    def kernel(x_ref, wc_ref, wf_ref, wv_ref, wg_ref, out_ref):
        R = out_ref.shape[-1]

        # ---- unpack the globals slab (one DMA) --------------------------------
        wg = wg_ref[...]                               # (C, N_DIM + R + 4)  f32
        riw_t = wg[:, 0:N_DIM]                         # read_in weight^T    (C, N_DIM)
        bias0 = wg[:, N_DIM:N_DIM + R]                 # read_in bias + pos  (C, R)
        off = N_DIM + R
        lnf_w = wg[:, off + 0:off + 1]                 # (C, 1)
        lnf_b = wg[:, off + 1:off + 2]
        row_w = wg[:, off + 2:off + 3]                 # read_out weight     (C, 1)
        rob = wg[0:1, off + 3:off + 4]                 # read_out bias       (1, 1)

        # ---- read_in + positional embedding, feature-major residual h: (C, R) --
        x_t = x_ref[0]                                 # (N_DIM, R)
        h = jnp.dot(riw_t, x_t, preferred_element_type=jnp.float32) + bias0

        # ---- block-diagonal causal additive bias, hoisted out of the loop ------
        ri = jax.lax.broadcasted_iota(jnp.int32, (R, R), 0)   # query position
        ci = jax.lax.broadcasted_iota(jnp.int32, (R, R), 1)   # key position
        if (T & (T - 1)) == 0:                         # power-of-two T: shift, no div
            sh = T.bit_length() - 1
            same_seq = (ri >> sh) == (ci >> sh)
        else:
            same_seq = (ri // T) == (ci // T)
        allow = same_seq & (ci <= ri)
        bias2 = jnp.where(allow, 0.0, -1e30).astype(jnp.float32)
        bias3 = jnp.broadcast_to(bias2[None], (H, R, R))      # materialized once

        for l in range(N_LAYER):
            wc = wc_ref[l]                             # (8C, C)   bf16
            wv = wv_ref[l]                             # (13C, 1)  f32
            attn_wt = wc[0:3 * C]                      # (3C, C)
            proj_wt = wc[3 * C:4 * C]                  # (C,  C)
            fc_wt = wc[4 * C:8 * C]                    # (4C, C)
            cproj_wt = wf_ref[l]                       # (C, 4C)   bf16
            ln1_w, ln1_b = wv[0:C], wv[C:2 * C]
            attn_b = wv[2 * C:5 * C]                   # (3C, 1)
            proj_b = wv[5 * C:6 * C]
            ln2_w, ln2_b = wv[6 * C:7 * C], wv[7 * C:8 * C]
            fc_b = wv[8 * C:12 * C]                    # (4C, 1)
            cproj_b = wv[12 * C:13 * C]

            # ---- causal multi-head self-attention (heads on the sublane axis) --
            hn = _layernorm_cols(h, ln1_w, ln1_b)
            qkv = jnp.dot(attn_wt, hn.astype(bf16),
                          preferred_element_type=jnp.float32) + attn_b   # (3C, R)
            qkv_h = qkv.reshape(3 * H, D, R)           # free sublane-group split
            q = jnp.swapaxes(qkv_h[0:H], 1, 2) * scale        # (H, R, D)
            k = qkv_h[H:2 * H]                                # (H, D, R)
            v = qkv_h[2 * H:3 * H]                            # (H, D, R)

            s = jnp.einsum('hqd,hdk->hqk', q.astype(bf16), k.astype(bf16),
                           preferred_element_type=jnp.float32)            # (H, R, R)
            s = s + bias3
            m = jnp.max(s, axis=-1, keepdims=True)
            p = jnp.exp(s - m)
            p = p * pl.reciprocal(jnp.sum(p, axis=-1, keepdims=True), approx=True)
            # contraction on the trailing axis of BOTH operands (documented trans-B
            # MXU form); output stays feature-major (H, D, R) -> no output transpose.
            o = jnp.einsum('hdk,hqk->hdq', v.astype(bf16), p.astype(bf16),
                           preferred_element_type=jnp.float32)            # (H, D, R)
            att = jnp.dot(proj_wt, o.reshape(C, R).astype(bf16),
                          preferred_element_type=jnp.float32) + proj_b    # (C, R)
            h = h + att

            # ---- MLP -----------------------------------------------------------
            hn = _layernorm_cols(h, ln2_w, ln2_b)
            f = jnp.dot(fc_wt, hn.astype(bf16),
                        preferred_element_type=jnp.float32) + fc_b        # (4C, R)
            f = _gelu(f)
            mlp = jnp.dot(cproj_wt, f.astype(bf16),
                          preferred_element_type=jnp.float32) + cproj_b   # (C, R)
            h = h + mlp

        # ---- final layernorm + read_out, lane-dense (1, R) row store -----------
        h = _layernorm_cols(h, lnf_w, lnf_b)
        logits = jnp.sum(h * row_w, axis=0, keepdims=True) + rob          # (1, R)
        out_ref[0] = logits

    return kernel


# ----------------------------- host-side weight packing ----------------------
def _pack_params(params, T, Bc):
    """Pack the 19 module parameters into 4 DMA slabs (pure layout plumbing)."""
    R = Bc * T
    del R  # (documentation only; bias0 below carries the R-wide block)

    # per-layer matmul weights, transposed so the contraction dim C is on lanes;
    # stored bf16 (pure MXU operands).
    w_c = jnp.concatenate([
        jnp.swapaxes(params["attn_w"], 1, 2),      # (L, 3C, C)
        jnp.swapaxes(params["proj_w"], 1, 2),      # (L,  C, C)
        jnp.swapaxes(params["fc_w"], 1, 2),        # (L, 4C, C)
    ], axis=1).astype(jnp.bfloat16)                # (L, 8C, C)
    w_f = jnp.swapaxes(params["cproj_w"], 1, 2).astype(jnp.bfloat16)   # (L, C, 4C)

    # per-layer bias / layernorm column vectors (f32, feed elementwise math).
    def col(v):                                    # (L, 1, K) -> (L, K, 1)
        return jnp.swapaxes(v, 1, 2)
    w_v = jnp.concatenate([
        col(params["ln1_w"]), col(params["ln1_b"]),
        col(params["attn_b"]), col(params["proj_b"]),
        col(params["ln2_w"]), col(params["ln2_b"]),
        col(params["fc_b"]), col(params["cproj_b"]),
    ], axis=1)                                     # (L, 13C, 1)

    # globals slab: [read_in_w^T | read_in_b + pos(tiled) | ln_f_w | ln_f_b | w_out | b_out]
    # The positional embedding rides inside this single slab -> no separate DMA.
    pos_t = params["wpe"][:T].T                    # (C, T)
    bias0 = params["read_in_b"].T + jnp.tile(pos_t, (1, Bc))           # (C, R)
    rob = jnp.broadcast_to(params["read_out_b"].reshape(1, 1), (N_EMBD, 1))
    w_g = jnp.concatenate([
        params["read_in_w"].T,                     # (C, N_DIM)
        bias0,                                     # (C, R)
        params["ln_f_w"].T, params["ln_f_b"].T,    # (C, 1) each
        params["read_out_w"],                      # (C, 1)
        rob,                                       # (C, 1)  (scalar replicated)
    ], axis=1)                                     # (C, N_DIM + R + 4), f32
    return w_c, w_f, w_v, w_g


# ----------------------------- wrapper ---------------------------------------
def decoder_forward_pallas(x, params, *, batch_splits=1):
    # batch_splits=1 : single grid step (default; best on v5e/v6e and at small R).
    # batch_splits=2 : "parallel" grid axis for v7x's 2 TensorCores — only worth it
    #                  once per-core R = B*T/2 reaches roughly 128-256 rows.
    B, T, _ = x.shape
    assert B % batch_splits == 0
    Bc = B // batch_splits
    R = Bc * T

    x_t = x.reshape(batch_splits, R, N_DIM).transpose(0, 2, 1)   # (splits, N_DIM, R)
    w_c, w_f, w_v, w_g = _pack_params(params, T, Bc)

    out = pl.pallas_call(
        make_decoder_kernel(T),
        out_shape=jax.ShapeDtypeStruct((batch_splits, 1, R), jnp.float32),
        grid=(batch_splits,),
        in_specs=[
            pl.BlockSpec((1, N_DIM, R), lambda b: (b, 0, 0)),
            pl.BlockSpec(w_c.shape, lambda b: (0, 0, 0)),
            pl.BlockSpec(w_f.shape, lambda b: (0, 0, 0)),
            pl.BlockSpec(w_v.shape, lambda b: (0, 0, 0)),
            pl.BlockSpec(w_g.shape, lambda b: (0, 0)),
        ],
        out_specs=pl.BlockSpec((1, 1, R), lambda b: (b, 0, 0)),
        compiler_params=pltpu.CompilerParams(dimension_semantics=("parallel",)),
    )(x_t, w_c, w_f, w_v, w_g)
    return out.reshape(B, T, 1)


# ----------------------------- pure-JAX reference ----------------------------
def decoder_forward_ref(x, p):
    B, T, _ = x.shape
    h = x @ p["read_in_w"] + p["read_in_b"]
    h = h + p["wpe"][:T]
    mask = jnp.tril(jnp.ones((T, T), dtype=bool))
    for l in range(N_LAYER):
        hn = _layernorm_rows(h, p["ln1_w"][l], p["ln1_b"][l])
        qkv = hn @ p["attn_w"][l] + p["attn_b"][l]
        q, k, v = jnp.split(qkv, 3, axis=-1)
        q = q.reshape(B, T, N_HEAD, HEAD_DIM).transpose(0, 2, 1, 3)
        k = k.reshape(B, T, N_HEAD, HEAD_DIM).transpose(0, 2, 1, 3)
        v = v.reshape(B, T, N_HEAD, HEAD_DIM).transpose(0, 2, 1, 3)
        s = (q @ k.transpose(0, 1, 3, 2)) / math.sqrt(HEAD_DIM)
        s = jnp.where(mask, s, -jnp.inf)
        a = jax.nn.softmax(s, axis=-1)
        o = (a @ v).transpose(0, 2, 1, 3).reshape(B, T, N_EMBD)
        h = h + o @ p["proj_w"][l] + p["proj_b"][l]
        hn = _layernorm_rows(h, p["ln2_w"][l], p["ln2_b"][l])
        f = _gelu(hn @ p["fc_w"][l] + p["fc_b"][l])
        h = h + f @ p["cproj_w"][l] + p["cproj_b"][l]
    h = _layernorm_rows(h, p["ln_f_w"], p["ln_f_b"])
    return h @ p["read_out_w"] + p["read_out_b"]


# ----------------------------- deterministic parameter init ------------------
def init_params(key):
    ks = jax.random.split(key, 8)
    std = 0.02
    resid_std = 0.02 / math.sqrt(2 * N_LAYER)   # c_proj.weight special init

    def nrm(k, shape, s):
        return s * jax.random.normal(k, shape, dtype=jnp.float32)

    params = {
        # embeddings / read_in / read_out
        "wpe": nrm(ks[0], (BLOCK_SIZE, N_EMBD), std),
        "read_in_w": nrm(ks[1], (N_DIM, N_EMBD), std),
        "read_in_b": jnp.zeros((1, N_EMBD), jnp.float32),
        "read_out_w": nrm(ks[2], (N_EMBD, 1), std),
        "read_out_b": jnp.zeros((1, 1), jnp.float32),
        # per-layer weights, stacked on a leading layer axis
        "ln1_w": jnp.ones((N_LAYER, 1, N_EMBD), jnp.float32),
        "ln1_b": jnp.zeros((N_LAYER, 1, N_EMBD), jnp.float32),
        "attn_w": nrm(ks[3], (N_LAYER, N_EMBD, 3 * N_EMBD), std),
        "attn_b": jnp.zeros((N_LAYER, 1, 3 * N_EMBD), jnp.float32),
        "proj_w": nrm(ks[4], (N_LAYER, N_EMBD, N_EMBD), resid_std),
        "proj_b": jnp.zeros((N_LAYER, 1, N_EMBD), jnp.float32),
        "ln2_w": jnp.ones((N_LAYER, 1, N_EMBD), jnp.float32),
        "ln2_b": jnp.zeros((N_LAYER, 1, N_EMBD), jnp.float32),
        "fc_w": nrm(ks[5], (N_LAYER, N_EMBD, 4 * N_EMBD), std),
        "fc_b": jnp.zeros((N_LAYER, 1, 4 * N_EMBD), jnp.float32),
        "cproj_w": nrm(ks[6], (N_LAYER, 4 * N_EMBD, N_EMBD), resid_std),
        "cproj_b": jnp.zeros((N_LAYER, 1, N_EMBD), jnp.float32),
        # final layernorm
        "ln_f_w": jnp.ones((1, N_EMBD), jnp.float32),
        "ln_f_b": jnp.zeros((1, N_EMBD), jnp.float32),
    }
    return params


# ----------------------------- main -------------------------------------------
if __name__ == "__main__":
    key = jax.random.PRNGKey(0)
    k_param, k_x = jax.random.split(key)
    params = init_params(k_param)
    x = jax.random.normal(k_x, (BATCH, SEQ, N_DIM), dtype=jnp.float32)

    out = decoder_forward_pallas(x, params)
    out = jax.block_until_ready(out)

    ref = decoder_forward_ref(x, params)
    assert out.shape == (BATCH, SEQ, 1), out.shape
    # bf16 MXU operands + approx-reciprocal softmax: expected max-abs error is a few
    # e-3 on logits of magnitude ~0.1 (the f32-operand build passes at 1e-3).  1e-2
    # keeps margin while still catching real semantic bugs (mask / head-mapping /
    # bias errors are far larger).
    err = float(jnp.max(jnp.abs(out - ref)))
    assert err < 1e-2, err

    print("KERNEL_OK")
</pallas_src>

<mosaic_0001>
module attributes {stable_mosaic.version = 11 : i64} {
  func.func @kernel(%arg0: i32, %arg1: memref<1x4x16xf32, #tpu.memory_space<vmem>>, %arg2: memref<2x256x32xbf16, #tpu.memory_space<vmem>>, %arg3: memref<2x32x128xbf16, #tpu.memory_space<vmem>>, %arg4: memref<2x416x1xf32, #tpu.memory_space<vmem>>, %arg5: memref<32x24xf32, #tpu.memory_space<vmem>>, %arg6: memref<1x1x16xf32, #tpu.memory_space<vmem>>) attributes {dimension_semantics = [#tpu.dimension_semantics<parallel>], iteration_bounds = array<i64: 1>, scalar_prefetch = 0 : i64, scratch_operands = 0 : i64, tpu.core_type = #tpu.core_type<tc>, window_params = [{transform_indices = @transform_0, window_bounds = array<i64: 1, 4, 16>}, {pipeline_mode = #tpu.pipeline_mode<synchronous>, transform_indices = @transform_1, window_bounds = array<i64: 2, 256, 32>}, {pipeline_mode = #tpu.pipeline_mode<synchronous>, transform_indices = @transform_2, window_bounds = array<i64: 2, 32, 128>}, {pipeline_mode = #tpu.pipeline_mode<synchronous>, transform_indices = @transform_3, window_bounds = array<i64: 2, 416, 1>}, {pipeline_mode = #tpu.pipeline_mode<synchronous>, transform_indices = @transform_4, window_bounds = array<i64: 32, 24>}, {transform_indices = @transform_5, window_bounds = array<i64: 1, 1, 16>}]} {
    %c0 = arith.constant 0 : index
    %c0_0 = arith.constant 0 : index
    %0 = vector.load %arg5[%c0, %c0_0] : memref<32x24xf32, #tpu.memory_space<vmem>>, vector<32x24xf32>
    %1 = vector.extract_strided_slice %0 {offsets = [0, 0], sizes = [32, 4], strides = [1, 1]} : vector<32x24xf32> to vector<32x4xf32>
    %2 = vector.extract_strided_slice %0 {offsets = [0, 4], sizes = [32, 16], strides = [1, 1]} : vector<32x24xf32> to vector<32x16xf32>
    %3 = vector.extract_strided_slice %0 {offsets = [0, 20], sizes = [32, 1], strides = [1, 1]} : vector<32x24xf32> to vector<32x1xf32>
    %4 = vector.extract_strided_slice %0 {offsets = [0, 21], sizes = [32, 1], strides = [1, 1]} : vector<32x24xf32> to vector<32x1xf32>
    %5 = vector.extract_strided_slice %0 {offsets = [0, 22], sizes = [32, 1], strides = [1, 1]} : vector<32x24xf32> to vector<32x1xf32>
    %6 = vector.extract_strided_slice %0 {offsets = [0, 23], sizes = [1, 1], strides = [1, 1]} : vector<32x24xf32> to vector<1x1xf32>
    %c0_1 = arith.constant 0 : index
    %c0_2 = arith.constant 0 : index
    %c0_3 = arith.constant 0 : index
    %7 = vector.load %arg1[%c0_1, %c0_2, %c0_3] : memref<1x4x16xf32, #tpu.memory_space<vmem>>, vector<1x4x16xf32>
    %8 = vector.shape_cast %7 : vector<1x4x16xf32> to vector<4x16xf32>
    %cst = arith.constant dense<0.000000e+00> : vector<32x16xf32>
    %9 = tpu.matmul %1, %8, %cst {dimension_numbers = #tpu.dot_dimension_numbers<[1], [0], [0], [1], [0, 0, 1, 1], [], []>} : vector<32x4xf32>, vector<4x16xf32>, vector<32x16xf32> -> vector<32x16xf32>
    %10 = arith.addf %9, %2 : vector<32x16xf32>
    %11 = tpu.iota {dimensions = array<i32: 0>} : vector<16x16xi32>
    %12 = tpu.iota {dimensions = array<i32: 1>} : vector<16x16xi32>
    %c3_i32 = arith.constant 3 : i32
    %13 = vector.broadcast %c3_i32 : i32 to vector<16x16xi32>
    %14 = arith.shrsi %11, %13 : vector<16x16xi32>
    %c3_i32_4 = arith.constant 3 : i32
    %15 = vector.broadcast %c3_i32_4 : i32 to vector<16x16xi32>
    %16 = arith.shrsi %12, %15 : vector<16x16xi32>
    %17 = arith.cmpi eq, %14, %16 : vector<16x16xi32>
    %18 = arith.cmpi sle, %12, %11 : vector<16x16xi32>
    %19 = arith.andi %17, %18 : vector<16x16xi1>
    %cst_5 = arith.constant 0.000000e+00 : f32
    %cst_6 = arith.constant -1.000000e+30 : f32
    %20 = vector.broadcast %cst_5 : f32 to vector<16x16xf32>
    %21 = vector.broadcast %cst_6 : f32 to vector<16x16xf32>
    %22 = arith.select %19, %20, %21 : vector<16x16xi1>, vector<16x16xf32>
    %23 = vector.shape_cast %22 : vector<16x16xf32> to vector<1x16x16xf32>
    %24 = vector.shape_cast %23 : vector<1x16x16xf32> to vector<1x16x16xf32>
    %25 = vector.broadcast %24 : vector<1x16x16xf32> to vector<4x16x16xf32>
    %c0_7 = arith.constant 0 : index
    %c0_8 = arith.constant 0 : index
    %c0_9 = arith.constant 0 : index
    %26 = vector.load %arg2[%c0_7, %c0_8, %c0_9] : memref<2x256x32xbf16, #tpu.memory_space<vmem>>, vector<1x256x32xbf16>
    %27 = vector.shape_cast %26 : vector<1x256x32xbf16> to vector<256x32xbf16>
    %c0_10 = arith.constant 0 : index
    %c0_11 = arith.constant 0 : index
    %c0_12 = arith.constant 0 : index
    %28 = vector.load %arg4[%c0_10, %c0_11, %c0_12] : memref<2x416x1xf32, #tpu.memory_space<vmem>>, vector<1x416x1xf32>
    %29 = vector.shape_cast %28 : vector<1x416x1xf32> to vector<416x1xf32>
    %30 = vector.extract_strided_slice %27 {offsets = [0, 0], sizes = [96, 32], strides = [1, 1]} : vector<256x32xbf16> to vector<96x32xbf16>
    %31 = vector.extract_strided_slice %27 {offsets = [96, 0], sizes = [32, 32], strides = [1, 1]} : vector<256x32xbf16> to vector<32x32xbf16>
    %32 = vector.extract_strided_slice %27 {offsets = [128, 0], sizes = [128, 32], strides = [1, 1]} : vector<256x32xbf16> to vector<128x32xbf16>
    %c0_13 = arith.constant 0 : index
    %c0_14 = arith.constant 0 : index
    %c0_15 = arith.constant 0 : index
    %33 = vector.load %arg3[%c0_13, %c0_14, %c0_15] : memref<2x32x128xbf16, #tpu.memory_space<vmem>>, vector<1x32x128xbf16>
    %34 = vector.shape_cast %33 : vector<1x32x128xbf16> to vector<32x128xbf16>
    %35 = vector.extract_strided_slice %29 {offsets = [0, 0], sizes = [32, 1], strides = [1, 1]} : vector<416x1xf32> to vector<32x1xf32>
    %36 = vector.extract_strided_slice %29 {offsets = [32, 0], sizes = [32, 1], strides = [1, 1]} : vector<416x1xf32> to vector<32x1xf32>
    %37 = vector.extract_strided_slice %29 {offsets = [64, 0], sizes = [96, 1], strides = [1, 1]} : vector<416x1xf32> to vector<96x1xf32>
    %38 = vector.extract_strided_slice %29 {offsets = [160, 0], sizes = [32, 1], strides = [1, 1]} : vector<416x1xf32> to vector<32x1xf32>
    %39 = vector.extract_strided_slice %29 {offsets = [192, 0], sizes = [32, 1], strides = [1, 1]} : vector<416x1xf32> to vector<32x1xf32>
    %40 = vector.extract_strided_slice %29 {offsets = [224, 0], sizes = [32, 1], strides = [1, 1]} : vector<416x1xf32> to vector<32x1xf32>
    %41 = vector.extract_strided_slice %29 {offsets = [256, 0], sizes = [128, 1], strides = [1, 1]} : vector<416x1xf32> to vector<128x1xf32>
    %42 = vector.extract_strided_slice %29 {offsets = [384, 0], sizes = [32, 1], strides = [1, 1]} : vector<416x1xf32> to vector<32x1xf32>
    %cst_16 = arith.constant dense<0.000000e+00> : vector<16xf32>
    %43 = vector.multi_reduction <add>, %10, %cst_16 [0] : vector<32x16xf32> to vector<16xf32>
    %44 = vector.shape_cast %43 : vector<16xf32> to vector<1x16xf32>
    %cst_17 = arith.constant 3.200000e+01 : f32
    %45 = vector.broadcast %cst_17 : f32 to vector<1x16xf32>
    %46 = arith.divf %44, %45 : vector<1x16xf32>
    %47 = vector.broadcast %46 : vector<1x16xf32> to vector<32x16xf32>
    %48 = arith.subf %10, %47 : vector<32x16xf32>
    %49 = arith.mulf %48, %48 : vector<32x16xf32>
    %cst_18 = arith.constant dense<0.000000e+00> : vector<16xf32>
    %50 = vector.multi_reduction <add>, %49, %cst_18 [0] : vector<32x16xf32> to vector<16xf32>
    %51 = vector.shape_cast %50 : vector<16xf32> to vector<1x16xf32>
    %cst_19 = arith.constant 3.200000e+01 : f32
    %52 = vector.broadcast %cst_19 : f32 to vector<1x16xf32>
    %53 = arith.divf %51, %52 : vector<1x16xf32>
    %cst_20 = arith.constant 9.99999974E-6 : f32
    %54 = vector.broadcast %cst_20 : f32 to vector<1x16xf32>
    %55 = arith.addf %53, %54 : vector<1x16xf32>
    %56 = math.rsqrt %55 : vector<1x16xf32>
    %57 = vector.broadcast %56 : vector<1x16xf32> to vector<32x16xf32>
    %58 = arith.mulf %48, %57 : vector<32x16xf32>
    %59 = vector.broadcast %35 : vector<32x1xf32> to vector<32x16xf32>
    %60 = arith.mulf %58, %59 : vector<32x16xf32>
    %61 = vector.broadcast %36 : vector<32x1xf32> to vector<32x16xf32>
    %62 = arith.addf %60, %61 : vector<32x16xf32>
    %63 = arith.truncf %62 : vector<32x16xf32> to vector<32x16xbf16>
    %cst_21 = arith.constant dense<0.000000e+00> : vector<96x16xf32>
    %64 = tpu.matmul %30, %63, %cst_21 {dimension_numbers = #tpu.dot_dimension_numbers<[1], [0], [0], [1], [0, 0, 1, 1], [], []>} : vector<96x32xbf16>, vector<32x16xbf16>, vector<96x16xf32> -> vector<96x16xf32>
    %65 = vector.broadcast %37 : vector<96x1xf32> to vector<96x16xf32>
    %66 = arith.addf %64, %65 : vector<96x16xf32>
    %67 = vector.shape_cast %66 : vector<96x16xf32> to vector<12x8x16xf32>
    %68 = vector.extract_strided_slice %67 {offsets = [0, 0, 0], sizes = [4, 8, 16], strides = [1, 1, 1]} : vector<12x8x16xf32> to vector<4x8x16xf32>
    %69 = tpu.transpose %68, [0, 2, 1] : vector<4x8x16xf32> -> vector<4x16x8xf32>
    %cst_22 = arith.constant 0.353553385 : f32
    %70 = vector.broadcast %cst_22 : f32 to vector<4x16x8xf32>
    %71 = arith.mulf %69, %70 : vector<4x16x8xf32>
    %72 = vector.extract_strided_slice %67 {offsets = [4, 0, 0], sizes = [4, 8, 16], strides = [1, 1, 1]} : vector<12x8x16xf32> to vector<4x8x16xf32>
    %73 = vector.extract_strided_slice %67 {offsets = [8, 0, 0], sizes = [4, 8, 16], strides = [1, 1, 1]} : vector<12x8x16xf32> to vector<4x8x16xf32>
    %74 = arith.truncf %71 : vector<4x16x8xf32> to vector<4x16x8xbf16>
    %75 = arith.truncf %72 : vector<4x8x16xf32> to vector<4x8x16xbf16>
    "tpu.trace_start"() <{level = 10 : i32, message = "hqd,hdk->hqk"}> : () -> ()
    %cst_23 = arith.constant dense<0.000000e+00> : vector<4x16x16xf32>
    %76 = tpu.matmul %74, %75, %cst_23 {dimension_numbers = #tpu.dot_dimension_numbers<[2], [1], [1], [2], [0, 0, 0, 1, 1, 2], [0], [0]>} : vector<4x16x8xbf16>, vector<4x8x16xbf16>, vector<4x16x16xf32> -> vector<4x16x16xf32>
    "tpu.trace_stop"() : () -> ()
    %77 = arith.addf %76, %25 : vector<4x16x16xf32>
    %cst_24 = arith.constant dense<0xFF800000> : vector<4x16xf32>
    %78 = vector.multi_reduction <maximumf>, %77, %cst_24 [2] : vector<4x16x16xf32> to vector<4x16xf32>
    %79 = vector.shape_cast %78 : vector<4x16xf32> to vector<4x16x1xf32>
    %80 = vector.broadcast %79 : vector<4x16x1xf32> to vector<4x16x16xf32>
    %81 = arith.subf %77, %80 : vector<4x16x16xf32>
    %82 = math.exp %81 : vector<4x16x16xf32>
    %cst_25 = arith.constant dense<0.000000e+00> : vector<4x16xf32>
    %83 = vector.multi_reduction <add>, %82, %cst_25 [2] : vector<4x16x16xf32> to vector<4x16xf32>
    %84 = vector.shape_cast %83 : vector<4x16xf32> to vector<4x16x1xf32>
    %85 = tpu.reciprocal %84 {approx = true} : vector<4x16x1xf32> -> vector<4x16x1xf32>
    %86 = vector.broadcast %85 : vector<4x16x1xf32> to vector<4x16x16xf32>
    %87 = arith.mulf %82, %86 : vector<4x16x16xf32>
    %88 = arith.truncf %73 : vector<4x8x16xf32> to vector<4x8x16xbf16>
    %89 = arith.truncf %87 : vector<4x16x16xf32> to vector<4x16x16xbf16>
    "tpu.trace_start"() <{level = 10 : i32, message = "hdk,hqk->hdq"}> : () -> ()
    %cst_26 = arith.constant dense<0.000000e+00> : vector<4x8x16xf32>
    %90 = tpu.matmul %88, %89, %cst_26 {dimension_numbers = #tpu.dot_dimension_numbers<[2], [2], [1], [1], [0, 0, 0, 1, 1, 1], [0], [0]>} : vector<4x8x16xbf16>, vector<4x16x16xbf16>, vector<4x8x16xf32> -> vector<4x8x16xf32>
    "tpu.trace_stop"() : () -> ()
    %91 = vector.shape_cast %90 : vector<4x8x16xf32> to vector<32x16xf32>
    %92 = arith.truncf %91 : vector<32x16xf32> to vector<32x16xbf16>
    %cst_27 = arith.constant dense<0.000000e+00> : vector<32x16xf32>
    %93 = tpu.matmul %31, %92, %cst_27 {dimension_numbers = #tpu.dot_dimension_numbers<[1], [0], [0], [1], [0, 0, 1, 1], [], []>} : vector<32x32xbf16>, vector<32x16xbf16>, vector<32x16xf32> -> vector<32x16xf32>
    %94 = vector.broadcast %38 : vector<32x1xf32> to vector<32x16xf32>
    %95 = arith.addf %93, %94 : vector<32x16xf32>
    %96 = arith.addf %10, %95 : vector<32x16xf32>
    %cst_28 = arith.constant dense<0.000000e+00> : vector<16xf32>
    %97 = vector.multi_reduction <add>, %96, %cst_28 [0] : vector<32x16xf32> to vector<16xf32>
    %98 = vector.shape_cast %97 : vector<16xf32> to vector<1x16xf32>
    %cst_29 = arith.constant 3.200000e+01 : f32
    %99 = vector.broadcast %cst_29 : f32 to vector<1x16xf32>
    %100 = arith.divf %98, %99 : vector<1x16xf32>
    %101 = vector.broadcast %100 : vector<1x16xf32> to vector<32x16xf32>
    %102 = arith.subf %96, %101 : vector<32x16xf32>
    %103 = arith.mulf %102, %102 : vector<32x16xf32>
    %cst_30 = arith.constant dense<0.000000e+00> : vector<16xf32>
    %104 = vector.multi_reduction <add>, %103, %cst_30 [0] : vector<32x16xf32> to vector<16xf32>
    %105 = vector.shape_cast %104 : vector<16xf32> to vector<1x16xf32>
    %cst_31 = arith.constant 3.200000e+01 : f32
    %106 = vector.broadcast %cst_31 : f32 to vector<1x16xf32>
    %107 = arith.divf %105, %106 : vector<1x16xf32>
    %cst_32 = arith.constant 9.99999974E-6 : f32
    %108 = vector.broadcast %cst_32 : f32 to vector<1x16xf32>
    %109 = arith.addf %107, %108 : vector<1x16xf32>
    %110 = math.rsqrt %109 : vector<1x16xf32>
    %111 = vector.broadcast %110 : vector<1x16xf32> to vector<32x16xf32>
    %112 = arith.mulf %102, %111 : vector<32x16xf32>
    %113 = vector.broadcast %39 : vector<32x1xf32> to vector<32x16xf32>
    %114 = arith.mulf %112, %113 : vector<32x16xf32>
    %115 = vector.broadcast %40 : vector<32x1xf32> to vector<32x16xf32>
    %116 = arith.addf %114, %115 : vector<32x16xf32>
    %117 = arith.truncf %116 : vector<32x16xf32> to vector<32x16xbf16>
    %cst_33 = arith.constant dense<0.000000e+00> : vector<128x16xf32>
    %118 = tpu.matmul %32, %117, %cst_33 {dimension_numbers = #tpu.dot_dimension_numbers<[1], [0], [0], [1], [0, 0, 1, 1], [], []>} : vector<128x32xbf16>, vector<32x16xbf16>, vector<128x16xf32> -> vector<128x16xf32>
    %119 = vector.broadcast %41 : vector<128x1xf32> to vector<128x16xf32>
    %120 = arith.addf %118, %119 : vector<128x16xf32>
    %cst_34 = arith.constant 5.000000e-01 : f32
    %121 = vector.broadcast %cst_34 : f32 to vector<128x16xf32>
    %122 = arith.mulf %121, %120 : vector<128x16xf32>
    %cst_35 = arith.constant 4.471500e-02 : f32
    %123 = vector.broadcast %cst_35 : f32 to vector<128x16xf32>
    %124 = arith.mulf %123, %120 : vector<128x16xf32>
    %125 = arith.mulf %124, %120 : vector<128x16xf32>
    %126 = arith.mulf %125, %120 : vector<128x16xf32>
    %127 = arith.addf %120, %126 : vector<128x16xf32>
    %cst_36 = arith.constant 0.797884583 : f32
    %128 = vector.broadcast %cst_36 : f32 to vector<128x16xf32>
    %129 = arith.mulf %128, %127 : vector<128x16xf32>
    %130 = math.tanh %129 : vector<128x16xf32>
    %cst_37 = arith.constant 1.000000e+00 : f32
    %131 = vector.broadcast %cst_37 : f32 to vector<128x16xf32>
    %132 = arith.addf %131, %130 : vector<128x16xf32>
    %133 = arith.mulf %122, %132 : vector<128x16xf32>
    %134 = arith.truncf %133 : vector<128x16xf32> to vector<128x16xbf16>
    %cst_38 = arith.constant dense<0.000000e+00> : vector<32x16xf32>
    %135 = tpu.matmul %34, %134, %cst_38 {dimension_numbers = #tpu.dot_dimension_numbers<[1], [0], [0], [1], [0, 0, 1, 1], [], []>} : vector<32x128xbf16>, vector<128x16xbf16>, vector<32x16xf32> -> vector<32x16xf32>
    %136 = vector.broadcast %42 : vector<32x1xf32> to vector<32x16xf32>
    %137 = arith.addf %135, %136 : vector<32x16xf32>
    %138 = arith.addf %96, %137 : vector<32x16xf32>
    %c1 = arith.constant 1 : index
    %c0_39 = arith.constant 0 : index
    %c0_40 = arith.constant 0 : index
    %139 = vector.load %arg2[%c1, %c0_39, %c0_40] : memref<2x256x32xbf16, #tpu.memory_space<vmem>>, vector<1x256x32xbf16>
    %140 = vector.shape_cast %139 : vector<1x256x32xbf16> to vector<256x32xbf16>
    %c1_41 = arith.constant 1 : index
    %c0_42 = arith.constant 0 : index
    %c0_43 = arith.constant 0 : index
    %141 = vector.load %arg4[%c1_41, %c0_42, %c0_43] : memref<2x416x1xf32, #tpu.memory_space<vmem>>, vector<1x416x1xf32>
    %142 = vector.shape_cast %141 : vector<1x416x1xf32> to vector<416x1xf32>
    %143 = vector.extract_strided_slice %140 {offsets = [0, 0], sizes = [96, 32], strides = [1, 1]} : vector<256x32xbf16> to vector<96x32xbf16>
    %144 = vector.extract_strided_slice %140 {offsets = [96, 0], sizes = [32, 32], strides = [1, 1]} : vector<256x32xbf16> to vector<32x32xbf16>
    %145 = vector.extract_strided_slice %140 {offsets = [128, 0], sizes = [128, 32], strides = [1, 1]} : vector<256x32xbf16> to vector<128x32xbf16>
    %c1_44 = arith.constant 1 : index
    %c0_45 = arith.constant 0 : index
    %c0_46 = arith.constant 0 : index
    %146 = vector.load %arg3[%c1_44, %c0_45, %c0_46] : memref<2x32x128xbf16, #tpu.memory_space<vmem>>, vector<1x32x128xbf16>
    %147 = vector.shape_cast %146 : vector<1x32x128xbf16> to vector<32x128xbf16>
    %148 = vector.extract_strided_slice %142 {offsets = [0, 0], sizes = [32, 1], strides = [1, 1]} : vector<416x1xf32> to vector<32x1xf32>
    %149 = vector.extract_strided_slice %142 {offsets = [32, 0], sizes = [32, 1], strides = [1, 1]} : vector<416x1xf32> to vector<32x1xf32>
    %150 = vector.extract_strided_slice %142 {offsets = [64, 0], sizes = [96, 1], strides = [1, 1]} : vector<416x1xf32> to vector<96x1xf32>
    %151 = vector.extract_strided_slice %142 {offsets = [160, 0], sizes = [32, 1], strides = [1, 1]} : vector<416x1xf32> to vector<32x1xf32>
    %152 = vector.extract_strided_slice %142 {offsets = [192, 0], sizes = [32, 1], strides = [1, 1]} : vector<416x1xf32> to vector<32x1xf32>
    %153 = vector.extract_strided_slice %142 {offsets = [224, 0], sizes = [32, 1], strides = [1, 1]} : vector<416x1xf32> to vector<32x1xf32>
    %154 = vector.extract_strided_slice %142 {offsets = [256, 0], sizes = [128, 1], strides = [1, 1]} : vector<416x1xf32> to vector<128x1xf32>
    %155 = vector.extract_strided_slice %142 {offsets = [384, 0], sizes = [32, 1], strides = [1, 1]} : vector<416x1xf32> to vector<32x1xf32>
    %cst_47 = arith.constant dense<0.000000e+00> : vector<16xf32>
    %156 = vector.multi_reduction <add>, %138, %cst_47 [0] : vector<32x16xf32> to vector<16xf32>
    %157 = vector.shape_cast %156 : vector<16xf32> to vector<1x16xf32>
    %cst_48 = arith.constant 3.200000e+01 : f32
    %158 = vector.broadcast %cst_48 : f32 to vector<1x16xf32>
    %159 = arith.divf %157, %158 : vector<1x16xf32>
    %160 = vector.broadcast %159 : vector<1x16xf32> to vector<32x16xf32>
    %161 = arith.subf %138, %160 : vector<32x16xf32>
    %162 = arith.mulf %161, %161 : vector<32x16xf32>
    %cst_49 = arith.constant dense<0.000000e+00> : vector<16xf32>
    %163 = vector.multi_reduction <add>, %162, %cst_49 [0] : vector<32x16xf32> to vector<16xf32>
    %164 = vector.shape_cast %163 : vector<16xf32> to vector<1x16xf32>
    %cst_50 = arith.constant 3.200000e+01 : f32
    %165 = vector.broadcast %cst_50 : f32 to vector<1x16xf32>
    %166 = arith.divf %164, %165 : vector<1x16xf32>
    %cst_51 = arith.constant 9.99999974E-6 : f32
    %167 = vector.broadcast %cst_51 : f32 to vector<1x16xf32>
    %168 = arith.addf %166, %167 : vector<1x16xf32>
    %169 = math.rsqrt %168 : vector<1x16xf32>
    %170 = vector.broadcast %169 : vector<1x16xf32> to vector<32x16xf32>
    %171 = arith.mulf %161, %170 : vector<32x16xf32>
    %172 = vector.broadcast %148 : vector<32x1xf32> to vector<32x16xf32>
    %173 = arith.mulf %171, %172 : vector<32x16xf32>
    %174 = vector.broadcast %149 : vector<32x1xf32> to vector<32x16xf32>
    %175 = arith.addf %173, %174 : vector<32x16xf32>
    %176 = arith.truncf %175 : vector<32x16xf32> to vector<32x16xbf16>
    %cst_52 = arith.constant dense<0.000000e+00> : vector<96x16xf32>
    %177 = tpu.matmul %143, %176, %cst_52 {dimension_numbers = #tpu.dot_dimension_numbers<[1], [0], [0], [1], [0, 0, 1, 1], [], []>} : vector<96x32xbf16>, vector<32x16xbf16>, vector<96x16xf32> -> vector<96x16xf32>
    %178 = vector.broadcast %150 : vector<96x1xf32> to vector<96x16xf32>
    %179 = arith.addf %177, %178 : vector<96x16xf32>
    %180 = vector.shape_cast %179 : vector<96x16xf32> to vector<12x8x16xf32>
    %181 = vector.extract_strided_slice %180 {offsets = [0, 0, 0], sizes = [4, 8, 16], strides = [1, 1, 1]} : vector<12x8x16xf32> to vector<4x8x16xf32>
    %182 = tpu.transpose %181, [0, 2, 1] : vector<4x8x16xf32> -> vector<4x16x8xf32>
    %cst_53 = arith.constant 0.353553385 : f32
    %183 = vector.broadcast %cst_53 : f32 to vector<4x16x8xf32>
    %184 = arith.mulf %182, %183 : vector<4x16x8xf32>
    %185 = vector.extract_strided_slice %180 {offsets = [4, 0, 0], sizes = [4, 8, 16], strides = [1, 1, 1]} : vector<12x8x16xf32> to vector<4x8x16xf32>
    %186 = vector.extract_strided_slice %180 {offsets = [8, 0, 0], sizes = [4, 8, 16], strides = [1, 1, 1]} : vector<12x8x16xf32> to vector<4x8x16xf32>
    %187 = arith.truncf %184 : vector<4x16x8xf32> to vector<4x16x8xbf16>
    %188 = arith.truncf %185 : vector<4x8x16xf32> to vector<4x8x16xbf16>
    "tpu.trace_start"() <{level = 10 : i32, message = "hqd,hdk->hqk"}> : () -> ()
    %cst_54 = arith.constant dense<0.000000e+00> : vector<4x16x16xf32>
    %189 = tpu.matmul %187, %188, %cst_54 {dimension_numbers = #tpu.dot_dimension_numbers<[2], [1], [1], [2], [0, 0, 0, 1, 1, 2], [0], [0]>} : vector<4x16x8xbf16>, vector<4x8x16xbf16>, vector<4x16x16xf32> -> vector<4x16x16xf32>
    "tpu.trace_stop"() : () -> ()
    %190 = arith.addf %189, %25 : vector<4x16x16xf32>
    %cst_55 = arith.constant dense<0xFF800000> : vector<4x16xf32>
    %191 = vector.multi_reduction <maximumf>, %190, %cst_55 [2] : vector<4x16x16xf32> to vector<4x16xf32>
    %192 = vector.shape_cast %191 : vector<4x16xf32> to vector<4x16x1xf32>
    %193 = vector.broadcast %192 : vector<4x16x1xf32> to vector<4x16x16xf32>
    %194 = arith.subf %190, %193 : vector<4x16x16xf32>
    %195 = math.exp %194 : vector<4x16x16xf32>
    %cst_56 = arith.constant dense<0.000000e+00> : vector<4x16xf32>
    %196 = vector.multi_reduction <add>, %195, %cst_56 [2] : vector<4x16x16xf32> to vector<4x16xf32>
    %197 = vector.shape_cast %196 : vector<4x16xf32> to vector<4x16x1xf32>
    %198 = tpu.reciprocal %197 {approx = true} : vector<4x16x1xf32> -> vector<4x16x1xf32>
    %199 = vector.broadcast %198 : vector<4x16x1xf32> to vector<4x16x16xf32>
    %200 = arith.mulf %195, %199 : vector<4x16x16xf32>
    %201 = arith.truncf %186 : vector<4x8x16xf32> to vector<4x8x16xbf16>
    %202 = arith.truncf %200 : vector<4x16x16xf32> to vector<4x16x16xbf16>
    "tpu.trace_start"() <{level = 10 : i32, message = "hdk,hqk->hdq"}> : () -> ()
    %cst_57 = arith.constant dense<0.000000e+00> : vector<4x8x16xf32>
    %203 = tpu.matmul %201, %202, %cst_57 {dimension_numbers = #tpu.dot_dimension_numbers<[2], [2], [1], [1], [0, 0, 0, 1, 1, 1], [0], [0]>} : vector<4x8x16xbf16>, vector<4x16x16xbf16>, vector<4x8x16xf32> -> vector<4x8x16xf32>
    "tpu.trace_stop"() : () -> ()
    %204 = vector.shape_cast %203 : vector<4x8x16xf32> to vector<32x16xf32>
    %205 = arith.truncf %204 : vector<32x16xf32> to vector<32x16xbf16>
    %cst_58 = arith.constant dense<0.000000e+00> : vector<32x16xf32>
    %206 = tpu.matmul %144, %205, %cst_58 {dimension_numbers = #tpu.dot_dimension_numbers<[1], [0], [0], [1], [0, 0, 1, 1], [], []>} : vector<32x32xbf16>, vector<32x16xbf16>, vector<32x16xf32> -> vector<32x16xf32>
    %207 = vector.broadcast %151 : vector<32x1xf32> to vector<32x16xf32>
    %208 = arith.addf %206, %207 : vector<32x16xf32>
    %209 = arith.addf %138, %208 : vector<32x16xf32>
    %cst_59 = arith.constant dense<0.000000e+00> : vector<16xf32>
    %210 = vector.multi_reduction <add>, %209, %cst_59 [0] : vector<32x16xf32> to vector<16xf32>
    %211 = vector.shape_cast %210 : vector<16xf32> to vector<1x16xf32>
    %cst_60 = arith.constant 3.200000e+01 : f32
    %212 = vector.broadcast %cst_60 : f32 to vector<1x16xf32>
    %213 = arith.divf %211, %212 : vector<1x16xf32>
    %214 = vector.broadcast %213 : vector<1x16xf32> to vector<32x16xf32>
    %215 = arith.subf %209, %214 : vector<32x16xf32>
    %216 = arith.mulf %215, %215 : vector<32x16xf32>
    %cst_61 = arith.constant dense<0.000000e+00> : vector<16xf32>
    %217 = vector.multi_reduction <add>, %216, %cst_61 [0] : vector<32x16xf32> to vector<16xf32>
    %218 = vector.shape_cast %217 : vector<16xf32> to vector<1x16xf32>
    %cst_62 = arith.constant 3.200000e+01 : f32
    %219 = vector.broadcast %cst_62 : f32 to vector<1x16xf32>
    %220 = arith.divf %218, %219 : vector<1x16xf32>
    %cst_63 = arith.constant 9.99999974E-6 : f32
    %221 = vector.broadcast %cst_63 : f32 to vector<1x16xf32>
    %222 = arith.addf %220, %221 : vector<1x16xf32>
    %223 = math.rsqrt %222 : vector<1x16xf32>
    %224 = vector.broadcast %223 : vector<1x16xf32> to vector<32x16xf32>
    %225 = arith.mulf %215, %224 : vector<32x16xf32>
    %226 = vector.broadcast %152 : vector<32x1xf32> to vector<32x16xf32>
    %227 = arith.mulf %225, %226 : vector<32x16xf32>
    %228 = vector.broadcast %153 : vector<32x1xf32> to vector<32x16xf32>
    %229 = arith.addf %227, %228 : vector<32x16xf32>
    %230 = arith.truncf %229 : vector<32x16xf32> to vector<32x16xbf16>
    %cst_64 = arith.constant dense<0.000000e+00> : vector<128x16xf32>
    %231 = tpu.matmul %145, %230, %cst_64 {dimension_numbers = #tpu.dot_dimension_numbers<[1], [0], [0], [1], [0, 0, 1, 1], [], []>} : vector<128x32xbf16>, vector<32x16xbf16>, vector<128x16xf32> -> vector<128x16xf32>
    %232 = vector.broadcast %154 : vector<128x1xf32> to vector<128x16xf32>
    %233 = arith.addf %231, %232 : vector<128x16xf32>
    %cst_65 = arith.constant 5.000000e-01 : f32
    %234 = vector.broadcast %cst_65 : f32 to vector<128x16xf32>
    %235 = arith.mulf %234, %233 : vector<128x16xf32>
    %cst_66 = arith.constant 4.471500e-02 : f32
    %236 = vector.broadcast %cst_66 : f32 to vector<128x16xf32>
    %237 = arith.mulf %236, %233 : vector<128x16xf32>
    %238 = arith.mulf %237, %233 : vector<128x16xf32>
    %239 = arith.mulf %238, %233 : vector<128x16xf32>
    %240 = arith.addf %233, %239 : vector<128x16xf32>
    %cst_67 = arith.constant 0.797884583 : f32
    %241 = vector.broadcast %cst_67 : f32 to vector<128x16xf32>
    %242 = arith.mulf %241, %240 : vector<128x16xf32>
    %243 = math.tanh %242 : vector<128x16xf32>
    %cst_68 = arith.constant 1.000000e+00 : f32
    %244 = vector.broadcast %cst_68 : f32 to vector<128x16xf32>
    %245 = arith.addf %244, %243 : vector<128x16xf32>
    %246 = arith.mulf %235, %245 : vector<128x16xf32>
    %247 = arith.truncf %246 : vector<128x16xf32> to vector<128x16xbf16>
    %cst_69 = arith.constant dense<0.000000e+00> : vector<32x16xf32>
    %248 = tpu.matmul %147, %247, %cst_69 {dimension_numbers = #tpu.dot_dimension_numbers<[1], [0], [0], [1], [0, 0, 1, 1], [], []>} : vector<32x128xbf16>, vector<128x16xbf16>, vector<32x16xf32> -> vector<32x16xf32>
    %249 = vector.broadcast %155 : vector<32x1xf32> to vector<32x16xf32>
    %250 = arith.addf %248, %249 : vector<32x16xf32>
    %251 = arith.addf %209, %250 : vector<32x16xf32>
    %cst_70 = arith.constant dense<0.000000e+00> : vector<16xf32>
    %252 = vector.multi_reduction <add>, %251, %cst_70 [0] : vector<32x16xf32> to vector<16xf32>
    %253 = vector.shape_cast %252 : vector<16xf32> to vector<1x16xf32>
    %cst_71 = arith.constant 3.200000e+01 : f32
    %254 = vector.broadcast %cst_71 : f32 to vector<1x16xf32>
    %255 = arith.divf %253, %254 : vector<1x16xf32>
    %256 = vector.broadcast %255 : vector<1x16xf32> to vector<32x16xf32>
    %257 = arith.subf %251, %256 : vector<32x16xf32>
    %258 = arith.mulf %257, %257 : vector<32x16xf32>
    %cst_72 = arith.constant dense<0.000000e+00> : vector<16xf32>
    %259 = vector.multi_reduction <add>, %258, %cst_72 [0] : vector<32x16xf32> to vector<16xf32>
    %260 = vector.shape_cast %259 : vector<16xf32> to vector<1x16xf32>
    %cst_73 = arith.constant 3.200000e+01 : f32
    %261 = vector.broadcast %cst_73 : f32 to vector<1x16xf32>
    %262 = arith.divf %260, %261 : vector<1x16xf32>
    %cst_74 = arith.constant 9.99999974E-6 : f32
    %263 = vector.broadcast %cst_74 : f32 to vector<1x16xf32>
    %264 = arith.addf %262, %263 : vector<1x16xf32>
    %265 = math.rsqrt %264 : vector<1x16xf32>
    %266 = vector.broadcast %265 : vector<1x16xf32> to vector<32x16xf32>
    %267 = arith.mulf %257, %266 : vector<32x16xf32>
    %268 = vector.broadcast %3 : vector<32x1xf32> to vector<32x16xf32>
    %269 = arith.mulf %267, %268 : vector<32x16xf32>
    %270 = vector.broadcast %4 : vector<32x1xf32> to vector<32x16xf32>
    %271 = arith.addf %269, %270 : vector<32x16xf32>
    %272 = vector.broadcast %5 : vector<32x1xf32> to vector<32x16xf32>
    %273 = arith.mulf %271, %272 : vector<32x16xf32>
    %cst_75 = arith.constant dense<0.000000e+00> : vector<16xf32>
    %274 = vector.multi_reduction <add>, %273, %cst_75 [0] : vector<32x16xf32> to vector<16xf32>
    %275 = vector.shape_cast %274 : vector<16xf32> to vector<1x16xf32>
    %276 = vector.broadcast %6 : vector<1x1xf32> to vector<1x16xf32>
    %277 = arith.addf %275, %276 : vector<1x16xf32>
    %c0_76 = arith.constant 0 : index
    %c0_77 = arith.constant 0 : index
    %c0_78 = arith.constant 0 : index
    %278 = vector.load %arg6[%c0_76, %c0_77, %c0_78] : memref<1x1x16xf32, #tpu.memory_space<vmem>>, vector<1x1x16xf32>
    %279 = vector.shape_cast %278 : vector<1x1x16xf32> to vector<1x16xf32>
    %280 = vector.shape_cast %277 : vector<1x16xf32> to vector<1x1x16xf32>
    tpu.vector_store %arg6[%c0_76, %c0_77, %c0_78], %280 {strides = array<i32>} : memref<1x1x16xf32, #tpu.memory_space<vmem>>, vector<1x1x16xf32>,
    return
  }
  func.func @transform_0(%arg0: i32) -> (i32, i32, i32) {
    %c0_i32 = arith.constant 0 : i32
    %c0_i32_0 = arith.constant 0 : i32
    %c0_i32_1 = arith.constant 0 : i32
    return %arg0, %c0_i32, %c0_i32_0 : i32, i32, i32
  }
  func.func @transform_1(%arg0: i32) -> (i32, i32, i32) {
    %c0_i32 = arith.constant 0 : i32
    %c0_i32_0 = arith.constant 0 : i32
    %c0_i32_1 = arith.constant 0 : i32
    %c0_i32_2 = arith.constant 0 : i32
    return %c0_i32, %c0_i32_0, %c0_i32_1 : i32, i32, i32
  }
  func.func @transform_2(%arg0: i32) -> (i32, i32, i32) {
    %c0_i32 = arith.constant 0 : i32
    %c0_i32_0 = arith.constant 0 : i32
    %c0_i32_1 = arith.constant 0 : i32
    %c0_i32_2 = arith.constant 0 : i32
    return %c0_i32, %c0_i32_0, %c0_i32_1 : i32, i32, i32
  }
  func.func @transform_3(%arg0: i32) -> (i32, i32, i32) {
    %c0_i32 = arith.constant 0 : i32
    %c0_i32_0 = arith.constant 0 : i32
    %c0_i32_1 = arith.constant 0 : i32
    %c0_i32_2 = arith.constant 0 : i32
    return %c0_i32, %c0_i32_0, %c0_i32_1 : i32, i32, i32
  }
  func.func @transform_4(%arg0: i32) -> (i32, i32) {
    %c0_i32 = arith.constant 0 : i32
    %c0_i32_0 = arith.constant 0 : i32
    %c0_i32_1 = arith.constant 0 : i32
    return %c0_i32, %c0_i32_0 : i32, i32
  }
  func.func @transform_5(%arg0: i32) -> (i32, i32, i32) {
    %c0_i32 = arith.constant 0 : i32
    %c0_i32_0 = arith.constant 0 : i32
    %c0_i32_1 = arith.constant 0 : i32
    return %arg0, %c0_i32, %c0_i32_0 : i32, i32, i32
  }
}

</mosaic_0001>

<llo_original>
// kernel: tpu_custom_call.1
$region0: #{tpu_custom_call.1}
  #allocation0 [shape = 'u32[]', space=smem, size = 0x4, offset = 0x4, fixed_abs, tag = 'smem constant byte address 0x4 - core index']
  #allocation1 [shape = 'u32[72,128]{1,0:T(1,128)}', space=vmem, size = 0x9000, scoped, tag = 'internal scratch']
  %s0 = inlined_call_operand.vmem [shape: f32[1,4,16], index: 0, kind: input, shape index: {}]
  %s1 = inlined_call_operand.vmem [shape: bf16[2,256,32], index: 1, kind: input, shape index: {}]
  %s2 = inlined_call_operand.vmem [shape: bf16[2,32,128], index: 2, kind: input, shape index: {}]
  %s3 = inlined_call_operand.vmem [shape: f32[2,416,1], index: 3, kind: input, shape index: {}]
  %s4 = inlined_call_operand.vmem [shape: f32[32,24], index: 4, kind: input, shape index: {}]
  %s5 = inlined_call_operand.hbm [shape: f32[1,1,16], index: 5, kind: output, shape index: {}]
  %s6 = sld [smem:[#allocation0]]
  $region30: #{tpu_custom_call.1} parent=0
    _
  %s8 = ssub.s32 1, %s6
  %s9 = scalar_select 0, %s8, %s6
  $region1: #{tpu_custom_call.1} parent=0
    #allocation2 [shape = 'u8[512]{0}', space=vmem, size = 0x400, scoped, tag = 'output window, operand 0, single buffered']
    #allocation3 [shape = 's32[1]{0}', space=sflag, size = 0x4, scoped, tag = 'scoped memory for tpu_custom_call.1']
    %10 = vsyncpa [#allocation3], 0
    // Predicated region
    $region2: #{tpu_custom_call.1} parent=1 // pred_check
      _
    $region3: #{tpu_custom_call.1} parent=1 // pred_check_branch
      %12 = sbr.rel (0) target = $region5
    $region4: #{tpu_custom_call.1} parent=1 // pred_region
      _
    $region5: #{tpu_custom_call.1} parent=1 // pred_fallthru
      _
    // Predicated region
    $region6: #{tpu_custom_call.1} parent=1 // pred_check
      _
    $region7: #{tpu_custom_call.1} parent=1 // pred_check_branch
      %14 = sbr.rel (0) target = $region9
    $region8: #{tpu_custom_call.1} parent=1 // pred_region
      _
    $region9: #{tpu_custom_call.1} parent=1 // pred_fallthru
      _
    // Predicated region
    $region10: #{tpu_custom_call.1} parent=1 // pred_check
      _
    $region11: #{tpu_custom_call.1} parent=1 // pred_check_branch
      %16 = sbr.rel (0) target = $region13
    $region12: #{tpu_custom_call.1} parent=1 // pred_region
      _
    $region13: #{tpu_custom_call.1} parent=1 // pred_fallthru
      _
    // Predicated region
    $region14: #{tpu_custom_call.1} parent=1 // pred_check
      _
    $region15: #{tpu_custom_call.1} parent=1 // pred_check_branch
      %18 = sbr.rel (0) target = $region17
    $region16: #{tpu_custom_call.1} parent=1 // pred_region
      _
    $region17: #{tpu_custom_call.1} parent=1 // pred_fallthru
      _
    // Predicated region
    $region18: #{tpu_custom_call.1} parent=1 // pred_check
      _
    $region19: #{tpu_custom_call.1} parent=1 // pred_check_branch
      %20 = sbr.rel (0) target = $region21
    $region20: #{tpu_custom_call.1} parent=1 // pred_region
      _
    $region21: #{tpu_custom_call.1} parent=1 // pred_fallthru
      _
    %v22 = vld [vmem:[%s4] sm:$0xff]
    %v23 = vld [vmem:[%s4 + $0x8] sm:$0xff]
    %v24 = vld [vmem:[%s4 + $0x10] sm:$0xff]
    %v25 = vld [vmem:[%s4 + $0x18] sm:$0xff]
    %v26 = vld [vmem:[%s0] sm:$0xf]
    %31 = vrot.lane.b32.xlu0 %v22, 124
    %v32 = vpop.permute.xlu0 %31
    %33 = vrot.lane.b32.xlu0 %v23, 124
    %v34 = vpop.permute.xlu0 %33
    %35 = vrot.lane.b32.xlu0 %v24, 124
    %v36 = vpop.permute.xlu0 %35
    %37 = vrot.lane.b32.xlu0 %v25, 124
    %v38 = vpop.permute.xlu0 %37
    %vm43 = vcmask 31744
    %v44 = vsel %vm43, %v22, 0
    %v46 = vsel %vm43, %v23, 0
    %v48 = vsel %vm43, %v24, 0
    %v50 = vsel %vm43, %v25, 0
    %vm52 = vcmask 1043456
    %v54 = vsel %vm52, %v26, 0
    %56 = vmatpush.msra.mxu0 0.0
    %57 = vmatpush.msra.mxu0 0.0
    %58 = vmatpush.msra.mxu0 0.0
    %59 = vmatpush.msra.mxu0 0.0
    %60 = vmatpush.msra.mxu0 0.0
    %61 = vmatpush.msra.mxu0 0.0
    %62 = vmatpush.msra.mxu0 0.0
    %63 = vmatpush.msra.mxu0 0.0
    %64 = vmatpush.msra.mxu0 0.0
    %65 = vmatpush.msra.mxu0 0.0
    %66 = vmatpush.msra.mxu0 0.0
    %67 = vmatpush.msra.mxu0 0.0
    %68 = vmatpush.msra.mxu0 0.0
    %69 = vmatpush.msra.mxu0 0.0
    %70 = vmatpush.msra.mxu0 0.0
    %71 = vmatpush.msra.mxu0 %v54
    %72 = vmatmul.f32.gmra.mxu0 %v44
    %v73 = vpop.f32.mrf.mxu0
    %v74 = vadd.f32 %v32, %v73
    %75 = vmatmul.f32.gmra.mxu0 %v46
    %v76 = vpop.f32.mrf.mxu0
    %v77 = vadd.f32 %v34, %v76
    %78 = vmatmul.f32.gmra.mxu0 %v48
    %v79 = vpop.f32.mrf.mxu0
    %v80 = vadd.f32 %v36, %v79
    %81 = vmatmul.f32.gmra.mxu0 %v50
    %v82 = vpop.f32.mrf.mxu0
    %v83 = vadd.f32 %v38, %v82
    %84 = vdwg.mxu0
    %v85 = vlaneseq
    %v86 = vshrl.u32 %v85, 7
    %v87 = vadd.s32 %v86, 8
    %v88 = vlaneseq
    %v89 = vand.u32 %v88, 127
    %v90 = vshra.s32 %v86, 3
    %v91 = vshra.s32 %v87, 3
    %v92 = vshra.s32 %v89, 3
    %vm93 = vcmp.eq.s32.totalorder %v90, %v92
    %vm94 = vcmp.eq.s32.totalorder %v91, %v92
    %vm95 = vcmp.le.s32.totalorder %v89, %v86
    %vm96 = vcmp.le.s32.totalorder %v89, %v87
    %vm97 = vmand %vm93, %vm95
    %vm98 = vmand %vm94, %vm96
    %v99 = vsel %vm97, 0.0, -1e+30
    %v100 = vsel %vm98, 0.0, -1e+30
    %v101 = vld [vmem:[%s1] sm:$0xf]
    %v102 = vld [vmem:[%s1 + $0x4] sm:$0xf]
    %v103 = vld [vmem:[%s1 + $0x8] sm:$0xf]
    %v104 = vld [vmem:[%s1 + $0xc] sm:$0xf]
    %v105 = vld [vmem:[%s1 + $0x10] sm:$0xf]
    %v106 = vld [vmem:[%s1 + $0x14] sm:$0xf]
    %v107 = vld [vmem:[%s1 + $0x18] sm:$0xf]
    %v108 = vld [vmem:[%s1 + $0x1c] sm:$0xf]
    %v109 = vld [vmem:[%s1 + $0x20] sm:$0xf]
    %v110 = vld [vmem:[%s1 + $0x24] sm:$0xf]
    %v111 = vld [vmem:[%s1 + $0x28] sm:$0xf]
    %v112 = vld [vmem:[%s1 + $0x2c] sm:$0xf]
    %v113 = vld [vmem:[%s1 + $0x30] sm:$0xf]
    %v114 = vld [vmem:[%s1 + $0x34] sm:$0xf]
    %v115 = vld [vmem:[%s1 + $0x38] sm:$0xf]
    %v116 = vld [vmem:[%s1 + $0x3c] sm:$0xf]
    %v117 = vld [vmem:[%s1 + $0x40] sm:$0xf]
    %v118 = vld [vmem:[%s1 + $0x44] sm:$0xf]
    %v119 = vld [vmem:[%s1 + $0x48] sm:$0xf]
    %v120 = vld [vmem:[%s1 + $0x4c] sm:$0xf]
    %v121 = vld [vmem:[%s1 + $0x50] sm:$0xf]
    %v122 = vld [vmem:[%s1 + $0x54] sm:$0xf]
    %v123 = vld [vmem:[%s1 + $0x58] sm:$0xf]
    %v124 = vld [vmem:[%s1 + $0x5c] sm:$0xf]
    %v125 = vld [vmem:[%s1 + $0x60] sm:$0xf]
    %v126 = vld [vmem:[%s1 + $0x64] sm:$0xf]
    %v127 = vld [vmem:[%s1 + $0x68] sm:$0xf]
    %v128 = vld [vmem:[%s1 + $0x6c] sm:$0xf]
    %v129 = vld [vmem:[%s1 + $0x70] sm:$0xf]
    %v130 = vld [vmem:[%s1 + $0x74] sm:$0xf]
    %v131 = vld [vmem:[%s1 + $0x78] sm:$0xf]
    %v132 = vld [vmem:[%s1 + $0x7c] sm:$0xf]
    %v133 = vld [vmem:[%s3] sm:$0xff]
    %v134 = vld [vmem:[%s3 + $0x8] sm:$0xff]
    %v135 = vld [vmem:[%s3 + $0x10] sm:$0xff]
    %v136 = vld [vmem:[%s3 + $0x18] sm:$0xff]
    %v137 = vld [vmem:[%s3 + $0x20] sm:$0xff]
    %v138 = vld [vmem:[%s3 + $0x28] sm:$0xff]
    %v139 = vld [vmem:[%s3 + $0x30] sm:$0xff]
    %v140 = vld [vmem:[%s3 + $0x38] sm:$0xff]
    %v141 = vld [vmem:[%s3 + $0x40] sm:$0xff]
    %v142 = vld [vmem:[%s3 + $0x48] sm:$0xff]
    %v143 = vld [vmem:[%s3 + $0x50] sm:$0xff]
    %v144 = vld [vmem:[%s3 + $0x58] sm:$0xff]
    %v145 = vld [vmem:[%s3 + $0x60] sm:$0xff]
    %v146 = vld [vmem:[%s3 + $0x68] sm:$0xff]
    %v147 = vld [vmem:[%s3 + $0x70] sm:$0xff]
    %v148 = vld [vmem:[%s3 + $0x78] sm:$0xff]
    %v149 = vld [vmem:[%s3 + $0x80] sm:$0xff]
    %v150 = vld [vmem:[%s3 + $0x88] sm:$0xff]
    %v151 = vld [vmem:[%s3 + $0x90] sm:$0xff]
    %v152 = vld [vmem:[%s3 + $0x98] sm:$0xff]
    %v153 = vld [vmem:[%s3 + $0xa0] sm:$0xff]
    %v154 = vld [vmem:[%s3 + $0xa8] sm:$0xff]
    %v155 = vld [vmem:[%s3 + $0xb0] sm:$0xff]
    %v156 = vld [vmem:[%s3 + $0xb8] sm:$0xff]
    %v157 = vld [vmem:[%s3 + $0xc0] sm:$0xff]
    %v158 = vld [vmem:[%s3 + $0xc8] sm:$0xff]
    %v159 = vld [vmem:[%s3 + $0xd0] sm:$0xff]
    %v160 = vld [vmem:[%s3 + $0xd8] sm:$0xff]
    %v161 = vld [vmem:[%s3 + $0xe0] sm:$0xff]
    %v162 = vld [vmem:[%s3 + $0xe8] sm:$0xff]
    %v163 = vld [vmem:[%s3 + $0xf0] sm:$0xff]
    %v164 = vld [vmem:[%s3 + $0xf8] sm:$0xff]
    %v165 = vld [vmem:[%s3 + $0x100] sm:$0xff]
    %v166 = vld [vmem:[%s3 + $0x108] sm:$0xff]
    %v167 = vld [vmem:[%s3 + $0x110] sm:$0xff]
    %v168 = vld [vmem:[%s3 + $0x118] sm:$0xff]
    %v169 = vld [vmem:[%s3 + $0x120] sm:$0xff]
    %v170 = vld [vmem:[%s3 + $0x128] sm:$0xff]
    %v171 = vld [vmem:[%s3 + $0x130] sm:$0xff]
    %v172 = vld [vmem:[%s3 + $0x138] sm:$0xff]
    %v173 = vld [vmem:[%s3 + $0x140] sm:$0xff]
    %v174 = vld [vmem:[%s3 + $0x148] sm:$0xff]
    %v175 = vld [vmem:[%s3 + $0x150] sm:$0xff]
    %v176 = vld [vmem:[%s3 + $0x158] sm:$0xff]
    %v177 = vld [vmem:[%s3 + $0x160] sm:$0xff]
    %v178 = vld [vmem:[%s3 + $0x168] sm:$0xff]
    %v179 = vld [vmem:[%s3 + $0x170] sm:$0xff]
    %v180 = vld [vmem:[%s3 + $0x178] sm:$0xff]
    %v181 = vld [vmem:[%s3 + $0x180] sm:$0xff]
    %v182 = vld [vmem:[%s3 + $0x188] sm:$0xff]
    %v183 = vld [vmem:[%s3 + $0x190] sm:$0xff]
    %v184 = vld [vmem:[%s3 + $0x198] sm:$0xff]
    %v185 = vld [vmem:[%s2] sm:$0xf]
    %v186 = vld [vmem:[%s2 + $0x4] sm:$0xf]
    %v187 = vld [vmem:[%s2 + $0x8] sm:$0xf]
    %v188 = vld [vmem:[%s2 + $0xc] sm:$0xf]
    %vm189 = vcmask 130048
    %v190 = vsel %vm189, %v74, 0.0
    %v191 = vsel %vm189, %v77, 0.0
    %v192 = vadd.f32 %v190, %v191
    %v193 = vsel %vm189, %v80, 0.0
    %v194 = vadd.f32 %v192, %v193
    %v195 = vsel %vm189, %v83, 0.0
    %v196 = vadd.f32 %v194, %v195
    %v197 = vrot.slane %v196, 4
    %v198 = vadd.f32 %v196, %v197
    %v199 = vrot.slane %v198, 2
    %v200 = vadd.f32 %v198, %v199
    %v201 = vrot.slane %v200, 1
    %v202 = vadd.f32 %v200, %v201
    %v203 = vrcp.pop 32.0
    %v204 = vmul.f32 32.0, %v203
    %v205 = vsub.f32 1.0, %v204
    %v206 = vmul.f32 %v203, %v205
    %v207 = vadd.f32 %v203, %v206
    %vm208 = vweird.f32 %v203
    %v209 = vsel %vm208, %v203, %v207
    %v210 = vmul.f32 %v202, %v209
    %v211 = vsub.f32 %v74, %v210
    %v212 = vsub.f32 %v77, %v210
    %v213 = vsub.f32 %v80, %v210
    %v214 = vsub.f32 %v83, %v210
    %v215 = vmul.f32 %v211, %v211
    %v216 = vmul.f32 %v212, %v212
    %v217 = vmul.f32 %v213, %v213
    %v218 = vmul.f32 %v214, %v214
    %v219 = vsel %vm189, %v215, 0.0
    %v220 = vsel %vm189, %v216, 0.0
    %v221 = vadd.f32 %v219, %v220
    %v222 = vsel %vm189, %v217, 0.0
    %v223 = vadd.f32 %v221, %v222
    %v224 = vsel %vm189, %v218, 0.0
    %v225 = vadd.f32 %v223, %v224
    %v226 = vrot.slane %v225, 4
    %v227 = vadd.f32 %v225, %v226
    %v228 = vrot.slane %v227, 2
    %v229 = vadd.f32 %v227, %v228
    %v230 = vrot.slane %v229, 1
    %v231 = vadd.f32 %v229, %v230
    %v232 = vmul.f32 %v231, %v209
    %v233 = vadd.f32 %v232, 1e-05
    %v234 = vrsqrt.pop %v233
    %v235 = vmul.f32 %v234, %v233
    %v236 = vmul.f32 %v235, %v234
    %v237 = vmul.f32 0.5, %v236
    %v238 = vsub.f32 1.5, %v237
    %v239 = vmul.f32 %v234, %v238
    %vm240 = vweird.f32 %v233
    %vm241 = vweird.f32 %v234
    %vm242 = vmor %vm240, %vm241
    %v243 = vsel %vm242, %v234, %v239
    %v244 = vmul.f32 %v211, %v243
    %v245 = vmul.f32 %v212, %v243
    %v246 = vmul.f32 %v213, %v243
    %v247 = vmul.f32 %v214, %v243
    %249 = vset.pattern.permute.xlu0 0
    %250 = vperm.xlu0 %249, %v133
    %v251 = vpop.permute.xlu0 %250
    %254 = vset.pattern.permute.xlu0 0
    %255 = vperm.xlu0 %254, %v134
    %v256 = vpop.permute.xlu0 %255
    %259 = vset.pattern.permute.xlu0 0
    %260 = vperm.xlu0 %259, %v135
    %v261 = vpop.permute.xlu0 %260
    %264 = vset.pattern.permute.xlu0 0
    %265 = vperm.xlu0 %264, %v136
    %v266 = vpop.permute.xlu0 %265
    %v268 = vmul.f32 %v244, %v251
    %v269 = vmul.f32 %v245, %v256
    %v270 = vmul.f32 %v246, %v261
    %v271 = vmul.f32 %v247, %v266
    %273 = vset.pattern.permute.xlu0 0
    %274 = vperm.xlu0 %273, %v137
    %v275 = vpop.permute.xlu0 %274
    %278 = vset.pattern.permute.xlu0 0
    %279 = vperm.xlu0 %278, %v138
    %v280 = vpop.permute.xlu0 %279
    %283 = vset.pattern.permute.xlu0 0
    %284 = vperm.xlu0 %283, %v139
    %v285 = vpop.permute.xlu0 %284
    %288 = vset.pattern.permute.xlu0 0
    %289 = vperm.xlu0 %288, %v140
    %v290 = vpop.permute.xlu0 %289
    %v292 = vadd.f32 %v268, %v275
    %v293 = vadd.f32 %v269, %v280
    %v294 = vadd.f32 %v270, %v285
    %v295 = vadd.f32 %v271, %v290
    %v296 = vpack.c.bf16 %v293, %v292
    %v297 = vpack.c.bf16 %v295, %v294
    %299 = vset.pattern.permute.xlu0 0
    %300 = vperm.xlu0 %299, %v141
    %v301 = vpop.permute.xlu0 %300
    %304 = vset.pattern.permute.xlu0 0
    %305 = vperm.xlu0 %304, %v142
    %v306 = vpop.permute.xlu0 %305
    %309 = vset.pattern.permute.xlu0 0
    %310 = vperm.xlu0 %309, %v143
    %v311 = vpop.permute.xlu0 %310
    %314 = vset.pattern.permute.xlu0 0
    %315 = vperm.xlu0 %314, %v144
    %v316 = vpop.permute.xlu0 %315
    %319 = vset.pattern.permute.xlu0 0
    %320 = vperm.xlu0 %319, %v145
    %v321 = vpop.permute.xlu0 %320
    %324 = vset.pattern.permute.xlu0 0
    %325 = vperm.xlu0 %324, %v146
    %v326 = vpop.permute.xlu0 %325
    %329 = vset.pattern.permute.xlu0 0
    %330 = vperm.xlu0 %329, %v147
    %v331 = vpop.permute.xlu0 %330
    %334 = vset.pattern.permute.xlu0 0
    %335 = vperm.xlu0 %334, %v148
    %v336 = vpop.permute.xlu0 %335
    %339 = vset.pattern.permute.xlu0 0
    %340 = vperm.xlu0 %339, %v149
    %v341 = vpop.permute.xlu0 %340
    %344 = vset.pattern.permute.xlu0 0
    %345 = vperm.xlu0 %344, %v150
    %v346 = vpop.permute.xlu0 %345
    %349 = vset.pattern.permute.xlu0 0
    %350 = vperm.xlu0 %349, %v151
    %v351 = vpop.permute.xlu0 %350
    %354 = vset.pattern.permute.xlu0 0
    %355 = vperm.xlu0 %354, %v152
    %v356 = vpop.permute.xlu0 %355
    %v370 = vunpack.c.l.b16 %v101
    %v371 = vunpack.c.l.b16 %v102
    %v372 = vunpack.c.l.b16 %v103
    %v373 = vunpack.c.l.b16 %v104
    %v374 = vunpack.c.l.b16 %v105
    %v375 = vunpack.c.l.b16 %v106
    %v376 = vunpack.c.l.b16 %v107
    %v377 = vunpack.c.l.b16 %v108
    %v378 = vunpack.c.l.b16 %v109
    %v379 = vunpack.c.l.b16 %v110
    %v380 = vunpack.c.l.b16 %v111
    %v381 = vunpack.c.l.b16 %v112
    %v382 = vpack.c.b16 %v371, %v370
    %v383 = vpack.c.b16 %v373, %v372
    %v384 = vpack.c.b16 %v375, %v374
    %v385 = vpack.c.b16 %v377, %v376
    %v386 = vpack.c.b16 %v379, %v378
    %v387 = vpack.c.b16 %v381, %v380
    %vm388 = vcmask 261120
    %v390 = vsel %vm388, %v382, 0
    %v393 = vsel %vm388, %v383, 0
    %v396 = vsel %vm388, %v384, 0
    %v399 = vsel %vm388, %v385, 0
    %v402 = vsel %vm388, %v386, 0
    %v405 = vsel %vm388, %v387, 0
    %407 = vmatpush.bf16.msra.mxu0 0
    %408 = vmatpush.bf16.msra.mxu0 0
    %409 = vmatpush.bf16.msra.mxu0 0
    %410 = vmatpush.bf16.msra.mxu0 0
    %411 = vmatpush.bf16.msra.mxu0 0
    %412 = vmatpush.bf16.msra.mxu0 0
    %413 = vmatpush.bf16.msra.mxu0 %v297
    %414 = vmatpush.bf16.msra.mxu0 %v296
    %415 = vmatmul.bf16.gmra.mxu0 %v390
    %v416 = vpop.f32.mrf.mxu0
    %v417 = vadd.f32 %v301, %v416
    %v418 = vpop.f32.mrf.mxu0
    %v419 = vadd.f32 %v306, %v418
    %420 = vmatmul.bf16.gmra.mxu0 %v393
    %v421 = vpop.f32.mrf.mxu0
    %v422 = vadd.f32 %v311, %v421
    %v423 = vpop.f32.mrf.mxu0
    %v424 = vadd.f32 %v316, %v423
    %425 = vmatmul.bf16.gmra.mxu0 %v396
    %v426 = vpop.f32.mrf.mxu0
    %v427 = vadd.f32 %v321, %v426
    %v428 = vpop.f32.mrf.mxu0
    %v429 = vadd.f32 %v326, %v428
    %430 = vmatmul.bf16.gmra.mxu0 %v399
    %v431 = vpop.f32.mrf.mxu0
    %v432 = vadd.f32 %v331, %v431
    %v433 = vpop.f32.mrf.mxu0
    %v434 = vadd.f32 %v336, %v433
    %435 = vmatmul.bf16.gmra.mxu0 %v402
    %v436 = vpop.f32.mrf.mxu0
    %v437 = vadd.f32 %v341, %v436
    %v438 = vpop.f32.mrf.mxu0
    %v439 = vadd.f32 %v346, %v438
    %440 = vmatmul.bf16.gmra.mxu0 %v405
    %v441 = vpop.f32.mrf.mxu0
    %v442 = vadd.f32 %v351, %v441
    %v443 = vpop.f32.mrf.mxu0
    %v444 = vadd.f32 %v356, %v443
    %445 = vdwg.mxu0
    %446 = vxpose.xlu0.b32.start [1/16] %v417, 128
    %447 = vxpose.xlu0.b32.cont [2/16] 0.0, 128
    %448 = vxpose.xlu0.b32.cont [3/16] 0.0, 128
    %449 = vxpose.xlu0.b32.cont [4/16] 0.0, 128
    %450 = vxpose.xlu0.b32.cont [5/16] 0.0, 128
    %451 = vxpose.xlu0.b32.cont [6/16] 0.0, 128
    %452 = vxpose.xlu0.b32.cont [7/16] 0.0, 128
    %453 = vxpose.xlu0.b32.cont [8/16] 0.0, 128
    %454 = vxpose.xlu0.b32.cont [9/16] 0.0, 128
    %455 = vxpose.xlu0.b32.cont [10/16] 0.0, 128
    %456 = vxpose.xlu0.b32.cont [11/16] 0.0, 128
    %457 = vxpose.xlu0.b32.cont [12/16] 0.0, 128
    %458 = vxpose.xlu0.b32.cont [13/16] 0.0, 128
    %459 = vxpose.xlu0.b32.cont [14/16] 0.0, 128
    %460 = vxpose.xlu0.b32.cont [15/16] 0.0, 128
    %461 = vxpose.xlu0.b32.end [16/16] 0.0, 128
    %v462 = vpop.trf.xlu0
    %v463 = vpop.trf.xlu0
    %v464 = vpop.trf.xlu0
    %v465 = vpop.trf.xlu0
    %v466 = vpop.trf.xlu0
    %v467 = vpop.trf.xlu0
    %v468 = vpop.trf.xlu0
    %v469 = vpop.trf.xlu0
    %v470 = vpop.trf.xlu0
    %v471 = vpop.trf.xlu0
    %v472 = vpop.trf.xlu0
    %v473 = vpop.trf.xlu0
    %v474 = vpop.trf.xlu0
    %v475 = vpop.trf.xlu0
    %v476 = vpop.trf.xlu0
    %v477 = vpop.trf.xlu0
    %478 = vxpose.xlu0.b32.start [1/16] %v419, 128
    %479 = vxpose.xlu0.b32.cont [2/16] 0.0, 128
    %480 = vxpose.xlu0.b32.cont [3/16] 0.0, 128
    %481 = vxpose.xlu0.b32.cont [4/16] 0.0, 128
    %482 = vxpose.xlu0.b32.cont [5/16] 0.0, 128
    %483 = vxpose.xlu0.b32.cont [6/16] 0.0, 128
    %484 = vxpose.xlu0.b32.cont [7/16] 0.0, 128
    %485 = vxpose.xlu0.b32.cont [8/16] 0.0, 128
    %486 = vxpose.xlu0.b32.cont [9/16] 0.0, 128
    %487 = vxpose.xlu0.b32.cont [10/16] 0.0, 128
    %488 = vxpose.xlu0.b32.cont [11/16] 0.0, 128
    %489 = vxpose.xlu0.b32.cont [12/16] 0.0, 128
    %490 = vxpose.xlu0.b32.cont [13/16] 0.0, 128
    %491 = vxpose.xlu0.b32.cont [14/16] 0.0, 128
    %492 = vxpose.xlu0.b32.cont [15/16] 0.0, 128
    %493 = vxpose.xlu0.b32.end [16/16] 0.0, 128
    %v494 = vpop.trf.xlu0
    %v495 = vpop.trf.xlu0
    %v496 = vpop.trf.xlu0
    %v497 = vpop.trf.xlu0
    %v498 = vpop.trf.xlu0
    %v499 = vpop.trf.xlu0
    %v500 = vpop.trf.xlu0
    %v501 = vpop.trf.xlu0
    %v502 = vpop.trf.xlu0
    %v503 = vpop.trf.xlu0
    %v504 = vpop.trf.xlu0
    %v505 = vpop.trf.xlu0
    %v506 = vpop.trf.xlu0
    %v507 = vpop.trf.xlu0
    %v508 = vpop.trf.xlu0
    %v509 = vpop.trf.xlu0
    %510 = vxpose.xlu0.b32.start [1/16] %v422, 128
    %511 = vxpose.xlu0.b32.cont [2/16] 0.0, 128
    %512 = vxpose.xlu0.b32.cont [3/16] 0.0, 128
    %513 = vxpose.xlu0.b32.cont [4/16] 0.0, 128
    %514 = vxpose.xlu0.b32.cont [5/16] 0.0, 128
    %515 = vxpose.xlu0.b32.cont [6/16] 0.0, 128
    %516 = vxpose.xlu0.b32.cont [7/16] 0.0, 128
    %517 = vxpose.xlu0.b32.cont [8/16] 0.0, 128
    %518 = vxpose.xlu0.b32.cont [9/16] 0.0, 128
    %519 = vxpose.xlu0.b32.cont [10/16] 0.0, 128
    %520 = vxpose.xlu0.b32.cont [11/16] 0.0, 128
    %521 = vxpose.xlu0.b32.cont [12/16] 0.0, 128
    %522 = vxpose.xlu0.b32.cont [13/16] 0.0, 128
    %523 = vxpose.xlu0.b32.cont [14/16] 0.0, 128
    %524 = vxpose.xlu0.b32.cont [15/16] 0.0, 128
    %525 = vxpose.xlu0.b32.end [16/16] 0.0, 128
    %v526 = vpop.trf.xlu0
    %v527 = vpop.trf.xlu0
    %v528 = vpop.trf.xlu0
    %v529 = vpop.trf.xlu0
    %v530 = vpop.trf.xlu0
    %v531 = vpop.trf.xlu0
    %v532 = vpop.trf.xlu0
    %v533 = vpop.trf.xlu0
    %v534 = vpop.trf.xlu0
    %v535 = vpop.trf.xlu0
    %v536 = vpop.trf.xlu0
    %v537 = vpop.trf.xlu0
    %v538 = vpop.trf.xlu0
    %v539 = vpop.trf.xlu0
    %v540 = vpop.trf.xlu0
    %v541 = vpop.trf.xlu0
    %542 = vxpose.xlu0.b32.start [1/16] %v424, 128
    %543 = vxpose.xlu0.b32.cont [2/16] 0.0, 128
    %544 = vxpose.xlu0.b32.cont [3/16] 0.0, 128
    %545 = vxpose.xlu0.b32.cont [4/16] 0.0, 128
    %546 = vxpose.xlu0.b32.cont [5/16] 0.0, 128
    %547 = vxpose.xlu0.b32.cont [6/16] 0.0, 128
    %548 = vxpose.xlu0.b32.cont [7/16] 0.0, 128
    %549 = vxpose.xlu0.b32.cont [8/16] 0.0, 128
    %550 = vxpose.xlu0.b32.cont [9/16] 0.0, 128
    %551 = vxpose.xlu0.b32.cont [10/16] 0.0, 128
    %552 = vxpose.xlu0.b32.cont [11/16] 0.0, 128
    %553 = vxpose.xlu0.b32.cont [12/16] 0.0, 128
    %554 = vxpose.xlu0.b32.cont [13/16] 0.0, 128
    %555 = vxpose.xlu0.b32.cont [14/16] 0.0, 128
    %556 = vxpose.xlu0.b32.cont [15/16] 0.0, 128
    %557 = vxpose.xlu0.b32.end [16/16] 0.0, 128
    %v558 = vpop.trf.xlu0
    %v559 = vpop.trf.xlu0
    %v560 = vpop.trf.xlu0
    %v561 = vpop.trf.xlu0
    %v562 = vpop.trf.xlu0
    %v563 = vpop.trf.xlu0
    %v564 = vpop.trf.xlu0
    %v565 = vpop.trf.xlu0
    %v566 = vpop.trf.xlu0
    %v567 = vpop.trf.xlu0
    %v568 = vpop.trf.xlu0
    %v569 = vpop.trf.xlu0
    %v570 = vpop.trf.xlu0
    %v571 = vpop.trf.xlu0
    %v572 = vpop.trf.xlu0
    %v573 = vpop.trf.xlu0
    %v574 = vmul.f32 %v462, 0.35355338
    %v575 = vmul.f32 %v463, 0.35355338
    %v576 = vmul.f32 %v494, 0.35355338
    %v577 = vmul.f32 %v495, 0.35355338
    %v578 = vmul.f32 %v526, 0.35355338
    %v579 = vmul.f32 %v527, 0.35355338
    %v580 = vmul.f32 %v558, 0.35355338
    %v581 = vmul.f32 %v559, 0.35355338
    %v582 = vpack.c.bf16 %v574, %v574
    %v583 = vpack.c.bf16 %v575, %v575
    %v584 = vpack.c.bf16 %v576, %v576
    %v585 = vpack.c.bf16 %v577, %v577
    %v586 = vpack.c.bf16 %v578, %v578
    %v587 = vpack.c.bf16 %v579, %v579
    %v588 = vpack.c.bf16 %v580, %v580
    %v589 = vpack.c.bf16 %v581, %v581
    %v590 = vpack.c.bf16 %v427, %v427
    %v591 = vpack.c.bf16 %v429, %v429
    %v592 = vpack.c.bf16 %v432, %v432
    %v593 = vpack.c.bf16 %v434, %v434
    %v596 = vunpack.c.l.b16 %v582
    %v597 = vunpack.c.l.b16 %v583
    %v598 = vpack.c.b16 %v597, %v596
    %vm599 = vcmask 64512
    %v601 = vsel %vm599, %v598, 0
    %v604 = vsel %vm52, %v590, 0
    %606 = vmatpush.bf16.msra.mxu0 0
    %607 = vmatpush.bf16.msra.mxu0 0
    %608 = vmatpush.bf16.msra.mxu0 0
    %609 = vmatpush.bf16.msra.mxu0 0
    %610 = vmatpush.bf16.msra.mxu0 0
    %611 = vmatpush.bf16.msra.mxu0 0
    %612 = vmatpush.bf16.msra.mxu0 0
    %613 = vmatpush.bf16.msra.mxu0 %v604
    %614 = vmatmul.bf16.gmra.mxu0 %v601
    %v615 = vpop.f32.mrf.mxu0
    %v616 = vadd.f32 %v99, %v615
    %v617 = vpop.f32.mrf.mxu0
    %v618 = vadd.f32 %v100, %v617
    %619 = vdwg.mxu0
    %v622 = vunpack.c.l.b16 %v584
    %v623 = vunpack.c.l.b16 %v585
    %v624 = vpack.c.b16 %v623, %v622
    %v626 = vsel %vm599, %v624, 0
    %v629 = vsel %vm52, %v591, 0
    %631 = vmatpush.bf16.msra.mxu0 0
    %632 = vmatpush.bf16.msra.mxu0 0
    %633 = vmatpush.bf16.msra.mxu0 0
    %634 = vmatpush.bf16.msra.mxu0 0
    %635 = vmatpush.bf16.msra.mxu0 0
    %636 = vmatpush.bf16.msra.mxu0 0
    %637 = vmatpush.bf16.msra.mxu0 0
    %638 = vmatpush.bf16.msra.mxu0 %v629
    %639 = vmatmul.bf16.gmra.mxu0 %v626
    %v640 = vpop.f32.mrf.mxu0
    %v641 = vadd.f32 %v99, %v640
    %v642 = vpop.f32.mrf.mxu0
    %v643 = vadd.f32 %v100, %v642
    %644 = vdwg.mxu0
    %v647 = vunpack.c.l.b16 %v586
    %v648 = vunpack.c.l.b16 %v587
    %v649 = vpack.c.b16 %v648, %v647
    %v651 = vsel %vm599, %v649, 0
    %v654 = vsel %vm52, %v592, 0
    %656 = vmatpush.bf16.msra.mxu0 0
    %657 = vmatpush.bf16.msra.mxu0 0
    %658 = vmatpush.bf16.msra.mxu0 0
    %659 = vmatpush.bf16.msra.mxu0 0
    %660 = vmatpush.bf16.msra.mxu0 0
    %661 = vmatpush.bf16.msra.mxu0 0
    %662 = vmatpush.bf16.msra.mxu0 0
    %663 = vmatpush.bf16.msra.mxu0 %v654
    %664 = vmatmul.bf16.gmra.mxu0 %v651
    %v665 = vpop.f32.mrf.mxu0
    %v666 = vadd.f32 %v99, %v665
    %v667 = vpop.f32.mrf.mxu0
    %v668 = vadd.f32 %v100, %v667
    %669 = vdwg.mxu0
    %v672 = vunpack.c.l.b16 %v588
    %v673 = vunpack.c.l.b16 %v589
    %v674 = vpack.c.b16 %v673, %v672
    %v676 = vsel %vm599, %v674, 0
    %v679 = vsel %vm52, %v593, 0
    %681 = vmatpush.bf16.msra.mxu0 0
    %682 = vmatpush.bf16.msra.mxu0 0
    %683 = vmatpush.bf16.msra.mxu0 0
    %684 = vmatpush.bf16.msra.mxu0 0
    %685 = vmatpush.bf16.msra.mxu0 0
    %686 = vmatpush.bf16.msra.mxu0 0
    %687 = vmatpush.bf16.msra.mxu0 0
    %688 = vmatpush.bf16.msra.mxu0 %v679
    %689 = vmatmul.bf16.gmra.mxu0 %v676
    %v690 = vpop.f32.mrf.mxu0
    %v691 = vadd.f32 %v99, %v690
    %v692 = vpop.f32.mrf.mxu0
    %v693 = vadd.f32 %v100, %v692
    %694 = vdwg.mxu0
    %v695 = vsel %vm189, %v616, -inf
    %696 = vmax.xlane.f32.xlu0 %v695
    %v697 = vpop.xlane.xlu0 %696
    %v698 = vsel %vm189, %v618, -inf
    %699 = vmax.xlane.f32.xlu0 %v698
    %v700 = vpop.xlane.xlu0 %699
    %v701 = vsel %vm189, %v641, -inf
    %702 = vmax.xlane.f32.xlu0 %v701
    %v703 = vpop.xlane.xlu0 %702
    %v704 = vsel %vm189, %v643, -inf
    %705 = vmax.xlane.f32.xlu0 %v704
    %v706 = vpop.xlane.xlu0 %705
    %v707 = vsel %vm189, %v666, -inf
    %708 = vmax.xlane.f32.xlu0 %v707
    %v709 = vpop.xlane.xlu0 %708
    %v710 = vsel %vm189, %v668, -inf
    %711 = vmax.xlane.f32.xlu0 %v710
    %v712 = vpop.xlane.xlu0 %711
    %v713 = vsel %vm189, %v691, -inf
    %714 = vmax.xlane.f32.xlu0 %v713
    %v715 = vpop.xlane.xlu0 %714
    %v716 = vsel %vm189, %v693, -inf
    %717 = vmax.xlane.f32.xlu0 %v716
    %v718 = vpop.xlane.xlu0 %717
    %v719 = vsub.f32 %v616, %v697
    %v720 = vsub.f32 %v618, %v700
    %v721 = vsub.f32 %v641, %v703
    %v722 = vsub.f32 %v643, %v706
    %v723 = vsub.f32 %v666, %v709
    %v724 = vsub.f32 %v668, %v712
    %v725 = vsub.f32 %v691, %v715
    %v726 = vsub.f32 %v693, %v718
    %v727 = vmul.f32 %v719, 1.442695
    %v728 = vpow.pop %v727
    %v729 = vmul.f32 %v720, 1.442695
    %v730 = vpow.pop %v729
    %v731 = vmul.f32 %v721, 1.442695
    %v732 = vpow.pop %v731
    %v733 = vmul.f32 %v722, 1.442695
    %v734 = vpow.pop %v733
    %v735 = vmul.f32 %v723, 1.442695
    %v736 = vpow.pop %v735
    %v737 = vmul.f32 %v724, 1.442695
    %v738 = vpow.pop %v737
    %v739 = vmul.f32 %v725, 1.442695
    %v740 = vpow.pop %v739
    %v741 = vmul.f32 %v726, 1.442695
    %v742 = vpow.pop %v741
    %v743 = vsel %vm189, %v728, 0.0
    %744 = vadd.xlane.f32.xlu0 %v743
    %v745 = vpop.xlane.xlu0 %744
    %v746 = vsel %vm189, %v730, 0.0
    %747 = vadd.xlane.f32.xlu0 %v746
    %v748 = vpop.xlane.xlu0 %747
    %v749 = vsel %vm189, %v732, 0.0
    %750 = vadd.xlane.f32.xlu0 %v749
    %v751 = vpop.xlane.xlu0 %750
    %v752 = vsel %vm189, %v734, 0.0
    %753 = vadd.xlane.f32.xlu0 %v752
    %v754 = vpop.xlane.xlu0 %753
    %v755 = vsel %vm189, %v736, 0.0
    %756 = vadd.xlane.f32.xlu0 %v755
    %v757 = vpop.xlane.xlu0 %756
    %v758 = vsel %vm189, %v738, 0.0
    %759 = vadd.xlane.f32.xlu0 %v758
    %v760 = vpop.xlane.xlu0 %759
    %v761 = vsel %vm189, %v740, 0.0
    %762 = vadd.xlane.f32.xlu0 %v761
    %v763 = vpop.xlane.xlu0 %762
    %v764 = vsel %vm189, %v742, 0.0
    %765 = vadd.xlane.f32.xlu0 %v764
    %v766 = vpop.xlane.xlu0 %765
    %v767 = vrcp.pop %v745
    %v768 = vrcp.pop %v748
    %v769 = vrcp.pop %v751
    %v770 = vrcp.pop %v754
    %v771 = vrcp.pop %v757
    %v772 = vrcp.pop %v760
    %v773 = vrcp.pop %v763
    %v774 = vrcp.pop %v766
    %v775 = vmul.f32 %v728, %v767
    %v776 = vmul.f32 %v730, %v768
    %v777 = vmul.f32 %v732, %v769
    %v778 = vmul.f32 %v734, %v770
    %v779 = vmul.f32 %v736, %v771
    %v780 = vmul.f32 %v738, %v772
    %v781 = vmul.f32 %v740, %v773
    %v782 = vmul.f32 %v742, %v774
    %v783 = vpack.c.bf16 %v437, %v437
    %v784 = vpack.c.bf16 %v439, %v439
    %v785 = vpack.c.bf16 %v442, %v442
    %v786 = vpack.c.bf16 %v444, %v444
    %v787 = vpack.c.bf16 %v775, %v775
    %v788 = vpack.c.bf16 %v776, %v776
    %v789 = vpack.c.bf16 %v777, %v777
    %v790 = vpack.c.bf16 %v778, %v778
    %v791 = vpack.c.bf16 %v779, %v779
    %v792 = vpack.c.bf16 %v780, %v780
    %v793 = vpack.c.bf16 %v781, %v781
    %v794 = vpack.c.bf16 %v782, %v782
    %v797 = vunpack.c.l.b16 %v787
    %v798 = vunpack.c.l.b16 %v788
    %v799 = vpack.c.b16 %v798, %v797
    %v801 = vsel %vm189, %v783, 0
    %v804 = vsel %vm189, %v799, 0
    %806 = vmatpush.bf16.xpose.msra.mxu0 0
    %807 = vmatpush.bf16.xpose.msra.mxu0 0
    %808 = vmatpush.bf16.xpose.msra.mxu0 0
    %809 = vmatpush.bf16.xpose.msra.mxu0 0
    %810 = vmatpush.bf16.xpose.msra.mxu0 0
    %811 = vmatpush.bf16.xpose.msra.mxu0 0
    %812 = vmatpush.bf16.xpose.msra.mxu0 0
    %813 = vmatpush.bf16.xpose.msra.mxu0 %v804
    %814 = vmatmul.bf16.gmra.mxu0 %v801
    %v815 = vpop.f32.mrf.mxu0
    %v816 = vadd.f32 0.0, %v815
    %v817 = vpop.f32.mrf.mxu0
    %818 = vdwg.mxu0
    %v821 = vunpack.c.l.b16 %v789
    %v822 = vunpack.c.l.b16 %v790
    %v823 = vpack.c.b16 %v822, %v821
    %v825 = vsel %vm189, %v784, 0
    %v828 = vsel %vm189, %v823, 0
    %830 = vmatpush.bf16.xpose.msra.mxu0 0
    %831 = vmatpush.bf16.xpose.msra.mxu0 0
    %832 = vmatpush.bf16.xpose.msra.mxu0 0
    %833 = vmatpush.bf16.xpose.msra.mxu0 0
    %834 = vmatpush.bf16.xpose.msra.mxu0 0
    %835 = vmatpush.bf16.xpose.msra.mxu0 0
    %836 = vmatpush.bf16.xpose.msra.mxu0 0
    %837 = vmatpush.bf16.xpose.msra.mxu0 %v828
    %838 = vmatmul.bf16.gmra.mxu0 %v825
    %v839 = vpop.f32.mrf.mxu0
    %v840 = vadd.f32 0.0, %v839
    %v841 = vpop.f32.mrf.mxu0
    %842 = vdwg.mxu0
    %v845 = vunpack.c.l.b16 %v791
    %v846 = vunpack.c.l.b16 %v792
    %v847 = vpack.c.b16 %v846, %v845
    %v849 = vsel %vm189, %v785, 0
    %v852 = vsel %vm189, %v847, 0
    %854 = vmatpush.bf16.xpose.msra.mxu0 0
    %855 = vmatpush.bf16.xpose.msra.mxu0 0
    %856 = vmatpush.bf16.xpose.msra.mxu0 0
    %857 = vmatpush.bf16.xpose.msra.mxu0 0
    %858 = vmatpush.bf16.xpose.msra.mxu0 0
    %859 = vmatpush.bf16.xpose.msra.mxu0 0
    %860 = vmatpush.bf16.xpose.msra.mxu0 0
    %861 = vmatpush.bf16.xpose.msra.mxu0 %v852
    %862 = vmatmul.bf16.gmra.mxu0 %v849
    %v863 = vpop.f32.mrf.mxu0
    %v864 = vadd.f32 0.0, %v863
    %v865 = vpop.f32.mrf.mxu0
    %866 = vdwg.mxu0
    %v869 = vunpack.c.l.b16 %v793
    %v870 = vunpack.c.l.b16 %v794
    %v871 = vpack.c.b16 %v870, %v869
    %v873 = vsel %vm189, %v786, 0
    %v876 = vsel %vm189, %v871, 0
    %878 = vmatpush.bf16.xpose.msra.mxu0 0
    %879 = vmatpush.bf16.xpose.msra.mxu0 0
    %880 = vmatpush.bf16.xpose.msra.mxu0 0
    %881 = vmatpush.bf16.xpose.msra.mxu0 0
    %882 = vmatpush.bf16.xpose.msra.mxu0 0
    %883 = vmatpush.bf16.xpose.msra.mxu0 0
    %884 = vmatpush.bf16.xpose.msra.mxu0 0
    %885 = vmatpush.bf16.xpose.msra.mxu0 %v876
    %886 = vmatmul.bf16.gmra.mxu0 %v873
    %v887 = vpop.f32.mrf.mxu0
    %v888 = vadd.f32 0.0, %v887
    %v889 = vpop.f32.mrf.mxu0
    %890 = vdwg.mxu0
    %v891 = vpack.c.bf16 %v840, %v816
    %v892 = vpack.c.bf16 %v888, %v864
    %894 = vset.pattern.permute.xlu0 0
    %895 = vperm.xlu0 %894, %v153
    %v896 = vpop.permute.xlu0 %895
    %899 = vset.pattern.permute.xlu0 0
    %900 = vperm.xlu0 %899, %v154
    %v901 = vpop.permute.xlu0 %900
    %904 = vset.pattern.permute.xlu0 0
    %905 = vperm.xlu0 %904, %v155
    %v906 = vpop.permute.xlu0 %905
    %909 = vset.pattern.permute.xlu0 0
    %910 = vperm.xlu0 %909, %v156
    %v911 = vpop.permute.xlu0 %910
    %v917 = vunpack.c.l.b16 %v113
    %v918 = vunpack.c.l.b16 %v114
    %v919 = vunpack.c.l.b16 %v115
    %v920 = vunpack.c.l.b16 %v116
    %v921 = vpack.c.b16 %v918, %v917
    %v922 = vpack.c.b16 %v920, %v919
    %v924 = vsel %vm388, %v921, 0
    %v927 = vsel %vm388, %v922, 0
    %929 = vmatpush.bf16.msra.mxu0 0
    %930 = vmatpush.bf16.msra.mxu0 0
    %931 = vmatpush.bf16.msra.mxu0 0
    %932 = vmatpush.bf16.msra.mxu0 0
    %933 = vmatpush.bf16.msra.mxu0 0
    %934 = vmatpush.bf16.msra.mxu0 0
    %935 = vmatpush.bf16.msra.mxu0 %v892
    %936 = vmatpush.bf16.msra.mxu0 %v891
    %937 = vmatmul.bf16.gmra.mxu0 %v924
    %v938 = vpop.f32.mrf.mxu0
    %v939 = vadd.f32 %v896, %v938
    %v940 = vpop.f32.mrf.mxu0
    %v941 = vadd.f32 %v901, %v940
    %942 = vmatmul.bf16.gmra.mxu0 %v927
    %v943 = vpop.f32.mrf.mxu0
    %v944 = vadd.f32 %v906, %v943
    %v945 = vpop.f32.mrf.mxu0
    %v946 = vadd.f32 %v911, %v945
    %947 = vdwg.mxu0
    %v948 = vadd.f32 %v74, %v939
    %v949 = vadd.f32 %v77, %v941
    %v950 = vadd.f32 %v80, %v944
    %v951 = vadd.f32 %v83, %v946
    %v952 = vsel %vm189, %v948, 0.0
    %v953 = vsel %vm189, %v949, 0.0
    %v954 = vadd.f32 %v952, %v953
    %v955 = vsel %vm189, %v950, 0.0
    %v956 = vadd.f32 %v954, %v955
    %v957 = vsel %vm189, %v951, 0.0
    %v958 = vadd.f32 %v956, %v957
    %v959 = vrot.slane %v958, 4
    %v960 = vadd.f32 %v958, %v959
    %v961 = vrot.slane %v960, 2
    %v962 = vadd.f32 %v960, %v961
    %v963 = vrot.slane %v962, 1
    %v964 = vadd.f32 %v962, %v963
    %v965 = vmul.f32 %v964, %v209
    %v966 = vsub.f32 %v948, %v965
    %v967 = vsub.f32 %v949, %v965
    %v968 = vsub.f32 %v950, %v965
    %v969 = vsub.f32 %v951, %v965
    %v970 = vmul.f32 %v966, %v966
    %v971 = vmul.f32 %v967, %v967
    %v972 = vmul.f32 %v968, %v968
    %v973 = vmul.f32 %v969, %v969
    %v974 = vsel %vm189, %v970, 0.0
    %v975 = vsel %vm189, %v971, 0.0
    %v976 = vadd.f32 %v974, %v975
    %v977 = vsel %vm189, %v972, 0.0
    %v978 = vadd.f32 %v976, %v977
    %v979 = vsel %vm189, %v973, 0.0
    %v980 = vadd.f32 %v978, %v979
    %v981 = vrot.slane %v980, 4
    %v982 = vadd.f32 %v980, %v981
    %v983 = vrot.slane %v982, 2
    %v984 = vadd.f32 %v982, %v983
    %v985 = vrot.slane %v984, 1
    %v986 = vadd.f32 %v984, %v985
    %v987 = vmul.f32 %v986, %v209
    %v988 = vadd.f32 %v987, 1e-05
    %v989 = vrsqrt.pop %v988
    %v990 = vmul.f32 %v989, %v988
    %v991 = vmul.f32 %v990, %v989
    %v992 = vmul.f32 0.5, %v991
    %v993 = vsub.f32 1.5, %v992
    %v994 = vmul.f32 %v989, %v993
    %vm995 = vweird.f32 %v988
    %vm996 = vweird.f32 %v989
    %vm997 = vmor %vm995, %vm996
    %v998 = vsel %vm997, %v989, %v994
    %v999 = vmul.f32 %v966, %v998
    %v1000 = vmul.f32 %v967, %v998
    %v1001 = vmul.f32 %v968, %v998
    %v1002 = vmul.f32 %v969, %v998
    %1004 = vset.pattern.permute.xlu0 0
    %1005 = vperm.xlu0 %1004, %v157
    %v1006 = vpop.permute.xlu0 %1005
    %1009 = vset.pattern.permute.xlu0 0
    %1010 = vperm.xlu0 %1009, %v158
    %v1011 = vpop.permute.xlu0 %1010
    %1014 = vset.pattern.permute.xlu0 0
    %1015 = vperm.xlu0 %1014, %v159
    %v1016 = vpop.permute.xlu0 %1015
    %1019 = vset.pattern.permute.xlu0 0
    %1020 = vperm.xlu0 %1019, %v160
    %v1021 = vpop.permute.xlu0 %1020
    %v1023 = vmul.f32 %v999, %v1006
    %v1024 = vmul.f32 %v1000, %v1011
    %v1025 = vmul.f32 %v1001, %v1016
    %v1026 = vmul.f32 %v1002, %v1021
    %1028 = vset.pattern.permute.xlu0 0
    %1029 = vperm.xlu0 %1028, %v161
    %v1030 = vpop.permute.xlu0 %1029
    %1033 = vset.pattern.permute.xlu0 0
    %1034 = vperm.xlu0 %1033, %v162
    %v1035 = vpop.permute.xlu0 %1034
    %1038 = vset.pattern.permute.xlu0 0
    %1039 = vperm.xlu0 %1038, %v163
    %v1040 = vpop.permute.xlu0 %1039
    %1043 = vset.pattern.permute.xlu0 0
    %1044 = vperm.xlu0 %1043, %v164
    %v1045 = vpop.permute.xlu0 %1044
    %v1047 = vadd.f32 %v1023, %v1030
    %v1048 = vadd.f32 %v1024, %v1035
    %v1049 = vadd.f32 %v1025, %v1040
    %v1050 = vadd.f32 %v1026, %v1045
    %v1051 = vpack.c.bf16 %v1048, %v1047
    %v1052 = vpack.c.bf16 %v1050, %v1049
    %1054 = vset.pattern.permute.xlu0 0
    %1055 = vperm.xlu0 %1054, %v165
    %v1056 = vpop.permute.xlu0 %1055
    %1059 = vset.pattern.permute.xlu0 0
    %1060 = vperm.xlu0 %1059, %v166
    %v1061 = vpop.permute.xlu0 %1060
    %1064 = vset.pattern.permute.xlu0 0
    %1065 = vperm.xlu0 %1064, %v167
    %v1066 = vpop.permute.xlu0 %1065
    %1069 = vset.pattern.permute.xlu0 0
    %1070 = vperm.xlu0 %1069, %v168
    %v1071 = vpop.permute.xlu0 %1070
    %1074 = vset.pattern.permute.xlu0 0
    %1075 = vperm.xlu0 %1074, %v169
    %v1076 = vpop.permute.xlu0 %1075
    %1079 = vset.pattern.permute.xlu0 0
    %1080 = vperm.xlu0 %1079, %v170
    %v1081 = vpop.permute.xlu0 %1080
    %1084 = vset.pattern.permute.xlu0 0
    %1085 = vperm.xlu0 %1084, %v171
    %v1086 = vpop.permute.xlu0 %1085
    %1089 = vset.pattern.permute.xlu0 0
    %1090 = vperm.xlu0 %1089, %v172
    %v1091 = vpop.permute.xlu0 %1090
    %1094 = vset.pattern.permute.xlu0 0
    %1095 = vperm.xlu0 %1094, %v173
    %v1096 = vpop.permute.xlu0 %1095
    %1099 = vset.pattern.permute.xlu0 0
    %1100 = vperm.xlu0 %1099, %v174
    %v1101 = vpop.permute.xlu0 %1100
    %1104 = vset.pattern.permute.xlu0 0
    %1105 = vperm.xlu0 %1104, %v175
    %v1106 = vpop.permute.xlu0 %1105
    %1109 = vset.pattern.permute.xlu0 0
    %1110 = vperm.xlu0 %1109, %v176
    %v1111 = vpop.permute.xlu0 %1110
    %1114 = vset.pattern.permute.xlu0 0
    %1115 = vperm.xlu0 %1114, %v177
    %v1116 = vpop.permute.xlu0 %1115
    %1119 = vset.pattern.permute.xlu0 0
    %1120 = vperm.xlu0 %1119, %v178
    %v1121 = vpop.permute.xlu0 %1120
    %1124 = vset.pattern.permute.xlu0 0
    %1125 = vperm.xlu0 %1124, %v179
    %v1126 = vpop.permute.xlu0 %1125
    %1129 = vset.pattern.permute.xlu0 0
    %1130 = vperm.xlu0 %1129, %v180
    %v1131 = vpop.permute.xlu0 %1130
    %v1149 = vunpack.c.l.b16 %v117
    %v1150 = vunpack.c.l.b16 %v118
    %v1151 = vunpack.c.l.b16 %v119
    %v1152 = vunpack.c.l.b16 %v120
    %v1153 = vunpack.c.l.b16 %v121
    %v1154 = vunpack.c.l.b16 %v122
    %v1155 = vunpack.c.l.b16 %v123
    %v1156 = vunpack.c.l.b16 %v124
    %v1157 = vunpack.c.l.b16 %v125
    %v1158 = vunpack.c.l.b16 %v126
    %v1159 = vunpack.c.l.b16 %v127
    %v1160 = vunpack.c.l.b16 %v128
    %v1161 = vunpack.c.l.b16 %v129
    %v1162 = vunpack.c.l.b16 %v130
    %v1163 = vunpack.c.l.b16 %v131
    %v1164 = vunpack.c.l.b16 %v132
    %v1165 = vpack.c.b16 %v1150, %v1149
    %v1166 = vpack.c.b16 %v1152, %v1151
    %v1167 = vpack.c.b16 %v1154, %v1153
    %v1168 = vpack.c.b16 %v1156, %v1155
    %v1169 = vpack.c.b16 %v1158, %v1157
    %v1170 = vpack.c.b16 %v1160, %v1159
    %v1171 = vpack.c.b16 %v1162, %v1161
    %v1172 = vpack.c.b16 %v1164, %v1163
    %v1174 = vsel %vm388, %v1165, 0
    %v1177 = vsel %vm388, %v1166, 0
    %v1180 = vsel %vm388, %v1167, 0
    %v1183 = vsel %vm388, %v1168, 0
    %v1186 = vsel %vm388, %v1169, 0
    %v1189 = vsel %vm388, %v1170, 0
    %v1192 = vsel %vm388, %v1171, 0
    %v1195 = vsel %vm388, %v1172, 0
    %1197 = vmatpush.bf16.msra.mxu0 0
    %1198 = vmatpush.bf16.msra.mxu0 0
    %1199 = vmatpush.bf16.msra.mxu0 0
    %1200 = vmatpush.bf16.msra.mxu0 0
    %1201 = vmatpush.bf16.msra.mxu0 0
    %1202 = vmatpush.bf16.msra.mxu0 0
    %1203 = vmatpush.bf16.msra.mxu0 %v1052
    %1204 = vmatpush.bf16.msra.mxu0 %v1051
    %1205 = vmatmul.bf16.gmra.mxu0 %v1174
    %v1206 = vpop.f32.mrf.mxu0
    %v1207 = vadd.f32 %v1056, %v1206
    %v1208 = vpop.f32.mrf.mxu0
    %v1209 = vadd.f32 %v1061, %v1208
    %1210 = vmatmul.bf16.gmra.mxu0 %v1177
    %v1211 = vpop.f32.mrf.mxu0
    %v1212 = vadd.f32 %v1066, %v1211
    %v1213 = vpop.f32.mrf.mxu0
    %v1214 = vadd.f32 %v1071, %v1213
    %1215 = vmatmul.bf16.gmra.mxu0 %v1180
    %v1216 = vpop.f32.mrf.mxu0
    %v1217 = vadd.f32 %v1076, %v1216
    %v1218 = vpop.f32.mrf.mxu0
    %v1219 = vadd.f32 %v1081, %v1218
    %1220 = vmatmul.bf16.gmra.mxu0 %v1183
    %v1221 = vpop.f32.mrf.mxu0
    %v1222 = vadd.f32 %v1086, %v1221
    %v1223 = vpop.f32.mrf.mxu0
    %v1224 = vadd.f32 %v1091, %v1223
    %1225 = vmatmul.bf16.gmra.mxu0 %v1186
    %v1226 = vpop.f32.mrf.mxu0
    %v1227 = vadd.f32 %v1096, %v1226
    %v1228 = vpop.f32.mrf.mxu0
    %v1229 = vadd.f32 %v1101, %v1228
    %1230 = vmatmul.bf16.gmra.mxu0 %v1189
    %v1231 = vpop.f32.mrf.mxu0
    %v1232 = vadd.f32 %v1106, %v1231
    %v1233 = vpop.f32.mrf.mxu0
    %v1234 = vadd.f32 %v1111, %v1233
    %1235 = vmatmul.bf16.gmra.mxu0 %v1192
    %v1236 = vpop.f32.mrf.mxu0
    %v1237 = vadd.f32 %v1116, %v1236
    %v1238 = vpop.f32.mrf.mxu0
    %v1239 = vadd.f32 %v1121, %v1238
    %1240 = vmatmul.bf16.gmra.mxu0 %v1195
    %v1241 = vpop.f32.mrf.mxu0
    %v1242 = vadd.f32 %v1126, %v1241
    %v1243 = vpop.f32.mrf.mxu0
    %v1244 = vadd.f32 %v1131, %v1243
    %1245 = vdwg.mxu0
    %v1246 = vmul.f32 %v1207, 0.5
    %v1247 = vmul.f32 %v1209, 0.5
    %v1248 = vmul.f32 %v1212, 0.5
    %v1249 = vmul.f32 %v1214, 0.5
    %v1250 = vmul.f32 %v1217, 0.5
    %v1251 = vmul.f32 %v1219, 0.5
    %v1252 = vmul.f32 %v1222, 0.5
    %v1253 = vmul.f32 %v1224, 0.5
    %v1254 = vmul.f32 %v1227, 0.5
    %v1255 = vmul.f32 %v1229, 0.5
    %v1256 = vmul.f32 %v1232, 0.5
    %v1257 = vmul.f32 %v1234, 0.5
    %v1258 = vmul.f32 %v1237, 0.5
    %v1259 = vmul.f32 %v1239, 0.5
    %v1260 = vmul.f32 %v1242, 0.5
    %v1261 = vmul.f32 %v1244, 0.5
    %v1262 = vmul.f32 %v1207, 0.044715
    %v1263 = vmul.f32 %v1209, 0.044715
    %v1264 = vmul.f32 %v1212, 0.044715
    %v1265 = vmul.f32 %v1214, 0.044715
    %v1266 = vmul.f32 %v1217, 0.044715
    %v1267 = vmul.f32 %v1219, 0.044715
    %v1268 = vmul.f32 %v1222, 0.044715
    %v1269 = vmul.f32 %v1224, 0.044715
    %v1270 = vmul.f32 %v1227, 0.044715
    %v1271 = vmul.f32 %v1229, 0.044715
    %v1272 = vmul.f32 %v1232, 0.044715
    %v1273 = vmul.f32 %v1234, 0.044715
    %v1274 = vmul.f32 %v1237, 0.044715
    %v1275 = vmul.f32 %v1239, 0.044715
    %v1276 = vmul.f32 %v1242, 0.044715
    %v1277 = vmul.f32 %v1244, 0.044715
    %v1278 = vmul.f32 %v1262, %v1207
    %v1279 = vmul.f32 %v1263, %v1209
    %v1280 = vmul.f32 %v1264, %v1212
    %v1281 = vmul.f32 %v1265, %v1214
    %v1282 = vmul.f32 %v1266, %v1217
    %v1283 = vmul.f32 %v1267, %v1219
    %v1284 = vmul.f32 %v1268, %v1222
    %v1285 = vmul.f32 %v1269, %v1224
    %v1286 = vmul.f32 %v1270, %v1227
    %v1287 = vmul.f32 %v1271, %v1229
    %v1288 = vmul.f32 %v1272, %v1232
    %v1289 = vmul.f32 %v1273, %v1234
    %v1290 = vmul.f32 %v1274, %v1237
    %v1291 = vmul.f32 %v1275, %v1239
    %v1292 = vmul.f32 %v1276, %v1242
    %v1293 = vmul.f32 %v1277, %v1244
    %v1294 = vmul.f32 %v1278, %v1207
    %v1295 = vmul.f32 %v1279, %v1209
    %v1296 = vmul.f32 %v1280, %v1212
    %v1297 = vmul.f32 %v1281, %v1214
    %v1298 = vmul.f32 %v1282, %v1217
    %v1299 = vmul.f32 %v1283, %v1219
    %v1300 = vmul.f32 %v1284, %v1222
    %v1301 = vmul.f32 %v1285, %v1224
    %v1302 = vmul.f32 %v1286, %v1227
    %v1303 = vmul.f32 %v1287, %v1229
    %v1304 = vmul.f32 %v1288, %v1232
    %v1305 = vmul.f32 %v1289, %v1234
    %v1306 = vmul.f32 %v1290, %v1237
    %v1307 = vmul.f32 %v1291, %v1239
    %v1308 = vmul.f32 %v1292, %v1242
    %v1309 = vmul.f32 %v1293, %v1244
    %v1310 = vadd.f32 %v1207, %v1294
    %v1311 = vadd.f32 %v1209, %v1295
    %v1312 = vadd.f32 %v1212, %v1296
    %v1313 = vadd.f32 %v1214, %v1297
    %v1314 = vadd.f32 %v1217, %v1298
    %v1315 = vadd.f32 %v1219, %v1299
    %v1316 = vadd.f32 %v1222, %v1300
    %v1317 = vadd.f32 %v1224, %v1301
    %v1318 = vadd.f32 %v1227, %v1302
    %v1319 = vadd.f32 %v1229, %v1303
    %v1320 = vadd.f32 %v1232, %v1304
    %v1321 = vadd.f32 %v1234, %v1305
    %v1322 = vadd.f32 %v1237, %v1306
    %v1323 = vadd.f32 %v1239, %v1307
    %v1324 = vadd.f32 %v1242, %v1308
    %v1325 = vadd.f32 %v1244, %v1309
    %v1326 = vmul.f32 %v1310, 0.7978846
    %v1327 = vmul.f32 %v1311, 0.7978846
    %v1328 = vmul.f32 %v1312, 0.7978846
    %v1329 = vmul.f32 %v1313, 0.7978846
    %v1330 = vmul.f32 %v1314, 0.7978846
    %v1331 = vmul.f32 %v1315, 0.7978846
    %v1332 = vmul.f32 %v1316, 0.7978846
    %v1333 = vmul.f32 %v1317, 0.7978846
    %v1334 = vmul.f32 %v1318, 0.7978846
    %v1335 = vmul.f32 %v1319, 0.7978846
    %v1336 = vmul.f32 %v1320, 0.7978846
    %v1337 = vmul.f32 %v1321, 0.7978846
    %v1338 = vmul.f32 %v1322, 0.7978846
    %v1339 = vmul.f32 %v1323, 0.7978846
    %v1340 = vmul.f32 %v1324, 0.7978846
    %v1341 = vmul.f32 %v1325, 0.7978846
    %v1342 = vtanh.pop %v1326
    %v1343 = vtanh.pop %v1327
    %v1344 = vtanh.pop %v1328
    %v1345 = vtanh.pop %v1329
    %v1346 = vtanh.pop %v1330
    %v1347 = vtanh.pop %v1331
    %v1348 = vtanh.pop %v1332
    %v1349 = vtanh.pop %v1333
    %v1350 = vtanh.pop %v1334
    %v1351 = vtanh.pop %v1335
    %v1352 = vtanh.pop %v1336
    %v1353 = vtanh.pop %v1337
    %v1354 = vtanh.pop %v1338
    %v1355 = vtanh.pop %v1339
    %v1356 = vtanh.pop %v1340
    %v1357 = vtanh.pop %v1341
    %v1358 = vadd.f32 %v1342, 1.0
    %v1359 = vadd.f32 %v1343, 1.0
    %v1360 = vadd.f32 %v1344, 1.0
    %v1361 = vadd.f32 %v1345, 1.0
    %v1362 = vadd.f32 %v1346, 1.0
    %v1363 = vadd.f32 %v1347, 1.0
    %v1364 = vadd.f32 %v1348, 1.0
    %v1365 = vadd.f32 %v1349, 1.0
    %v1366 = vadd.f32 %v1350, 1.0
    %v1367 = vadd.f32 %v1351, 1.0
    %v1368 = vadd.f32 %v1352, 1.0
    %v1369 = vadd.f32 %v1353, 1.0
    %v1370 = vadd.f32 %v1354, 1.0
    %v1371 = vadd.f32 %v1355, 1.0
    %v1372 = vadd.f32 %v1356, 1.0
    %v1373 = vadd.f32 %v1357, 1.0
    %v1374 = vmul.f32 %v1246, %v1358
    %v1375 = vmul.f32 %v1247, %v1359
    %v1376 = vmul.f32 %v1248, %v1360
    %v1377 = vmul.f32 %v1249, %v1361
    %v1378 = vmul.f32 %v1250, %v1362
    %v1379 = vmul.f32 %v1251, %v1363
    %v1380 = vmul.f32 %v1252, %v1364
    %v1381 = vmul.f32 %v1253, %v1365
    %v1382 = vmul.f32 %v1254, %v1366
    %v1383 = vmul.f32 %v1255, %v1367
    %v1384 = vmul.f32 %v1256, %v1368
    %v1385 = vmul.f32 %v1257, %v1369
    %v1386 = vmul.f32 %v1258, %v1370
    %v1387 = vmul.f32 %v1259, %v1371
    %v1388 = vmul.f32 %v1260, %v1372
    %v1389 = vmul.f32 %v1261, %v1373
    %v1390 = vpack.c.bf16 %v1375, %v1374
    %v1391 = vpack.c.bf16 %v1377, %v1376
    %v1392 = vpack.c.bf16 %v1379, %v1378
    %v1393 = vpack.c.bf16 %v1381, %v1380
    %v1394 = vpack.c.bf16 %v1383, %v1382
    %v1395 = vpack.c.bf16 %v1385, %v1384
    %v1396 = vpack.c.bf16 %v1387, %v1386
    %v1397 = vpack.c.bf16 %v1389, %v1388
    %1399 = vset.pattern.permute.xlu0 0
    %1400 = vperm.xlu0 %1399, %v181
    %v1401 = vpop.permute.xlu0 %1400
    %1404 = vset.pattern.permute.xlu0 0
    %1405 = vperm.xlu0 %1404, %v182
    %v1406 = vpop.permute.xlu0 %1405
    %1409 = vset.pattern.permute.xlu0 0
    %1410 = vperm.xlu0 %1409, %v183
    %v1411 = vpop.permute.xlu0 %1410
    %1414 = vset.pattern.permute.xlu0 0
    %1415 = vperm.xlu0 %1414, %v184
    %v1416 = vpop.permute.xlu0 %1415
    %v1422 = vunpack.c.l.b16 %v185
    %v1423 = vunpack.c.l.b16 %v186
    %v1424 = vunpack.c.l.b16 %v187
    %v1425 = vunpack.c.l.b16 %v188
    %v1426 = vpack.c.b16 %v1423, %v1422
    %v1427 = vpack.c.b16 %v1425, %v1424
    %1430 = vmatpush.bf16.msra.mxu0 %v1397
    %1431 = vmatpush.bf16.msra.mxu0 %v1396
    %1432 = vmatpush.bf16.msra.mxu0 %v1395
    %1433 = vmatpush.bf16.msra.mxu0 %v1394
    %1434 = vmatpush.bf16.msra.mxu0 %v1393
    %1435 = vmatpush.bf16.msra.mxu0 %v1392
    %1436 = vmatpush.bf16.msra.mxu0 %v1391
    %1437 = vmatpush.bf16.msra.mxu0 %v1390
    %1438 = vmatmul.bf16.gmra.mxu0 %v1426
    %v1439 = vpop.f32.mrf.mxu0
    %v1440 = vadd.f32 %v1401, %v1439
    %v1441 = vpop.f32.mrf.mxu0
    %v1442 = vadd.f32 %v1406, %v1441
    %1443 = vmatmul.bf16.gmra.mxu0 %v1427
    %v1444 = vpop.f32.mrf.mxu0
    %v1445 = vadd.f32 %v1411, %v1444
    %v1446 = vpop.f32.mrf.mxu0
    %v1447 = vadd.f32 %v1416, %v1446
    %1448 = vdwg.mxu0
    %v1449 = vadd.f32 %v948, %v1440
    %v1450 = vadd.f32 %v949, %v1442
    %v1451 = vadd.f32 %v950, %v1445
    %v1452 = vadd.f32 %v951, %v1447
    %s1453 = scalar_lea.vmem %s1, 128
    %v1454 = vld [vmem:[%s1453] sm:$0xf]
    %v1455 = vld [vmem:[%s1453 + $0x4] sm:$0xf]
    %v1456 = vld [vmem:[%s1453 + $0x8] sm:$0xf]
    %v1457 = vld [vmem:[%s1453 + $0xc] sm:$0xf]
    %v1458 = vld [vmem:[%s1453 + $0x10] sm:$0xf]
    %v1459 = vld [vmem:[%s1453 + $0x14] sm:$0xf]
    %v1460 = vld [vmem:[%s1453 + $0x18] sm:$0xf]
    %v1461 = vld [vmem:[%s1453 + $0x1c] sm:$0xf]
    %v1462 = vld [vmem:[%s1453 + $0x20] sm:$0xf]
    %v1463 = vld [vmem:[%s1453 + $0x24] sm:$0xf]
    %v1464 = vld [vmem:[%s1453 + $0x28] sm:$0xf]
    %v1465 = vld [vmem:[%s1453 + $0x2c] sm:$0xf]
    %v1466 = vld [vmem:[%s1453 + $0x30] sm:$0xf]
    %v1467 = vld [vmem:[%s1453 + $0x34] sm:$0xf]
    %v1468 = vld [vmem:[%s1453 + $0x38] sm:$0xf]
    %v1469 = vld [vmem:[%s1453 + $0x3c] sm:$0xf]
    %v1470 = vld [vmem:[%s1453 + $0x40] sm:$0xf]
    %v1471 = vld [vmem:[%s1453 + $0x44] sm:$0xf]
    %v1472 = vld [vmem:[%s1453 + $0x48] sm:$0xf]
    %v1473 = vld [vmem:[%s1453 + $0x4c] sm:$0xf]
    %v1474 = vld [vmem:[%s1453 + $0x50] sm:$0xf]
    %v1475 = vld [vmem:[%s1453 + $0x54] sm:$0xf]
    %v1476 = vld [vmem:[%s1453 + $0x58] sm:$0xf]
    %v1477 = vld [vmem:[%s1453 + $0x5c] sm:$0xf]
    %v1478 = vld [vmem:[%s1453 + $0x60] sm:$0xf]
    %v1479 = vld [vmem:[%s1453 + $0x64] sm:$0xf]
    %v1480 = vld [vmem:[%s1453 + $0x68] sm:$0xf]
    %v1481 = vld [vmem:[%s1453 + $0x6c] sm:$0xf]
    %v1482 = vld [vmem:[%s1453 + $0x70] sm:$0xf]
    %v1483 = vld [vmem:[%s1453 + $0x74] sm:$0xf]
    %v1484 = vld [vmem:[%s1453 + $0x78] sm:$0xf]
    %v1485 = vld [vmem:[%s1453 + $0x7c] sm:$0xf]
    %s1486 = scalar_lea.vmem %s3, 416
    %v1487 = vld [vmem:[%s1486] sm:$0xff]
    %v1488 = vld [vmem:[%s1486 + $0x8] sm:$0xff]
    %v1489 = vld [vmem:[%s1486 + $0x10] sm:$0xff]
    %v1490 = vld [vmem:[%s1486 + $0x18] sm:$0xff]
    %v1491 = vld [vmem:[%s1486 + $0x20] sm:$0xff]
    %v1492 = vld [vmem:[%s1486 + $0x28] sm:$0xff]
    %v1493 = vld [vmem:[%s1486 + $0x30] sm:$0xff]
    %v1494 = vld [vmem:[%s1486 + $0x38] sm:$0xff]
    %v1495 = vld [vmem:[%s1486 + $0x40] sm:$0xff]
    %v1496 = vld [vmem:[%s1486 + $0x48] sm:$0xff]
    %v1497 = vld [vmem:[%s1486 + $0x50] sm:$0xff]
    %v1498 = vld [vmem:[%s1486 + $0x58] sm:$0xff]
    %v1499 = vld [vmem:[%s1486 + $0x60] sm:$0xff]
    %v1500 = vld [vmem:[%s1486 + $0x68] sm:$0xff]
    %v1501 = vld [vmem:[%s1486 + $0x70] sm:$0xff]
    %v1502 = vld [vmem:[%s1486 + $0x78] sm:$0xff]
    %v1503 = vld [vmem:[%s1486 + $0x80] sm:$0xff]
    %v1504 = vld [vmem:[%s1486 + $0x88] sm:$0xff]
    %v1505 = vld [vmem:[%s1486 + $0x90] sm:$0xff]
    %v1506 = vld [vmem:[%s1486 + $0x98] sm:$0xff]
    %v1507 = vld [vmem:[%s1486 + $0xa0] sm:$0xff]
    %v1508 = vld [vmem:[%s1486 + $0xa8] sm:$0xff]
    %v1509 = vld [vmem:[%s1486 + $0xb0] sm:$0xff]
    %v1510 = vld [vmem:[%s1486 + $0xb8] sm:$0xff]
    %v1511 = vld [vmem:[%s1486 + $0xc0] sm:$0xff]
    %v1512 = vld [vmem:[%s1486 + $0xc8] sm:$0xff]
    %v1513 = vld [vmem:[%s1486 + $0xd0] sm:$0xff]
    %v1514 = vld [vmem:[%s1486 + $0xd8] sm:$0xff]
    %v1515 = vld [vmem:[%s1486 + $0xe0] sm:$0xff]
    %v1516 = vld [vmem:[%s1486 + $0xe8] sm:$0xff]
    %v1517 = vld [vmem:[%s1486 + $0xf0] sm:$0xff]
    %v1518 = vld [vmem:[%s1486 + $0xf8] sm:$0xff]
    %v1519 = vld [vmem:[%s1486 + $0x100] sm:$0xff]
    %v1520 = vld [vmem:[%s1486 + $0x108] sm:$0xff]
    %v1521 = vld [vmem:[%s1486 + $0x110] sm:$0xff]
    %v1522 = vld [vmem:[%s1486 + $0x118] sm:$0xff]
    %v1523 = vld [vmem:[%s1486 + $0x120] sm:$0xff]
    %v1524 = vld [vmem:[%s1486 + $0x128] sm:$0xff]
    %v1525 = vld [vmem:[%s1486 + $0x130] sm:$0xff]
    %v1526 = vld [vmem:[%s1486 + $0x138] sm:$0xff]
    %v1527 = vld [vmem:[%s1486 + $0x140] sm:$0xff]
    %v1528 = vld [vmem:[%s1486 + $0x148] sm:$0xff]
    %v1529 = vld [vmem:[%s1486 + $0x150] sm:$0xff]
    %v1530 = vld [vmem:[%s1486 + $0x158] sm:$0xff]
    %v1531 = vld [vmem:[%s1486 + $0x160] sm:$0xff]
    %v1532 = vld [vmem:[%s1486 + $0x168] sm:$0xff]
    %v1533 = vld [vmem:[%s1486 + $0x170] sm:$0xff]
    %v1534 = vld [vmem:[%s1486 + $0x178] sm:$0xff]
    %v1535 = vld [vmem:[%s1486 + $0x180] sm:$0xff]
    %v1536 = vld [vmem:[%s1486 + $0x188] sm:$0xff]
    %v1537 = vld [vmem:[%s1486 + $0x190] sm:$0xff]
    %v1538 = vld [vmem:[%s1486 + $0x198] sm:$0xff]
    %s1539 = scalar_lea.vmem %s2, 16
    %v1540 = vld [vmem:[%s1539] sm:$0xf]
    %v1541 = vld [vmem:[%s1539 + $0x4] sm:$0xf]
    %v1542 = vld [vmem:[%s1539 + $0x8] sm:$0xf]
    %v1543 = vld [vmem:[%s1539 + $0xc] sm:$0xf]
    %v1544 = vsel %vm189, %v1449, 0.0
    %v1545 = vsel %vm189, %v1450, 0.0
    %v1546 = vadd.f32 %v1544, %v1545
    %v1547 = vsel %vm189, %v1451, 0.0
    %v1548 = vadd.f32 %v1546, %v1547
    %v1549 = vsel %vm189, %v1452, 0.0
    %v1550 = vadd.f32 %v1548, %v1549
    %v1551 = vrot.slane %v1550, 4
    %v1552 = vadd.f32 %v1550, %v1551
    %v1553 = vrot.slane %v1552, 2
    %v1554 = vadd.f32 %v1552, %v1553
    %v1555 = vrot.slane %v1554, 1
    %v1556 = vadd.f32 %v1554, %v1555
    %v1557 = vmul.f32 %v1556, %v209
    %v1558 = vsub.f32 %v1449, %v1557
    %v1559 = vsub.f32 %v1450, %v1557
    %v1560 = vsub.f32 %v1451, %v1557
    %v1561 = vsub.f32 %v1452, %v1557
    %v1562 = vmul.f32 %v1558, %v1558
    %v1563 = vmul.f32 %v1559, %v1559
    %v1564 = vmul.f32 %v1560, %v1560
    %v1565 = vmul.f32 %v1561, %v1561
    %v1566 = vsel %vm189, %v1562, 0.0
    %v1567 = vsel %vm189, %v1563, 0.0
    %v1568 = vadd.f32 %v1566, %v1567
    %v1569 = vsel %vm189, %v1564, 0.0
    %v1570 = vadd.f32 %v1568, %v1569
    %v1571 = vsel %vm189, %v1565, 0.0
    %v1572 = vadd.f32 %v1570, %v1571
    %v1573 = vrot.slane %v1572, 4
    %v1574 = vadd.f32 %v1572, %v1573
    %v1575 = vrot.slane %v1574, 2
    %v1576 = vadd.f32 %v1574, %v1575
    %v1577 = vrot.slane %v1576, 1
    %v1578 = vadd.f32 %v1576, %v1577
    %v1579 = vmul.f32 %v1578, %v209
    %v1580 = vadd.f32 %v1579, 1e-05
    %v1581 = vrsqrt.pop %v1580
    %v1582 = vmul.f32 %v1581, %v1580
    %v1583 = vmul.f32 %v1582, %v1581
    %v1584 = vmul.f32 0.5, %v1583
    %v1585 = vsub.f32 1.5, %v1584
    %v1586 = vmul.f32 %v1581, %v1585
    %vm1587 = vweird.f32 %v1580
    %vm1588 = vweird.f32 %v1581
    %vm1589 = vmor %vm1587, %vm1588
    %v1590 = vsel %vm1589, %v1581, %v1586
    %v1591 = vmul.f32 %v1558, %v1590
    %v1592 = vmul.f32 %v1559, %v1590
    %v1593 = vmul.f32 %v1560, %v1590
    %v1594 = vmul.f32 %v1561, %v1590
    %1596 = vset.pattern.permute.xlu0 0
    %1597 = vperm.xlu0 %1596, %v1487
    %v1598 = vpop.permute.xlu0 %1597
    %1601 = vset.pattern.permute.xlu0 0
    %1602 = vperm.xlu0 %1601, %v1488
    %v1603 = vpop.permute.xlu0 %1602
    %1606 = vset.pattern.permute.xlu0 0
    %1607 = vperm.xlu0 %1606, %v1489
    %v1608 = vpop.permute.xlu0 %1607
    %1611 = vset.pattern.permute.xlu0 0
    %1612 = vperm.xlu0 %1611, %v1490
    %v1613 = vpop.permute.xlu0 %1612
    %v1615 = vmul.f32 %v1591, %v1598
    %v1616 = vmul.f32 %v1592, %v1603
    %v1617 = vmul.f32 %v1593, %v1608
    %v1618 = vmul.f32 %v1594, %v1613
    %1620 = vset.pattern.permute.xlu0 0
    %1621 = vperm.xlu0 %1620, %v1491
    %v1622 = vpop.permute.xlu0 %1621
    %1625 = vset.pattern.permute.xlu0 0
    %1626 = vperm.xlu0 %1625, %v1492
    %v1627 = vpop.permute.xlu0 %1626
    %1630 = vset.pattern.permute.xlu0 0
    %1631 = vperm.xlu0 %1630, %v1493
    %v1632 = vpop.permute.xlu0 %1631
    %1635 = vset.pattern.permute.xlu0 0
    %1636 = vperm.xlu0 %1635, %v1494
    %v1637 = vpop.permute.xlu0 %1636
    %v1639 = vadd.f32 %v1615, %v1622
    %v1640 = vadd.f32 %v1616, %v1627
    %v1641 = vadd.f32 %v1617, %v1632
    %v1642 = vadd.f32 %v1618, %v1637
    %v1643 = vpack.c.bf16 %v1640, %v1639
    %v1644 = vpack.c.bf16 %v1642, %v1641
    %1646 = vset.pattern.permute.xlu0 0
    %1647 = vperm.xlu0 %1646, %v1495
    %v1648 = vpop.permute.xlu0 %1647
    %1651 = vset.pattern.permute.xlu0 0
    %1652 = vperm.xlu0 %1651, %v1496
    %v1653 = vpop.permute.xlu0 %1652
    %1656 = vset.pattern.permute.xlu0 0
    %1657 = vperm.xlu0 %1656, %v1497
    %v1658 = vpop.permute.xlu0 %1657
    %1661 = vset.pattern.permute.xlu0 0
    %1662 = vperm.xlu0 %1661, %v1498
    %v1663 = vpop.permute.xlu0 %1662
    %1666 = vset.pattern.permute.xlu0 0
    %1667 = vperm.xlu0 %1666, %v1499
    %v1668 = vpop.permute.xlu0 %1667
    %1671 = vset.pattern.permute.xlu0 0
    %1672 = vperm.xlu0 %1671, %v1500
    %v1673 = vpop.permute.xlu0 %1672
    %1676 = vset.pattern.permute.xlu0 0
    %1677 = vperm.xlu0 %1676, %v1501
    %v1678 = vpop.permute.xlu0 %1677
    %1681 = vset.pattern.permute.xlu0 0
    %1682 = vperm.xlu0 %1681, %v1502
    %v1683 = vpop.permute.xlu0 %1682
    %1686 = vset.pattern.permute.xlu0 0
    %1687 = vperm.xlu0 %1686, %v1503
    %v1688 = vpop.permute.xlu0 %1687
    %1691 = vset.pattern.permute.xlu0 0
    %1692 = vperm.xlu0 %1691, %v1504
    %v1693 = vpop.permute.xlu0 %1692
    %1696 = vset.pattern.permute.xlu0 0
    %1697 = vperm.xlu0 %1696, %v1505
    %v1698 = vpop.permute.xlu0 %1697
    %1701 = vset.pattern.permute.xlu0 0
    %1702 = vperm.xlu0 %1701, %v1506
    %v1703 = vpop.permute.xlu0 %1702
    %v1717 = vunpack.c.l.b16 %v1454
    %v1718 = vunpack.c.l.b16 %v1455
    %v1719 = vunpack.c.l.b16 %v1456
    %v1720 = vunpack.c.l.b16 %v1457
    %v1721 = vunpack.c.l.b16 %v1458
    %v1722 = vunpack.c.l.b16 %v1459
    %v1723 = vunpack.c.l.b16 %v1460
    %v1724 = vunpack.c.l.b16 %v1461
    %v1725 = vunpack.c.l.b16 %v1462
    %v1726 = vunpack.c.l.b16 %v1463
    %v1727 = vunpack.c.l.b16 %v1464
    %v1728 = vunpack.c.l.b16 %v1465
    %v1729 = vpack.c.b16 %v1718, %v1717
    %v1730 = vpack.c.b16 %v1720, %v1719
    %v1731 = vpack.c.b16 %v1722, %v1721
    %v1732 = vpack.c.b16 %v1724, %v1723
    %v1733 = vpack.c.b16 %v1726, %v1725
    %v1734 = vpack.c.b16 %v1728, %v1727
    %v1736 = vsel %vm388, %v1729, 0
    %v1739 = vsel %vm388, %v1730, 0
    %v1742 = vsel %vm388, %v1731, 0
    %v1745 = vsel %vm388, %v1732, 0
    %v1748 = vsel %vm388, %v1733, 0
    %v1751 = vsel %vm388, %v1734, 0
    %1753 = vmatpush.bf16.msra.mxu0 0
    %1754 = vmatpush.bf16.msra.mxu0 0
    %1755 = vmatpush.bf16.msra.mxu0 0
    %1756 = vmatpush.bf16.msra.mxu0 0
    %1757 = vmatpush.bf16.msra.mxu0 0
    %1758 = vmatpush.bf16.msra.mxu0 0
    %1759 = vmatpush.bf16.msra.mxu0 %v1644
    %1760 = vmatpush.bf16.msra.mxu0 %v1643
    %1761 = vmatmul.bf16.gmra.mxu0 %v1736
    %v1762 = vpop.f32.mrf.mxu0
    %v1763 = vadd.f32 %v1648, %v1762
    %v1764 = vpop.f32.mrf.mxu0
    %v1765 = vadd.f32 %v1653, %v1764
    %1766 = vmatmul.bf16.gmra.mxu0 %v1739
    %v1767 = vpop.f32.mrf.mxu0
    %v1768 = vadd.f32 %v1658, %v1767
    %v1769 = vpop.f32.mrf.mxu0
    %v1770 = vadd.f32 %v1663, %v1769
    %1771 = vmatmul.bf16.gmra.mxu0 %v1742
    %v1772 = vpop.f32.mrf.mxu0
    %v1773 = vadd.f32 %v1668, %v1772
    %v1774 = vpop.f32.mrf.mxu0
    %v1775 = vadd.f32 %v1673, %v1774
    %1776 = vmatmul.bf16.gmra.mxu0 %v1745
    %v1777 = vpop.f32.mrf.mxu0
    %v1778 = vadd.f32 %v1678, %v1777
    %v1779 = vpop.f32.mrf.mxu0
    %v1780 = vadd.f32 %v1683, %v1779
    %1781 = vmatmul.bf16.gmra.mxu0 %v1748
    %v1782 = vpop.f32.mrf.mxu0
    %v1783 = vadd.f32 %v1688, %v1782
    %v1784 = vpop.f32.mrf.mxu0
    %v1785 = vadd.f32 %v1693, %v1784
    %1786 = vmatmul.bf16.gmra.mxu0 %v1751
    %v1787 = vpop.f32.mrf.mxu0
    %v1788 = vadd.f32 %v1698, %v1787
    %v1789 = vpop.f32.mrf.mxu0
    %v1790 = vadd.f32 %v1703, %v1789
    %1791 = vdwg.mxu0
    %1792 = vxpose.xlu0.b32.start [1/16] %v1763, 128
    %1793 = vxpose.xlu0.b32.cont [2/16] 0.0, 128
    %1794 = vxpose.xlu0.b32.cont [3/16] 0.0, 128
    %1795 = vxpose.xlu0.b32.cont [4/16] 0.0, 128
    %1796 = vxpose.xlu0.b32.cont [5/16] 0.0, 128
    %1797 = vxpose.xlu0.b32.cont [6/16] 0.0, 128
    %1798 = vxpose.xlu0.b32.cont [7/16] 0.0, 128
    %1799 = vxpose.xlu0.b32.cont [8/16] 0.0, 128
    %1800 = vxpose.xlu0.b32.cont [9/16] 0.0, 128
    %1801 = vxpose.xlu0.b32.cont [10/16] 0.0, 128
    %1802 = vxpose.xlu0.b32.cont [11/16] 0.0, 128
    %1803 = vxpose.xlu0.b32.cont [12/16] 0.0, 128
    %1804 = vxpose.xlu0.b32.cont [13/16] 0.0, 128
    %1805 = vxpose.xlu0.b32.cont [14/16] 0.0, 128
    %1806 = vxpose.xlu0.b32.cont [15/16] 0.0, 128
    %1807 = vxpose.xlu0.b32.end [16/16] 0.0, 128
    %v1808 = vpop.trf.xlu0
    %v1809 = vpop.trf.xlu0
    %v1810 = vpop.trf.xlu0
    %v1811 = vpop.trf.xlu0
    %v1812 = vpop.trf.xlu0
    %v1813 = vpop.trf.xlu0
    %v1814 = vpop.trf.xlu0
    %v1815 = vpop.trf.xlu0
    %v1816 = vpop.trf.xlu0
    %v1817 = vpop.trf.xlu0
    %v1818 = vpop.trf.xlu0
    %v1819 = vpop.trf.xlu0
    %v1820 = vpop.trf.xlu0
    %v1821 = vpop.trf.xlu0
    %v1822 = vpop.trf.xlu0
    %v1823 = vpop.trf.xlu0
    %1824 = vxpose.xlu0.b32.start [1/16] %v1765, 128
    %1825 = vxpose.xlu0.b32.cont [2/16] 0.0, 128
    %1826 = vxpose.xlu0.b32.cont [3/16] 0.0, 128
    %1827 = vxpose.xlu0.b32.cont [4/16] 0.0, 128
    %1828 = vxpose.xlu0.b32.cont [5/16] 0.0, 128
    %1829 = vxpose.xlu0.b32.cont [6/16] 0.0, 128
    %1830 = vxpose.xlu0.b32.cont [7/16] 0.0, 128
    %1831 = vxpose.xlu0.b32.cont [8/16] 0.0, 128
    %1832 = vxpose.xlu0.b32.cont [9/16] 0.0, 128
    %1833 = vxpose.xlu0.b32.cont [10/16] 0.0, 128
    %1834 = vxpose.xlu0.b32.cont [11/16] 0.0, 128
    %1835 = vxpose.xlu0.b32.cont [12/16] 0.0, 128
    %1836 = vxpose.xlu0.b32.cont [13/16] 0.0, 128
    %1837 = vxpose.xlu0.b32.cont [14/16] 0.0, 128
    %1838 = vxpose.xlu0.b32.cont [15/16] 0.0, 128
    %1839 = vxpose.xlu0.b32.end [16/16] 0.0, 128
    %v1840 = vpop.trf.xlu0
    %v1841 = vpop.trf.xlu0
    %v1842 = vpop.trf.xlu0
    %v1843 = vpop.trf.xlu0
    %v1844 = vpop.trf.xlu0
    %v1845 = vpop.trf.xlu0
    %v1846 = vpop.trf.xlu0
    %v1847 = vpop.trf.xlu0
    %v1848 = vpop.trf.xlu0
    %v1849 = vpop.trf.xlu0
    %v1850 = vpop.trf.xlu0
    %v1851 = vpop.trf.xlu0
    %v1852 = vpop.trf.xlu0
    %v1853 = vpop.trf.xlu0
    %v1854 = vpop.trf.xlu0
    %v1855 = vpop.trf.xlu0
    %1856 = vxpose.xlu0.b32.start [1/16] %v1768, 128
    %1857 = vxpose.xlu0.b32.cont [2/16] 0.0, 128
    %1858 = vxpose.xlu0.b32.cont [3/16] 0.0, 128
    %1859 = vxpose.xlu0.b32.cont [4/16] 0.0, 128
    %1860 = vxpose.xlu0.b32.cont [5/16] 0.0, 128
    %1861 = vxpose.xlu0.b32.cont [6/16] 0.0, 128
    %1862 = vxpose.xlu0.b32.cont [7/16] 0.0, 128
    %1863 = vxpose.xlu0.b32.cont [8/16] 0.0, 128
    %1864 = vxpose.xlu0.b32.cont [9/16] 0.0, 128
    %1865 = vxpose.xlu0.b32.cont [10/16] 0.0, 128
    %1866 = vxpose.xlu0.b32.cont [11/16] 0.0, 128
    %1867 = vxpose.xlu0.b32.cont [12/16] 0.0, 128
    %1868 = vxpose.xlu0.b32.cont [13/16] 0.0, 128
    %1869 = vxpose.xlu0.b32.cont [14/16] 0.0, 128
    %1870 = vxpose.xlu0.b32.cont [15/16] 0.0, 128
    %1871 = vxpose.xlu0.b32.end [16/16] 0.0, 128
    %v1872 = vpop.trf.xlu0
    %v1873 = vpop.trf.xlu0
    %v1874 = vpop.trf.xlu0
    %v1875 = vpop.trf.xlu0
    %v1876 = vpop.trf.xlu0
    %v1877 = vpop.trf.xlu0
    %v1878 = vpop.trf.xlu0
    %v1879 = vpop.trf.xlu0
    %v1880 = vpop.trf.xlu0
    %v1881 = vpop.trf.xlu0
    %v1882 = vpop.trf.xlu0
    %v1883 = vpop.trf.xlu0
    %v1884 = vpop.trf.xlu0
    %v1885 = vpop.trf.xlu0
    %v1886 = vpop.trf.xlu0
    %v1887 = vpop.trf.xlu0
    %1888 = vxpose.xlu0.b32.start [1/16] %v1770, 128
    %1889 = vxpose.xlu0.b32.cont [2/16] 0.0, 128
    %1890 = vxpose.xlu0.b32.cont [3/16] 0.0, 128
    %1891 = vxpose.xlu0.b32.cont [4/16] 0.0, 128
    %1892 = vxpose.xlu0.b32.cont [5/16] 0.0, 128
    %1893 = vxpose.xlu0.b32.cont [6/16] 0.0, 128
    %1894 = vxpose.xlu0.b32.cont [7/16] 0.0, 128
    %1895 = vxpose.xlu0.b32.cont [8/16] 0.0, 128
    %1896 = vxpose.xlu0.b32.cont [9/16] 0.0, 128
    %1897 = vxpose.xlu0.b32.cont [10/16] 0.0, 128
    %1898 = vxpose.xlu0.b32.cont [11/16] 0.0, 128
    %1899 = vxpose.xlu0.b32.cont [12/16] 0.0, 128
    %1900 = vxpose.xlu0.b32.cont [13/16] 0.0, 128
    %1901 = vxpose.xlu0.b32.cont [14/16] 0.0, 128
    %1902 = vxpose.xlu0.b32.cont [15/16] 0.0, 128
    %1903 = vxpose.xlu0.b32.end [16/16] 0.0, 128
    %v1904 = vpop.trf.xlu0
    %v1905 = vpop.trf.xlu0
    %v1906 = vpop.trf.xlu0
    %v1907 = vpop.trf.xlu0
    %v1908 = vpop.trf.xlu0
    %v1909 = vpop.trf.xlu0
    %v1910 = vpop.trf.xlu0
    %v1911 = vpop.trf.xlu0
    %v1912 = vpop.trf.xlu0
    %v1913 = vpop.trf.xlu0
    %v1914 = vpop.trf.xlu0
    %v1915 = vpop.trf.xlu0
    %v1916 = vpop.trf.xlu0
    %v1917 = vpop.trf.xlu0
    %v1918 = vpop.trf.xlu0
    %v1919 = vpop.trf.xlu0
    %v1920 = vmul.f32 %v1808, 0.35355338
    %v1921 = vmul.f32 %v1809, 0.35355338
    %v1922 = vmul.f32 %v1840, 0.35355338
    %v1923 = vmul.f32 %v1841, 0.35355338
    %v1924 = vmul.f32 %v1872, 0.35355338
    %v1925 = vmul.f32 %v1873, 0.35355338
    %v1926 = vmul.f32 %v1904, 0.35355338
    %v1927 = vmul.f32 %v1905, 0.35355338
    %v1928 = vpack.c.bf16 %v1920, %v1920
    %v1929 = vpack.c.bf16 %v1921, %v1921
    %v1930 = vpack.c.bf16 %v1922, %v1922
    %v1931 = vpack.c.bf16 %v1923, %v1923
    %v1932 = vpack.c.bf16 %v1924, %v1924
    %v1933 = vpack.c.bf16 %v1925, %v1925
    %v1934 = vpack.c.bf16 %v1926, %v1926
    %v1935 = vpack.c.bf16 %v1927, %v1927
    %v1936 = vpack.c.bf16 %v1773, %v1773
    %v1937 = vpack.c.bf16 %v1775, %v1775
    %v1938 = vpack.c.bf16 %v1778, %v1778
    %v1939 = vpack.c.bf16 %v1780, %v1780
    %v1942 = vunpack.c.l.b16 %v1928
    %v1943 = vunpack.c.l.b16 %v1929
    %v1944 = vpack.c.b16 %v1943, %v1942
    %v1946 = vsel %vm599, %v1944, 0
    %v1949 = vsel %vm52, %v1936, 0
    %1951 = vmatpush.bf16.msra.mxu0 0
    %1952 = vmatpush.bf16.msra.mxu0 0
    %1953 = vmatpush.bf16.msra.mxu0 0
    %1954 = vmatpush.bf16.msra.mxu0 0
    %1955 = vmatpush.bf16.msra.mxu0 0
    %1956 = vmatpush.bf16.msra.mxu0 0
    %1957 = vmatpush.bf16.msra.mxu0 0
    %1958 = vmatpush.bf16.msra.mxu0 %v1949
    %1959 = vmatmul.bf16.gmra.mxu0 %v1946
    %v1960 = vpop.f32.mrf.mxu0
    %v1961 = vadd.f32 %v99, %v1960
    %v1962 = vpop.f32.mrf.mxu0
    %v1963 = vadd.f32 %v100, %v1962
    %1964 = vdwg.mxu0
    %v1967 = vunpack.c.l.b16 %v1930
    %v1968 = vunpack.c.l.b16 %v1931
    %v1969 = vpack.c.b16 %v1968, %v1967
    %v1971 = vsel %vm599, %v1969, 0
    %v1974 = vsel %vm52, %v1937, 0
    %1976 = vmatpush.bf16.msra.mxu0 0
    %1977 = vmatpush.bf16.msra.mxu0 0
    %1978 = vmatpush.bf16.msra.mxu0 0
    %1979 = vmatpush.bf16.msra.mxu0 0
    %1980 = vmatpush.bf16.msra.mxu0 0
    %1981 = vmatpush.bf16.msra.mxu0 0
    %1982 = vmatpush.bf16.msra.mxu0 0
    %1983 = vmatpush.bf16.msra.mxu0 %v1974
    %1984 = vmatmul.bf16.gmra.mxu0 %v1971
    %v1985 = vpop.f32.mrf.mxu0
    %v1986 = vadd.f32 %v99, %v1985
    %v1987 = vpop.f32.mrf.mxu0
    %v1988 = vadd.f32 %v100, %v1987
    %1989 = vdwg.mxu0
    %v1992 = vunpack.c.l.b16 %v1932
    %v1993 = vunpack.c.l.b16 %v1933
    %v1994 = vpack.c.b16 %v1993, %v1992
    %v1996 = vsel %vm599, %v1994, 0
    %v1999 = vsel %vm52, %v1938, 0
    %2001 = vmatpush.bf16.msra.mxu0 0
    %2002 = vmatpush.bf16.msra.mxu0 0
    %2003 = vmatpush.bf16.msra.mxu0 0
    %2004 = vmatpush.bf16.msra.mxu0 0
    %2005 = vmatpush.bf16.msra.mxu0 0
    %2006 = vmatpush.bf16.msra.mxu0 0
    %2007 = vmatpush.bf16.msra.mxu0 0
    %2008 = vmatpush.bf16.msra.mxu0 %v1999
    %2009 = vmatmul.bf16.gmra.mxu0 %v1996
    %v2010 = vpop.f32.mrf.mxu0
    %v2011 = vadd.f32 %v99, %v2010
    %v2012 = vpop.f32.mrf.mxu0
    %v2013 = vadd.f32 %v100, %v2012
    %2014 = vdwg.mxu0
    %v2017 = vunpack.c.l.b16 %v1934
    %v2018 = vunpack.c.l.b16 %v1935
    %v2019 = vpack.c.b16 %v2018, %v2017
    %v2021 = vsel %vm599, %v2019, 0
    %v2024 = vsel %vm52, %v1939, 0
    %2026 = vmatpush.bf16.msra.mxu0 0
    %2027 = vmatpush.bf16.msra.mxu0 0
    %2028 = vmatpush.bf16.msra.mxu0 0
    %2029 = vmatpush.bf16.msra.mxu0 0
    %2030 = vmatpush.bf16.msra.mxu0 0
    %2031 = vmatpush.bf16.msra.mxu0 0
    %2032 = vmatpush.bf16.msra.mxu0 0
    %2033 = vmatpush.bf16.msra.mxu0 %v2024
    %2034 = vmatmul.bf16.gmra.mxu0 %v2021
    %v2035 = vpop.f32.mrf.mxu0
    %v2036 = vadd.f32 %v99, %v2035
    %v2037 = vpop.f32.mrf.mxu0
    %v2038 = vadd.f32 %v100, %v2037
    %2039 = vdwg.mxu0
    %v2040 = vsel %vm189, %v1961, -inf
    %2041 = vmax.xlane.f32.xlu0 %v2040
    %v2042 = vpop.xlane.xlu0 %2041
    %v2043 = vsel %vm189, %v1963, -inf
    %2044 = vmax.xlane.f32.xlu0 %v2043
    %v2045 = vpop.xlane.xlu0 %2044
    %v2046 = vsel %vm189, %v1986, -inf
    %2047 = vmax.xlane.f32.xlu0 %v2046
    %v2048 = vpop.xlane.xlu0 %2047
    %v2049 = vsel %vm189, %v1988, -inf
    %2050 = vmax.xlane.f32.xlu0 %v2049
    %v2051 = vpop.xlane.xlu0 %2050
    %v2052 = vsel %vm189, %v2011, -inf
    %2053 = vmax.xlane.f32.xlu0 %v2052
    %v2054 = vpop.xlane.xlu0 %2053
    %v2055 = vsel %vm189, %v2013, -inf
    %2056 = vmax.xlane.f32.xlu0 %v2055
    %v2057 = vpop.xlane.xlu0 %2056
    %v2058 = vsel %vm189, %v2036, -inf
    %2059 = vmax.xlane.f32.xlu0 %v2058
    %v2060 = vpop.xlane.xlu0 %2059
    %v2061 = vsel %vm189, %v2038, -inf
    %2062 = vmax.xlane.f32.xlu0 %v2061
    %v2063 = vpop.xlane.xlu0 %2062
    %v2064 = vsub.f32 %v1961, %v2042
    %v2065 = vsub.f32 %v1963, %v2045
    %v2066 = vsub.f32 %v1986, %v2048
    %v2067 = vsub.f32 %v1988, %v2051
    %v2068 = vsub.f32 %v2011, %v2054
    %v2069 = vsub.f32 %v2013, %v2057
    %v2070 = vsub.f32 %v2036, %v2060
    %v2071 = vsub.f32 %v2038, %v2063
    %v2072 = vmul.f32 %v2064, 1.442695
    %v2073 = vpow.pop %v2072
    %v2074 = vmul.f32 %v2065, 1.442695
    %v2075 = vpow.pop %v2074
    %v2076 = vmul.f32 %v2066, 1.442695
    %v2077 = vpow.pop %v2076
    %v2078 = vmul.f32 %v2067, 1.442695
    %v2079 = vpow.pop %v2078
    %v2080 = vmul.f32 %v2068, 1.442695
    %v2081 = vpow.pop %v2080
    %v2082 = vmul.f32 %v2069, 1.442695
    %v2083 = vpow.pop %v2082
    %v2084 = vmul.f32 %v2070, 1.442695
    %v2085 = vpow.pop %v2084
    %v2086 = vmul.f32 %v2071, 1.442695
    %v2087 = vpow.pop %v2086
    %v2088 = vsel %vm189, %v2073, 0.0
    %2089 = vadd.xlane.f32.xlu0 %v2088
    %v2090 = vpop.xlane.xlu0 %2089
    %v2091 = vsel %vm189, %v2075, 0.0
    %2092 = vadd.xlane.f32.xlu0 %v2091
    %v2093 = vpop.xlane.xlu0 %2092
    %v2094 = vsel %vm189, %v2077, 0.0
    %2095 = vadd.xlane.f32.xlu0 %v2094
    %v2096 = vpop.xlane.xlu0 %2095
    %v2097 = vsel %vm189, %v2079, 0.0
    %2098 = vadd.xlane.f32.xlu0 %v2097
    %v2099 = vpop.xlane.xlu0 %2098
    %v2100 = vsel %vm189, %v2081, 0.0
    %2101 = vadd.xlane.f32.xlu0 %v2100
    %v2102 = vpop.xlane.xlu0 %2101
    %v2103 = vsel %vm189, %v2083, 0.0
    %2104 = vadd.xlane.f32.xlu0 %v2103
    %v2105 = vpop.xlane.xlu0 %2104
    %v2106 = vsel %vm189, %v2085, 0.0
    %2107 = vadd.xlane.f32.xlu0 %v2106
    %v2108 = vpop.xlane.xlu0 %2107
    %v2109 = vsel %vm189, %v2087, 0.0
    %2110 = vadd.xlane.f32.xlu0 %v2109
    %v2111 = vpop.xlane.xlu0 %2110
    %v2112 = vrcp.pop %v2090
    %v2113 = vrcp.pop %v2093
    %v2114 = vrcp.pop %v2096
    %v2115 = vrcp.pop %v2099
    %v2116 = vrcp.pop %v2102
    %v2117 = vrcp.pop %v2105
    %v2118 = vrcp.pop %v2108
    %v2119 = vrcp.pop %v2111
    %v2120 = vmul.f32 %v2073, %v2112
    %v2121 = vmul.f32 %v2075, %v2113
    %v2122 = vmul.f32 %v2077, %v2114
    %v2123 = vmul.f32 %v2079, %v2115
    %v2124 = vmul.f32 %v2081, %v2116
    %v2125 = vmul.f32 %v2083, %v2117
    %v2126 = vmul.f32 %v2085, %v2118
    %v2127 = vmul.f32 %v2087, %v2119
    %v2128 = vpack.c.bf16 %v1783, %v1783
    %v2129 = vpack.c.bf16 %v1785, %v1785
    %v2130 = vpack.c.bf16 %v1788, %v1788
    %v2131 = vpack.c.bf16 %v1790, %v1790
    %v2132 = vpack.c.bf16 %v2120, %v2120
    %v2133 = vpack.c.bf16 %v2121, %v2121
    %v2134 = vpack.c.bf16 %v2122, %v2122
    %v2135 = vpack.c.bf16 %v2123, %v2123
    %v2136 = vpack.c.bf16 %v2124, %v2124
    %v2137 = vpack.c.bf16 %v2125, %v2125
    %v2138 = vpack.c.bf16 %v2126, %v2126
    %v2139 = vpack.c.bf16 %v2127, %v2127
    %v2142 = vunpack.c.l.b16 %v2132
    %v2143 = vunpack.c.l.b16 %v2133
    %v2144 = vpack.c.b16 %v2143, %v2142
    %v2146 = vsel %vm189, %v2128, 0
    %v2149 = vsel %vm189, %v2144, 0
    %2151 = vmatpush.bf16.xpose.msra.mxu0 0
    %2152 = vmatpush.bf16.xpose.msra.mxu0 0
    %2153 = vmatpush.bf16.xpose.msra.mxu0 0
    %2154 = vmatpush.bf16.xpose.msra.mxu0 0
    %2155 = vmatpush.bf16.xpose.msra.mxu0 0
    %2156 = vmatpush.bf16.xpose.msra.mxu0 0
    %2157 = vmatpush.bf16.xpose.msra.mxu0 0
    %2158 = vmatpush.bf16.xpose.msra.mxu0 %v2149
    %2159 = vmatmul.bf16.gmra.mxu0 %v2146
    %v2160 = vpop.f32.mrf.mxu0
    %v2161 = vadd.f32 0.0, %v2160
    %v2162 = vpop.f32.mrf.mxu0
    %2163 = vdwg.mxu0
    %v2166 = vunpack.c.l.b16 %v2134
    %v2167 = vunpack.c.l.b16 %v2135
    %v2168 = vpack.c.b16 %v2167, %v2166
    %v2170 = vsel %vm189, %v2129, 0
    %v2173 = vsel %vm189, %v2168, 0
    %2175 = vmatpush.bf16.xpose.msra.mxu0 0
    %2176 = vmatpush.bf16.xpose.msra.mxu0 0
    %2177 = vmatpush.bf16.xpose.msra.mxu0 0
    %2178 = vmatpush.bf16.xpose.msra.mxu0 0
    %2179 = vmatpush.bf16.xpose.msra.mxu0 0
    %2180 = vmatpush.bf16.xpose.msra.mxu0 0
    %2181 = vmatpush.bf16.xpose.msra.mxu0 0
    %2182 = vmatpush.bf16.xpose.msra.mxu0 %v2173
    %2183 = vmatmul.bf16.gmra.mxu0 %v2170
    %v2184 = vpop.f32.mrf.mxu0
    %v2185 = vadd.f32 0.0, %v2184
    %v2186 = vpop.f32.mrf.mxu0
    %2187 = vdwg.mxu0
    %v2190 = vunpack.c.l.b16 %v2136
    %v2191 = vunpack.c.l.b16 %v2137
    %v2192 = vpack.c.b16 %v2191, %v2190
    %v2194 = vsel %vm189, %v2130, 0
    %v2197 = vsel %vm189, %v2192, 0
    %2199 = vmatpush.bf16.xpose.msra.mxu0 0
    %2200 = vmatpush.bf16.xpose.msra.mxu0 0
    %2201 = vmatpush.bf16.xpose.msra.mxu0 0
    %2202 = vmatpush.bf16.xpose.msra.mxu0 0
    %2203 = vmatpush.bf16.xpose.msra.mxu0 0
    %2204 = vmatpush.bf16.xpose.msra.mxu0 0
    %2205 = vmatpush.bf16.xpose.msra.mxu0 0
    %2206 = vmatpush.bf16.xpose.msra.mxu0 %v2197
    %2207 = vmatmul.bf16.gmra.mxu0 %v2194
    %v2208 = vpop.f32.mrf.mxu0
    %v2209 = vadd.f32 0.0, %v2208
    %v2210 = vpop.f32.mrf.mxu0
    %2211 = vdwg.mxu0
    %v2214 = vunpack.c.l.b16 %v2138
    %v2215 = vunpack.c.l.b16 %v2139
    %v2216 = vpack.c.b16 %v2215, %v2214
    %v2218 = vsel %vm189, %v2131, 0
    %v2221 = vsel %vm189, %v2216, 0
    %2223 = vmatpush.bf16.xpose.msra.mxu0 0
    %2224 = vmatpush.bf16.xpose.msra.mxu0 0
    %2225 = vmatpush.bf16.xpose.msra.mxu0 0
    %2226 = vmatpush.bf16.xpose.msra.mxu0 0
    %2227 = vmatpush.bf16.xpose.msra.mxu0 0
    %2228 = vmatpush.bf16.xpose.msra.mxu0 0
    %2229 = vmatpush.bf16.xpose.msra.mxu0 0
    %2230 = vmatpush.bf16.xpose.msra.mxu0 %v2221
    %2231 = vmatmul.bf16.gmra.mxu0 %v2218
    %v2232 = vpop.f32.mrf.mxu0
    %v2233 = vadd.f32 0.0, %v2232
    %v2234 = vpop.f32.mrf.mxu0
    %2235 = vdwg.mxu0
    %v2236 = vpack.c.bf16 %v2185, %v2161
    %v2237 = vpack.c.bf16 %v2233, %v2209
    %2239 = vset.pattern.permute.xlu0 0
    %2240 = vperm.xlu0 %2239, %v1507
    %v2241 = vpop.permute.xlu0 %2240
    %2244 = vset.pattern.permute.xlu0 0
    %2245 = vperm.xlu0 %2244, %v1508
    %v2246 = vpop.permute.xlu0 %2245
    %2249 = vset.pattern.permute.xlu0 0
    %2250 = vperm.xlu0 %2249, %v1509
    %v2251 = vpop.permute.xlu0 %2250
    %2254 = vset.pattern.permute.xlu0 0
    %2255 = vperm.xlu0 %2254, %v1510
    %v2256 = vpop.permute.xlu0 %2255
    %v2262 = vunpack.c.l.b16 %v1466
    %v2263 = vunpack.c.l.b16 %v1467
    %v2264 = vunpack.c.l.b16 %v1468
    %v2265 = vunpack.c.l.b16 %v1469
    %v2266 = vpack.c.b16 %v2263, %v2262
    %v2267 = vpack.c.b16 %v2265, %v2264
    %v2269 = vsel %vm388, %v2266, 0
    %v2272 = vsel %vm388, %v2267, 0
    %2274 = vmatpush.bf16.msra.mxu0 0
    %2275 = vmatpush.bf16.msra.mxu0 0
    %2276 = vmatpush.bf16.msra.mxu0 0
    %2277 = vmatpush.bf16.msra.mxu0 0
    %2278 = vmatpush.bf16.msra.mxu0 0
    %2279 = vmatpush.bf16.msra.mxu0 0
    %2280 = vmatpush.bf16.msra.mxu0 %v2237
    %2281 = vmatpush.bf16.msra.mxu0 %v2236
    %2282 = vmatmul.bf16.gmra.mxu0 %v2269
    %v2283 = vpop.f32.mrf.mxu0
    %v2284 = vadd.f32 %v2241, %v2283
    %v2285 = vpop.f32.mrf.mxu0
    %v2286 = vadd.f32 %v2246, %v2285
    %2287 = vmatmul.bf16.gmra.mxu0 %v2272
    %v2288 = vpop.f32.mrf.mxu0
    %v2289 = vadd.f32 %v2251, %v2288
    %v2290 = vpop.f32.mrf.mxu0
    %v2291 = vadd.f32 %v2256, %v2290
    %2292 = vdwg.mxu0
    %v2293 = vadd.f32 %v1449, %v2284
    %v2294 = vadd.f32 %v1450, %v2286
    %v2295 = vadd.f32 %v1451, %v2289
    %v2296 = vadd.f32 %v1452, %v2291
    %v2297 = vsel %vm189, %v2293, 0.0
    %v2298 = vsel %vm189, %v2294, 0.0
    %v2299 = vadd.f32 %v2297, %v2298
    %v2300 = vsel %vm189, %v2295, 0.0
    %v2301 = vadd.f32 %v2299, %v2300
    %v2302 = vsel %vm189, %v2296, 0.0
    %v2303 = vadd.f32 %v2301, %v2302
    %v2304 = vrot.slane %v2303, 4
    %v2305 = vadd.f32 %v2303, %v2304
    %v2306 = vrot.slane %v2305, 2
    %v2307 = vadd.f32 %v2305, %v2306
    %v2308 = vrot.slane %v2307, 1
    %v2309 = vadd.f32 %v2307, %v2308
    %v2310 = vmul.f32 %v2309, %v209
    %v2311 = vsub.f32 %v2293, %v2310
    %v2312 = vsub.f32 %v2294, %v2310
    %v2313 = vsub.f32 %v2295, %v2310
    %v2314 = vsub.f32 %v2296, %v2310
    %v2315 = vmul.f32 %v2311, %v2311
    %v2316 = vmul.f32 %v2312, %v2312
    %v2317 = vmul.f32 %v2313, %v2313
    %v2318 = vmul.f32 %v2314, %v2314
    %v2319 = vsel %vm189, %v2315, 0.0
    %v2320 = vsel %vm189, %v2316, 0.0
    %v2321 = vadd.f32 %v2319, %v2320
    %v2322 = vsel %vm189, %v2317, 0.0
    %v2323 = vadd.f32 %v2321, %v2322
    %v2324 = vsel %vm189, %v2318, 0.0
    %v2325 = vadd.f32 %v2323, %v2324
    %v2326 = vrot.slane %v2325, 4
    %v2327 = vadd.f32 %v2325, %v2326
    %v2328 = vrot.slane %v2327, 2
    %v2329 = vadd.f32 %v2327, %v2328
    %v2330 = vrot.slane %v2329, 1
    %v2331 = vadd.f32 %v2329, %v2330
    %v2332 = vmul.f32 %v2331, %v209
    %v2333 = vadd.f32 %v2332, 1e-05
    %v2334 = vrsqrt.pop %v2333
    %v2335 = vmul.f32 %v2334, %v2333
    %v2336 = vmul.f32 %v2335, %v2334
    %v2337 = vmul.f32 0.5, %v2336
    %v2338 = vsub.f32 1.5, %v2337
    %v2339 = vmul.f32 %v2334, %v2338
    %vm2340 = vweird.f32 %v2333
    %vm2341 = vweird.f32 %v2334
    %vm2342 = vmor %vm2340, %vm2341
    %v2343 = vsel %vm2342, %v2334, %v2339
    %v2344 = vmul.f32 %v2311, %v2343
    %v2345 = vmul.f32 %v2312, %v2343
    %v2346 = vmul.f32 %v2313, %v2343
    %v2347 = vmul.f32 %v2314, %v2343
    %2349 = vset.pattern.permute.xlu0 0
    %2350 = vperm.xlu0 %2349, %v1511
    %v2351 = vpop.permute.xlu0 %2350
    %2354 = vset.pattern.permute.xlu0 0
    %2355 = vperm.xlu0 %2354, %v1512
    %v2356 = vpop.permute.xlu0 %2355
    %2359 = vset.pattern.permute.xlu0 0
    %2360 = vperm.xlu0 %2359, %v1513
    %v2361 = vpop.permute.xlu0 %2360
    %2364 = vset.pattern.permute.xlu0 0
    %2365 = vperm.xlu0 %2364, %v1514
    %v2366 = vpop.permute.xlu0 %2365
    %v2368 = vmul.f32 %v2344, %v2351
    %v2369 = vmul.f32 %v2345, %v2356
    %v2370 = vmul.f32 %v2346, %v2361
    %v2371 = vmul.f32 %v2347, %v2366
    %2373 = vset.pattern.permute.xlu0 0
    %2374 = vperm.xlu0 %2373, %v1515
    %v2375 = vpop.permute.xlu0 %2374
    %2378 = vset.pattern.permute.xlu0 0
    %2379 = vperm.xlu0 %2378, %v1516
    %v2380 = vpop.permute.xlu0 %2379
    %2383 = vset.pattern.permute.xlu0 0
    %2384 = vperm.xlu0 %2383, %v1517
    %v2385 = vpop.permute.xlu0 %2384
    %2388 = vset.pattern.permute.xlu0 0
    %2389 = vperm.xlu0 %2388, %v1518
    %v2390 = vpop.permute.xlu0 %2389
    %v2392 = vadd.f32 %v2368, %v2375
    %v2393 = vadd.f32 %v2369, %v2380
    %v2394 = vadd.f32 %v2370, %v2385
    %v2395 = vadd.f32 %v2371, %v2390
    %v2396 = vpack.c.bf16 %v2393, %v2392
    %v2397 = vpack.c.bf16 %v2395, %v2394
    %2399 = vset.pattern.permute.xlu0 0
    %2400 = vperm.xlu0 %2399, %v1519
    %v2401 = vpop.permute.xlu0 %2400
    %2404 = vset.pattern.permute.xlu0 0
    %2405 = vperm.xlu0 %2404, %v1520
    %v2406 = vpop.permute.xlu0 %2405
    %2409 = vset.pattern.permute.xlu0 0
    %2410 = vperm.xlu0 %2409, %v1521
    %v2411 = vpop.permute.xlu0 %2410
    %2414 = vset.pattern.permute.xlu0 0
    %2415 = vperm.xlu0 %2414, %v1522
    %v2416 = vpop.permute.xlu0 %2415
    %2419 = vset.pattern.permute.xlu0 0
    %2420 = vperm.xlu0 %2419, %v1523
    %v2421 = vpop.permute.xlu0 %2420
    %2424 = vset.pattern.permute.xlu0 0
    %2425 = vperm.xlu0 %2424, %v1524
    %v2426 = vpop.permute.xlu0 %2425
    %2429 = vset.pattern.permute.xlu0 0
    %2430 = vperm.xlu0 %2429, %v1525
    %v2431 = vpop.permute.xlu0 %2430
    %2434 = vset.pattern.permute.xlu0 0
    %2435 = vperm.xlu0 %2434, %v1526
    %v2436 = vpop.permute.xlu0 %2435
    %2439 = vset.pattern.permute.xlu0 0
    %2440 = vperm.xlu0 %2439, %v1527
    %v2441 = vpop.permute.xlu0 %2440
    %2444 = vset.pattern.permute.xlu0 0
    %2445 = vperm.xlu0 %2444, %v1528
    %v2446 = vpop.permute.xlu0 %2445
    %2449 = vset.pattern.permute.xlu0 0
    %2450 = vperm.xlu0 %2449, %v1529
    %v2451 = vpop.permute.xlu0 %2450
    %2454 = vset.pattern.permute.xlu0 0
    %2455 = vperm.xlu0 %2454, %v1530
    %v2456 = vpop.permute.xlu0 %2455
    %2459 = vset.pattern.permute.xlu0 0
    %2460 = vperm.xlu0 %2459, %v1531
    %v2461 = vpop.permute.xlu0 %2460
    %2464 = vset.pattern.permute.xlu0 0
    %2465 = vperm.xlu0 %2464, %v1532
    %v2466 = vpop.permute.xlu0 %2465
    %2469 = vset.pattern.permute.xlu0 0
    %2470 = vperm.xlu0 %2469, %v1533
    %v2471 = vpop.permute.xlu0 %2470
    %2474 = vset.pattern.permute.xlu0 0
    %2475 = vperm.xlu0 %2474, %v1534
    %v2476 = vpop.permute.xlu0 %2475
    %v2494 = vunpack.c.l.b16 %v1470
    %v2495 = vunpack.c.l.b16 %v1471
    %v2496 = vunpack.c.l.b16 %v1472
    %v2497 = vunpack.c.l.b16 %v1473
    %v2498 = vunpack.c.l.b16 %v1474
    %v2499 = vunpack.c.l.b16 %v1475
    %v2500 = vunpack.c.l.b16 %v1476
    %v2501 = vunpack.c.l.b16 %v1477
    %v2502 = vunpack.c.l.b16 %v1478
    %v2503 = vunpack.c.l.b16 %v1479
    %v2504 = vunpack.c.l.b16 %v1480
    %v2505 = vunpack.c.l.b16 %v1481
    %v2506 = vunpack.c.l.b16 %v1482
    %v2507 = vunpack.c.l.b16 %v1483
    %v2508 = vunpack.c.l.b16 %v1484
    %v2509 = vunpack.c.l.b16 %v1485
    %v2510 = vpack.c.b16 %v2495, %v2494
    %v2511 = vpack.c.b16 %v2497, %v2496
    %v2512 = vpack.c.b16 %v2499, %v2498
    %v2513 = vpack.c.b16 %v2501, %v2500
    %v2514 = vpack.c.b16 %v2503, %v2502
    %v2515 = vpack.c.b16 %v2505, %v2504
    %v2516 = vpack.c.b16 %v2507, %v2506
    %v2517 = vpack.c.b16 %v2509, %v2508
    %v2519 = vsel %vm388, %v2510, 0
    %v2522 = vsel %vm388, %v2511, 0
    %v2525 = vsel %vm388, %v2512, 0
    %v2528 = vsel %vm388, %v2513, 0
    %v2531 = vsel %vm388, %v2514, 0
    %v2534 = vsel %vm388, %v2515, 0
    %v2537 = vsel %vm388, %v2516, 0
    %v2540 = vsel %vm388, %v2517, 0
    %2542 = vmatpush.bf16.msra.mxu0 0
    %2543 = vmatpush.bf16.msra.mxu0 0
    %2544 = vmatpush.bf16.msra.mxu0 0
    %2545 = vmatpush.bf16.msra.mxu0 0
    %2546 = vmatpush.bf16.msra.mxu0 0
    %2547 = vmatpush.bf16.msra.mxu0 0
    %2548 = vmatpush.bf16.msra.mxu0 %v2397
    %2549 = vmatpush.bf16.msra.mxu0 %v2396
    %2550 = vmatmul.bf16.gmra.mxu0 %v2519
    %v2551 = vpop.f32.mrf.mxu0
    %v2552 = vadd.f32 %v2401, %v2551
    %v2553 = vpop.f32.mrf.mxu0
    %v2554 = vadd.f32 %v2406, %v2553
    %2555 = vmatmul.bf16.gmra.mxu0 %v2522
    %v2556 = vpop.f32.mrf.mxu0
    %v2557 = vadd.f32 %v2411, %v2556
    %v2558 = vpop.f32.mrf.mxu0
    %v2559 = vadd.f32 %v2416, %v2558
    %2560 = vmatmul.bf16.gmra.mxu0 %v2525
    %v2561 = vpop.f32.mrf.mxu0
    %v2562 = vadd.f32 %v2421, %v2561
    %v2563 = vpop.f32.mrf.mxu0
    %v2564 = vadd.f32 %v2426, %v2563
    %2565 = vmatmul.bf16.gmra.mxu0 %v2528
    %v2566 = vpop.f32.mrf.mxu0
    %v2567 = vadd.f32 %v2431, %v2566
    %v2568 = vpop.f32.mrf.mxu0
    %v2569 = vadd.f32 %v2436, %v2568
    %2570 = vmatmul.bf16.gmra.mxu0 %v2531
    %v2571 = vpop.f32.mrf.mxu0
    %v2572 = vadd.f32 %v2441, %v2571
    %v2573 = vpop.f32.mrf.mxu0
    %v2574 = vadd.f32 %v2446, %v2573
    %2575 = vmatmul.bf16.gmra.mxu0 %v2534
    %v2576 = vpop.f32.mrf.mxu0
    %v2577 = vadd.f32 %v2451, %v2576
    %v2578 = vpop.f32.mrf.mxu0
    %v2579 = vadd.f32 %v2456, %v2578
    %2580 = vmatmul.bf16.gmra.mxu0 %v2537
    %v2581 = vpop.f32.mrf.mxu0
    %v2582 = vadd.f32 %v2461, %v2581
    %v2583 = vpop.f32.mrf.mxu0
    %v2584 = vadd.f32 %v2466, %v2583
    %2585 = vmatmul.bf16.gmra.mxu0 %v2540
    %v2586 = vpop.f32.mrf.mxu0
    %v2587 = vadd.f32 %v2471, %v2586
    %v2588 = vpop.f32.mrf.mxu0
    %v2589 = vadd.f32 %v2476, %v2588
    %2590 = vdwg.mxu0
    %v2591 = vmul.f32 %v2552, 0.5
    %v2592 = vmul.f32 %v2554, 0.5
    %v2593 = vmul.f32 %v2557, 0.5
    %v2594 = vmul.f32 %v2559, 0.5
    %v2595 = vmul.f32 %v2562, 0.5
    %v2596 = vmul.f32 %v2564, 0.5
    %v2597 = vmul.f32 %v2567, 0.5
    %v2598 = vmul.f32 %v2569, 0.5
    %v2599 = vmul.f32 %v2572, 0.5
    %v2600 = vmul.f32 %v2574, 0.5
    %v2601 = vmul.f32 %v2577, 0.5
    %v2602 = vmul.f32 %v2579, 0.5
    %v2603 = vmul.f32 %v2582, 0.5
    %v2604 = vmul.f32 %v2584, 0.5
    %v2605 = vmul.f32 %v2587, 0.5
    %v2606 = vmul.f32 %v2589, 0.5
    %v2607 = vmul.f32 %v2552, 0.044715
    %v2608 = vmul.f32 %v2554, 0.044715
    %v2609 = vmul.f32 %v2557, 0.044715
    %v2610 = vmul.f32 %v2559, 0.044715
    %v2611 = vmul.f32 %v2562, 0.044715
    %v2612 = vmul.f32 %v2564, 0.044715
    %v2613 = vmul.f32 %v2567, 0.044715
    %v2614 = vmul.f32 %v2569, 0.044715
    %v2615 = vmul.f32 %v2572, 0.044715
    %v2616 = vmul.f32 %v2574, 0.044715
    %v2617 = vmul.f32 %v2577, 0.044715
    %v2618 = vmul.f32 %v2579, 0.044715
    %v2619 = vmul.f32 %v2582, 0.044715
    %v2620 = vmul.f32 %v2584, 0.044715
    %v2621 = vmul.f32 %v2587, 0.044715
    %v2622 = vmul.f32 %v2589, 0.044715
    %v2623 = vmul.f32 %v2607, %v2552
    %v2624 = vmul.f32 %v2608, %v2554
    %v2625 = vmul.f32 %v2609, %v2557
    %v2626 = vmul.f32 %v2610, %v2559
    %v2627 = vmul.f32 %v2611, %v2562
    %v2628 = vmul.f32 %v2612, %v2564
    %v2629 = vmul.f32 %v2613, %v2567
    %v2630 = vmul.f32 %v2614, %v2569
    %v2631 = vmul.f32 %v2615, %v2572
    %v2632 = vmul.f32 %v2616, %v2574
    %v2633 = vmul.f32 %v2617, %v2577
    %v2634 = vmul.f32 %v2618, %v2579
    %v2635 = vmul.f32 %v2619, %v2582
    %v2636 = vmul.f32 %v2620, %v2584
    %v2637 = vmul.f32 %v2621, %v2587
    %v2638 = vmul.f32 %v2622, %v2589
    %v2639 = vmul.f32 %v2623, %v2552
    %v2640 = vmul.f32 %v2624, %v2554
    %v2641 = vmul.f32 %v2625, %v2557
    %v2642 = vmul.f32 %v2626, %v2559
    %v2643 = vmul.f32 %v2627, %v2562
    %v2644 = vmul.f32 %v2628, %v2564
    %v2645 = vmul.f32 %v2629, %v2567
    %v2646 = vmul.f32 %v2630, %v2569
    %v2647 = vmul.f32 %v2631, %v2572
    %v2648 = vmul.f32 %v2632, %v2574
    %v2649 = vmul.f32 %v2633, %v2577
    %v2650 = vmul.f32 %v2634, %v2579
    %v2651 = vmul.f32 %v2635, %v2582
    %v2652 = vmul.f32 %v2636, %v2584
    %v2653 = vmul.f32 %v2637, %v2587
    %v2654 = vmul.f32 %v2638, %v2589
    %v2655 = vadd.f32 %v2552, %v2639
    %v2656 = vadd.f32 %v2554, %v2640
    %v2657 = vadd.f32 %v2557, %v2641
    %v2658 = vadd.f32 %v2559, %v2642
    %v2659 = vadd.f32 %v2562, %v2643
    %v2660 = vadd.f32 %v2564, %v2644
    %v2661 = vadd.f32 %v2567, %v2645
    %v2662 = vadd.f32 %v2569, %v2646
    %v2663 = vadd.f32 %v2572, %v2647
    %v2664 = vadd.f32 %v2574, %v2648
    %v2665 = vadd.f32 %v2577, %v2649
    %v2666 = vadd.f32 %v2579, %v2650
    %v2667 = vadd.f32 %v2582, %v2651
    %v2668 = vadd.f32 %v2584, %v2652
    %v2669 = vadd.f32 %v2587, %v2653
    %v2670 = vadd.f32 %v2589, %v2654
    %v2671 = vmul.f32 %v2655, 0.7978846
    %v2672 = vmul.f32 %v2656, 0.7978846
    %v2673 = vmul.f32 %v2657, 0.7978846
    %v2674 = vmul.f32 %v2658, 0.7978846
    %v2675 = vmul.f32 %v2659, 0.7978846
    %v2676 = vmul.f32 %v2660, 0.7978846
    %v2677 = vmul.f32 %v2661, 0.7978846
    %v2678 = vmul.f32 %v2662, 0.7978846
    %v2679 = vmul.f32 %v2663, 0.7978846
    %v2680 = vmul.f32 %v2664, 0.7978846
    %v2681 = vmul.f32 %v2665, 0.7978846
    %v2682 = vmul.f32 %v2666, 0.7978846
    %v2683 = vmul.f32 %v2667, 0.7978846
    %v2684 = vmul.f32 %v2668, 0.7978846
    %v2685 = vmul.f32 %v2669, 0.7978846
    %v2686 = vmul.f32 %v2670, 0.7978846
    %v2687 = vtanh.pop %v2671
    %v2688 = vtanh.pop %v2672
    %v2689 = vtanh.pop %v2673
    %v2690 = vtanh.pop %v2674
    %v2691 = vtanh.pop %v2675
    %v2692 = vtanh.pop %v2676
    %v2693 = vtanh.pop %v2677
    %v2694 = vtanh.pop %v2678
    %v2695 = vtanh.pop %v2679
    %v2696 = vtanh.pop %v2680
    %v2697 = vtanh.pop %v2681
    %v2698 = vtanh.pop %v2682
    %v2699 = vtanh.pop %v2683
    %v2700 = vtanh.pop %v2684
    %v2701 = vtanh.pop %v2685
    %v2702 = vtanh.pop %v2686
    %v2703 = vadd.f32 %v2687, 1.0
    %v2704 = vadd.f32 %v2688, 1.0
    %v2705 = vadd.f32 %v2689, 1.0
    %v2706 = vadd.f32 %v2690, 1.0
    %v2707 = vadd.f32 %v2691, 1.0
    %v2708 = vadd.f32 %v2692, 1.0
    %v2709 = vadd.f32 %v2693, 1.0
    %v2710 = vadd.f32 %v2694, 1.0
    %v2711 = vadd.f32 %v2695, 1.0
    %v2712 = vadd.f32 %v2696, 1.0
    %v2713 = vadd.f32 %v2697, 1.0
    %v2714 = vadd.f32 %v2698, 1.0
    %v2715 = vadd.f32 %v2699, 1.0
    %v2716 = vadd.f32 %v2700, 1.0
    %v2717 = vadd.f32 %v2701, 1.0
    %v2718 = vadd.f32 %v2702, 1.0
    %v2719 = vmul.f32 %v2591, %v2703
    %v2720 = vmul.f32 %v2592, %v2704
    %v2721 = vmul.f32 %v2593, %v2705
    %v2722 = vmul.f32 %v2594, %v2706
    %v2723 = vmul.f32 %v2595, %v2707
    %v2724 = vmul.f32 %v2596, %v2708
    %v2725 = vmul.f32 %v2597, %v2709
    %v2726 = vmul.f32 %v2598, %v2710
    %v2727 = vmul.f32 %v2599, %v2711
    %v2728 = vmul.f32 %v2600, %v2712
    %v2729 = vmul.f32 %v2601, %v2713
    %v2730 = vmul.f32 %v2602, %v2714
    %v2731 = vmul.f32 %v2603, %v2715
    %v2732 = vmul.f32 %v2604, %v2716
    %v2733 = vmul.f32 %v2605, %v2717
    %v2734 = vmul.f32 %v2606, %v2718
    %v2735 = vpack.c.bf16 %v2720, %v2719
    %v2736 = vpack.c.bf16 %v2722, %v2721
    %v2737 = vpack.c.bf16 %v2724, %v2723
    %v2738 = vpack.c.bf16 %v2726, %v2725
    %v2739 = vpack.c.bf16 %v2728, %v2727
    %v2740 = vpack.c.bf16 %v2730, %v2729
    %v2741 = vpack.c.bf16 %v2732, %v2731
    %v2742 = vpack.c.bf16 %v2734, %v2733
    %2744 = vset.pattern.permute.xlu0 0
    %2745 = vperm.xlu0 %2744, %v1535
    %v2746 = vpop.permute.xlu0 %2745
    %2749 = vset.pattern.permute.xlu0 0
    %2750 = vperm.xlu0 %2749, %v1536
    %v2751 = vpop.permute.xlu0 %2750
    %2754 = vset.pattern.permute.xlu0 0
    %2755 = vperm.xlu0 %2754, %v1537
    %v2756 = vpop.permute.xlu0 %2755
    %2759 = vset.pattern.permute.xlu0 0
    %2760 = vperm.xlu0 %2759, %v1538
    %v2761 = vpop.permute.xlu0 %2760
    %v2767 = vunpack.c.l.b16 %v1540
    %v2768 = vunpack.c.l.b16 %v1541
    %v2769 = vunpack.c.l.b16 %v1542
    %v2770 = vunpack.c.l.b16 %v1543
    %v2771 = vpack.c.b16 %v2768, %v2767
    %v2772 = vpack.c.b16 %v2770, %v2769
    %2775 = vmatpush.bf16.msra.mxu0 %v2742
    %2776 = vmatpush.bf16.msra.mxu0 %v2741
    %2777 = vmatpush.bf16.msra.mxu0 %v2740
    %2778 = vmatpush.bf16.msra.mxu0 %v2739
    %2779 = vmatpush.bf16.msra.mxu0 %v2738
    %2780 = vmatpush.bf16.msra.mxu0 %v2737
    %2781 = vmatpush.bf16.msra.mxu0 %v2736
    %2782 = vmatpush.bf16.msra.mxu0 %v2735
    %2783 = vmatmul.bf16.gmra.mxu0 %v2771
    %v2784 = vpop.f32.mrf.mxu0
    %v2785 = vadd.f32 %v2746, %v2784
    %v2786 = vpop.f32.mrf.mxu0
    %v2787 = vadd.f32 %v2751, %v2786
    %2788 = vmatmul.bf16.gmra.mxu0 %v2772
    %v2789 = vpop.f32.mrf.mxu0
    %v2790 = vadd.f32 %v2756, %v2789
    %v2791 = vpop.f32.mrf.mxu0
    %v2792 = vadd.f32 %v2761, %v2791
    %2793 = vdwg.mxu0
    %v2794 = vadd.f32 %v2293, %v2785
    %v2795 = vadd.f32 %v2294, %v2787
    %v2796 = vadd.f32 %v2295, %v2790
    %v2797 = vadd.f32 %v2296, %v2792
    %v2798 = vsel %vm189, %v2794, 0.0
    %v2799 = vsel %vm189, %v2795, 0.0
    %v2800 = vadd.f32 %v2798, %v2799
    %v2801 = vsel %vm189, %v2796, 0.0
    %v2802 = vadd.f32 %v2800, %v2801
    %v2803 = vsel %vm189, %v2797, 0.0
    %v2804 = vadd.f32 %v2802, %v2803
    %v2805 = vrot.slane %v2804, 4
    %v2806 = vadd.f32 %v2804, %v2805
    %v2807 = vrot.slane %v2806, 2
    %v2808 = vadd.f32 %v2806, %v2807
    %v2809 = vrot.slane %v2808, 1
    %v2810 = vadd.f32 %v2808, %v2809
    %v2811 = vmul.f32 %v2810, %v209
    %v2812 = vsub.f32 %v2794, %v2811
    %v2813 = vsub.f32 %v2795, %v2811
    %v2814 = vsub.f32 %v2796, %v2811
    %v2815 = vsub.f32 %v2797, %v2811
    %v2816 = vmul.f32 %v2812, %v2812
    %v2817 = vmul.f32 %v2813, %v2813
    %v2818 = vmul.f32 %v2814, %v2814
    %v2819 = vmul.f32 %v2815, %v2815
    %v2820 = vsel %vm189, %v2816, 0.0
    %v2821 = vsel %vm189, %v2817, 0.0
    %v2822 = vadd.f32 %v2820, %v2821
    %v2823 = vsel %vm189, %v2818, 0.0
    %v2824 = vadd.f32 %v2822, %v2823
    %v2825 = vsel %vm189, %v2819, 0.0
    %v2826 = vadd.f32 %v2824, %v2825
    %v2827 = vrot.slane %v2826, 4
    %v2828 = vadd.f32 %v2826, %v2827
    %v2829 = vrot.slane %v2828, 2
    %v2830 = vadd.f32 %v2828, %v2829
    %v2831 = vrot.slane %v2830, 1
    %v2832 = vadd.f32 %v2830, %v2831
    %v2833 = vmul.f32 %v2832, %v209
    %v2834 = vadd.f32 %v2833, 1e-05
    %v2835 = vrsqrt.pop %v2834
    %v2836 = vmul.f32 %v2835, %v2834
    %v2837 = vmul.f32 %v2836, %v2835
    %v2838 = vmul.f32 0.5, %v2837
    %v2839 = vsub.f32 1.5, %v2838
    %v2840 = vmul.f32 %v2835, %v2839
    %vm2841 = vweird.f32 %v2834
    %vm2842 = vweird.f32 %v2835
    %vm2843 = vmor %vm2841, %vm2842
    %v2844 = vsel %vm2843, %v2835, %v2840
    %v2845 = vmul.f32 %v2812, %v2844
    %v2846 = vmul.f32 %v2813, %v2844
    %v2847 = vmul.f32 %v2814, %v2844
    %v2848 = vmul.f32 %v2815, %v2844
    %2849 = vset.pattern.permute.xlu0 20
    %2850 = vperm.xlu0 %2849, %v22
    %v2851 = vpop.permute.xlu0 %2850
    %2853 = vset.pattern.permute.xlu0 20
    %2854 = vperm.xlu0 %2853, %v23
    %v2855 = vpop.permute.xlu0 %2854
    %2857 = vset.pattern.permute.xlu0 20
    %2858 = vperm.xlu0 %2857, %v24
    %v2859 = vpop.permute.xlu0 %2858
    %2861 = vset.pattern.permute.xlu0 20
    %2862 = vperm.xlu0 %2861, %v25
    %v2863 = vpop.permute.xlu0 %2862
    %v2865 = vmul.f32 %v2845, %v2851
    %v2866 = vmul.f32 %v2846, %v2855
    %v2867 = vmul.f32 %v2847, %v2859
    %v2868 = vmul.f32 %v2848, %v2863
    %2869 = vset.pattern.permute.xlu0 21
    %2870 = vperm.xlu0 %2869, %v22
    %v2871 = vpop.permute.xlu0 %2870
    %2873 = vset.pattern.permute.xlu0 21
    %2874 = vperm.xlu0 %2873, %v23
    %v2875 = vpop.permute.xlu0 %2874
    %2877 = vset.pattern.permute.xlu0 21
    %2878 = vperm.xlu0 %2877, %v24
    %v2879 = vpop.permute.xlu0 %2878
    %2881 = vset.pattern.permute.xlu0 21
    %2882 = vperm.xlu0 %2881, %v25
    %v2883 = vpop.permute.xlu0 %2882
    %v2885 = vadd.f32 %v2865, %v2871
    %v2886 = vadd.f32 %v2866, %v2875
    %v2887 = vadd.f32 %v2867, %v2879
    %v2888 = vadd.f32 %v2868, %v2883
    %2889 = vset.pattern.permute.xlu0 22
    %2890 = vperm.xlu0 %2889, %v22
    %v2891 = vpop.permute.xlu0 %2890
    %2893 = vset.pattern.permute.xlu0 22
    %2894 = vperm.xlu0 %2893, %v23
    %v2895 = vpop.permute.xlu0 %2894
    %2897 = vset.pattern.permute.xlu0 22
    %2898 = vperm.xlu0 %2897, %v24
    %v2899 = vpop.permute.xlu0 %2898
    %2901 = vset.pattern.permute.xlu0 22
    %2902 = vperm.xlu0 %2901, %v25
    %v2903 = vpop.permute.xlu0 %2902
    %v2905 = vmul.f32 %v2885, %v2891
    %v2906 = vmul.f32 %v2886, %v2895
    %v2907 = vmul.f32 %v2887, %v2899
    %v2908 = vmul.f32 %v2888, %v2903
    %v2909 = vsel %vm189, %v2905, 0.0
    %v2910 = vsel %vm189, %v2906, 0.0
    %v2911 = vadd.f32 %v2909, %v2910
    %v2912 = vsel %vm189, %v2907, 0.0
    %v2913 = vadd.f32 %v2911, %v2912
    %v2914 = vsel %vm189, %v2908, 0.0
    %v2915 = vadd.f32 %v2913, %v2914
    %v2916 = vrot.slane %v2915, 4
    %v2917 = vadd.f32 %v2915, %v2916
    %v2918 = vrot.slane %v2917, 2
    %v2919 = vadd.f32 %v2917, %v2918
    %v2920 = vrot.slane %v2919, 1
    %v2921 = vadd.f32 %v2919, %v2920
    %2922 = vset.pattern.permute.xlu0 23
    %2923 = vperm.xlu0 %2922, %v22
    %v2924 = vpop.permute.xlu0 %2923
    %v2926 = vadd.f32 %v2921, %v2924
    %vm2927 = vcmask 122880
    %2928 = vst.msk [vmem:[#allocation2] sm:$0x1] %vm2927, %v2926
    // Predicated region
    $region22: #{tpu_custom_call.1} parent=1 // pred_check
      _
    $region23: #{tpu_custom_call.1} parent=1 // pred_check_branch
      %2930 = sbr.rel (0) target = $region25
    $region24: #{tpu_custom_call.1} parent=1 // pred_region
      %2932 = vsyncadd [#allocation3], 0
      %s2934 = sshll.u32 [#allocation2], 4
      %s2935 = int_to_ptr.vmem [resolvable:$true] %s2934
      %s2936 = sshll.u32 %s5, 4
      %s2937 = int_to_ptr.hbm [resolvable:$true] %s2936
      %2939 = dma.vmem_to_hbm [thread:$0]  %s2935, 16, %s2937, [#allocation3]
    $region25: #{tpu_custom_call.1} parent=1 // pred_fallthru
      _
    // Predicated region
    $region26: #{tpu_custom_call.1} parent=1 // pred_check
      _
    $region27: #{tpu_custom_call.1} parent=1 // pred_check_branch
      %2941 = sbr.rel (0) target = $region29
    $region28: #{tpu_custom_call.1} parent=1 // pred_region
      %2943 = dma.done [#allocation3], 16
    $region29: #{tpu_custom_call.1} parent=1 // pred_fallthru
      _
    %2944 = vsyncpa [#allocation3], 1

</llo_original>
